<compile_context>
chip_gen: v7x
topology: tpu7x:2x2x1
jax: 0.10.0
libtpu: 0.0.40
codegen_flags: <defaults>
</compile_context>

<pallas_src>
import functools

import jax
import jax.numpy as jnp
from jax.experimental import pallas as pl
from jax.experimental.pallas import tpu as pltpu


def catan_kernel(x_ref,
                 w1_ref, b1_ref,
                 w2_ref, b2_ref,
                 wh1_ref, bh1_ref,
                 wh2_ref, bh2_ref,
                 out_ref,
                 *, action_dim):
    """One batch-tile of the full CatanNetwork forward pass (fused heads)."""

    def mm(a, w_ref):
        # MXU matmul.  Operands take the (pre-cast) weight dtype — for the bf16
        # path only the small (tile, K) activation is cast per step, weights are
        # already bf16 from pack_params().  Accumulation is always f32.
        return jnp.dot(a.astype(w_ref.dtype), w_ref[...],
                       preferred_element_type=jnp.float32)

    x = x_ref[...]

    # representation: Linear -> ReLU -> Linear -> ReLU   (f32 elementwise)
    h = jnp.maximum(mm(x, w1_ref) + b1_ref[...], 0.0)
    rep = jnp.maximum(mm(h, w2_ref) + b2_ref[...], 0.0)

    # fused head layer 1: [policy_hidden | value_hidden] in one matmul
    hh = jnp.maximum(mm(rep, wh1_ref) + bh1_ref[...], 0.0)

    # fused head layer 2: lane-dense padded output slab
    #   lanes [0:A]  -> policy logits (no activation)
    #   lane  A      -> value (tanh)
    #   lanes > A    -> exact zeros (padded weights/biases are zero)
    pre = mm(hh, wh2_ref) + bh2_ref[...]
    lane = jax.lax.broadcasted_iota(jnp.int32, pre.shape, 1)
    # tanh is applied over the whole (tile, 128) slab but only lane A is kept;
    # the EUP work is hidden under DMA/store slack for this tiny network
    # (review: low priority, don't trade it for cross-lane shuffles).
    out_ref[...] = jnp.where(lane == action_dim, jnp.tanh(pre), pre).astype(out_ref.dtype)


def _auto_batch_tile(B, max_tile=2048):
    """Pick a batch tile: as large as possible (fewest grid steps), a multiple
    of 8, dividing B exactly when possible (avoids the jnp.pad copy of x), and
    keeping n_tiles >= 2 when B allows so v7x's two TensorCores are both used.
    """
    start = min(max_tile, B)
    start -= start % 8
    single = None
    for cand in range(start, 7, -8):
        if B % cand == 0:
            if B // cand >= 2:
                return cand                      # >= 2 tiles, no padding
            if single is None:
                single = cand                    # exact single-tile fallback
    if single is not None:
        return single
    # B not a multiple of 8 (or < 8): fall back to a padded tile.
    return max(8, min(max_tile, -(-B // 8) * 8))


def catan_forward(x, packed, *, action_dim, batch_tile=None, out_dtype=None):
    """Run the CatanNetwork forward pass with a single Pallas TPU kernel.

    Args:
      x: (B, state_dim) float32 state batch.
      packed: dict from pack_params() (fused / zero-padded, optionally bf16
        weights; biases stay f32).
      action_dim: number of real policy logits.
      batch_tile: rows per grid step (multiple of 8).  None -> auto-select
        (largest divisor of B up to 2048, keeping >= 2 tiles when possible).
      out_dtype: dtype of the kernel's padded output slab.  None -> follow the
        packed weight dtype (f32 path exact; bf16 path halves writeback bytes).

    Returns:
      (policy_logits, value): (B, action_dim) and (B, 1) float32 arrays.
    """
    B, S = x.shape
    H = packed["w1"].shape[1]
    H2x2 = packed["wh1"].shape[1]
    OUT = packed["wh2"].shape[1]
    assert OUT % 128 == 0 and OUT >= action_dim + 1

    mm_dtype = packed["w1"].dtype
    out_dtype = jnp.dtype(out_dtype if out_dtype is not None else mm_dtype)

    if batch_tile is None:
        batch_tile = _auto_batch_tile(B)
    assert batch_tile % 8 == 0

    # Cast x ONCE in the wrapper (no per-step cast of the first matmul operand,
    # half the x DMA bytes on the bf16 path).
    x = x.astype(mm_dtype)

    # Pad the batch only if the tile does not divide it (auto-tile avoids this).
    n_tiles = pl.cdiv(B, batch_tile)
    Bp = n_tiles * batch_tile
    if Bp != B:
        x = jnp.pad(x, ((0, Bp - B), (0, 0)))

    def full_spec(shape):
        # Whole (small) weight / bias tensor; constant index_map -> the pipeline
        # keeps it resident in VMEM and does not re-DMA it every grid step.
        return pl.BlockSpec(shape, lambda i: (0, 0))

    in_specs = [
        pl.BlockSpec((batch_tile, S), lambda i: (i, 0)),   # x
        full_spec((S, H)),    full_spec((1, H)),           # w1, b1
        full_spec((H, H)),    full_spec((1, H)),           # w2, b2
        full_spec((H, H2x2)), full_spec((1, H2x2)),        # fused head layer 1
        full_spec((H2x2, OUT)), full_spec((1, OUT)),       # fused+padded head layer 2
    ]
    out_spec = pl.BlockSpec((batch_tile, OUT), lambda i: (i, 0))
    out_shape = jax.ShapeDtypeStruct((Bp, OUT), out_dtype)

    # Per-step VMEM footprint: double-buffered x and out tiles + resident weights.
    weight_bytes = sum(int(v.size) * v.dtype.itemsize for v in packed.values())
    vmem_bytes = (2 * batch_tile * S * x.dtype.itemsize
                  + 2 * batch_tile * OUT * out_dtype.itemsize
                  + 2 * weight_bytes)
    vmem_limit = None
    if vmem_bytes > (12 << 20):
        # Only raise past the tightest default (v5e: 16 MiB scoped); cap well
        # below v7x's 64 MiB physical VMEM.
        vmem_limit = int(min(vmem_bytes + (4 << 20), 48 << 20))

    kernel = functools.partial(catan_kernel, action_dim=action_dim)

    out = pl.pallas_call(
        kernel,
        grid=(n_tiles,),
        in_specs=in_specs,
        out_specs=out_spec,
        out_shape=out_shape,
        compiler_params=pltpu.CompilerParams(
            dimension_semantics=("parallel",),
            vmem_limit_bytes=vmem_limit),
    )(
        x,
        packed["w1"], packed["b1"], packed["w2"], packed["b2"],
        packed["wh1"], packed["bh1"], packed["wh2"], packed["bh2"],
    )

    policy_logits = out[:B, :action_dim].astype(jnp.float32)
    value = out[:B, action_dim:action_dim + 1].astype(jnp.float32)
    return policy_logits, value


def init_params(key, state_dim, action_dim, hidden_dim):
    """Deterministic init mimicking PyTorch Linear default (uniform +-1/sqrt(fan_in)).

    Weights are stored pre-transposed as (in_features, out_features).
    Biases are stored as (1, out_features).
    """
    h2 = hidden_dim // 2
    layer_dims = {
        "1":  (state_dim, hidden_dim),
        "2":  (hidden_dim, hidden_dim),
        "p1": (hidden_dim, h2),
        "p2": (h2, action_dim),
        "v1": (hidden_dim, h2),
        "v2": (h2, 1),
    }
    params = {}
    for name, (fan_in, fan_out) in layer_dims.items():
        key, kw, kb = jax.random.split(key, 3)
        bound = 1.0 / jnp.sqrt(jnp.float32(fan_in))
        params["w" + name] = jax.random.uniform(
            kw, (fan_in, fan_out), jnp.float32, -bound, bound)
        params["b" + name] = jax.random.uniform(
            kb, (1, fan_out), jnp.float32, -bound, bound)
    return params


def pack_params(p, matmul_dtype=jnp.float32):
    """Fuse the two heads, zero-pad the final stage to a lane-dense width, and
    pre-cast the weights to the MXU operand dtype (biases stay f32 so all
    elementwise math remains f32).

    Padded weight columns AND padded bias lanes are exact zeros, so the padded
    output lanes are exactly zero and the wrapper slice is exact.
    """
    H2 = p["wp1"].shape[1]
    A = p["wp2"].shape[1]
    out_pad = max(128, -(-(A + 1) // 128) * 128)   # >= A+1, multiple of 128

    wh1 = jnp.concatenate([p["wp1"], p["wv1"]], axis=1)      # (H, 2*H2)
    bh1 = jnp.concatenate([p["bp1"], p["bv1"]], axis=1)      # (1, 2*H2)

    wh2 = jnp.zeros((2 * H2, out_pad), jnp.float32)
    wh2 = wh2.at[:H2, :A].set(p["wp2"])                      # policy second layer
    wh2 = wh2.at[H2:, A:A + 1].set(p["wv2"])                 # value second layer
    bh2 = jnp.zeros((1, out_pad), jnp.float32)
    bh2 = bh2.at[:, :A].set(p["bp2"])
    bh2 = bh2.at[:, A:A + 1].set(p["bv2"])

    cast = lambda w: w.astype(matmul_dtype)
    return {
        "w1": cast(p["w1"]), "b1": p["b1"],
        "w2": cast(p["w2"]), "b2": p["b2"],
        "wh1": cast(wh1), "bh1": bh1,
        "wh2": cast(wh2), "bh2": bh2,
    }


def catan_forward_ref(x, p):
    """Pure-JAX reference matching the PyTorch forward (unfused f32 params)."""
    h = jax.nn.relu(x @ p["w1"] + p["b1"])
    rep = jax.nn.relu(h @ p["w2"] + p["b2"])
    pol = jax.nn.relu(rep @ p["wp1"] + p["bp1"]) @ p["wp2"] + p["bp2"]
    val = jnp.tanh(jax.nn.relu(rep @ p["wv1"] + p["bv1"]) @ p["wv2"] + p["bv2"])
    return pol, val


if __name__ == "__main__":
    STATE_DIM = 32
    ACTION_DIM = 16
    HIDDEN_DIM = 32          # hidden_dim // 2 = 16
    BATCH = 2048             # auto tile -> 1024 rows/step, 2 steps (both v7x TCs)

    key = jax.random.PRNGKey(0)
    key, kx = jax.random.split(key)
    x = jax.random.normal(kx, (BATCH, STATE_DIM), jnp.float32)
    params = init_params(key, STATE_DIM, ACTION_DIM, HIDDEN_DIM)

    pol_ref, val_ref = catan_forward_ref(x, params)

    fwd = jax.jit(functools.partial(catan_forward, action_dim=ACTION_DIM))

    # f32-operand / f32-output path (exact vs reference)
    packed_f32 = pack_params(params, jnp.float32)
    policy_logits, value = fwd(x, packed_f32)
    jax.block_until_ready((policy_logits, value))

    assert policy_logits.shape == (BATCH, ACTION_DIM)
    assert value.shape == (BATCH, 1)
    assert jnp.allclose(policy_logits, pol_ref, atol=1e-5, rtol=1e-5)
    assert jnp.allclose(value, val_ref, atol=1e-5, rtol=1e-5)

    # bf16-operand / bf16-output path (v5e/v6e/v7x fast path: half the weight/x
    # DMA and half the output writeback; f32 accumulation) -> loose tolerance.
    packed_bf16 = pack_params(params, jnp.bfloat16)
    pol_bf, val_bf = fwd(x, packed_bf16)
    jax.block_until_ready((pol_bf, val_bf))
    assert jnp.allclose(pol_bf, pol_ref, atol=1e-1, rtol=1e-1)
    assert jnp.allclose(val_bf, val_ref, atol=1e-1, rtol=1e-1)

    print("KERNEL_OK")
</pallas_src>

<mosaic_0001>
module attributes {stable_mosaic.version = 11 : i64} {
  func.func @catan_kernel(%arg0: i32, %arg1: memref<1024x32xf32, #tpu.memory_space<vmem>>, %arg2: memref<32x32xf32, #tpu.memory_space<vmem>>, %arg3: memref<1x32xf32, #tpu.memory_space<vmem>>, %arg4: memref<32x32xf32, #tpu.memory_space<vmem>>, %arg5: memref<1x32xf32, #tpu.memory_space<vmem>>, %arg6: memref<32x32xf32, #tpu.memory_space<vmem>>, %arg7: memref<1x32xf32, #tpu.memory_space<vmem>>, %arg8: memref<32x128xf32, #tpu.memory_space<vmem>>, %arg9: memref<1x128xf32, #tpu.memory_space<vmem>>, %arg10: memref<1024x128xf32, #tpu.memory_space<vmem>>) attributes {dimension_semantics = [#tpu.dimension_semantics<parallel>], iteration_bounds = array<i64: 2>, scalar_prefetch = 0 : i64, scratch_operands = 0 : i64, tpu.core_type = #tpu.core_type<tc>, window_params = [{transform_indices = @transform_0, window_bounds = array<i64: 1024, 32>}, {pipeline_mode = #tpu.pipeline_mode<synchronous>, transform_indices = @transform_1, window_bounds = array<i64: 32, 32>}, {pipeline_mode = #tpu.pipeline_mode<synchronous>, transform_indices = @transform_2, window_bounds = array<i64: 1, 32>}, {pipeline_mode = #tpu.pipeline_mode<synchronous>, transform_indices = @transform_3, window_bounds = array<i64: 32, 32>}, {pipeline_mode = #tpu.pipeline_mode<synchronous>, transform_indices = @transform_4, window_bounds = array<i64: 1, 32>}, {pipeline_mode = #tpu.pipeline_mode<synchronous>, transform_indices = @transform_5, window_bounds = array<i64: 32, 32>}, {pipeline_mode = #tpu.pipeline_mode<synchronous>, transform_indices = @transform_6, window_bounds = array<i64: 1, 32>}, {pipeline_mode = #tpu.pipeline_mode<synchronous>, transform_indices = @transform_7, window_bounds = array<i64: 32, 128>}, {pipeline_mode = #tpu.pipeline_mode<synchronous>, transform_indices = @transform_8, window_bounds = array<i64: 1, 128>}, {transform_indices = @transform_9, window_bounds = array<i64: 1024, 128>}]} {
    %c0 = arith.constant 0 : index
    %c0_0 = arith.constant 0 : index
    %0 = vector.load %arg1[%c0, %c0_0] : memref<1024x32xf32, #tpu.memory_space<vmem>>, vector<1024x32xf32>
    %c0_1 = arith.constant 0 : index
    %c0_2 = arith.constant 0 : index
    %1 = vector.load %arg2[%c0_1, %c0_2] : memref<32x32xf32, #tpu.memory_space<vmem>>, vector<32x32xf32>
    %cst = arith.constant dense<0.000000e+00> : vector<1024x32xf32>
    %2 = tpu.matmul %0, %1, %cst {dimension_numbers = #tpu.dot_dimension_numbers<[1], [0], [0], [1], [0, 0, 1, 1], [], []>} : vector<1024x32xf32>, vector<32x32xf32>, vector<1024x32xf32> -> vector<1024x32xf32>
    %c0_3 = arith.constant 0 : index
    %c0_4 = arith.constant 0 : index
    %3 = vector.load %arg3[%c0_3, %c0_4] : memref<1x32xf32, #tpu.memory_space<vmem>>, vector<1x32xf32>
    %4 = vector.broadcast %3 : vector<1x32xf32> to vector<1024x32xf32>
    %5 = arith.addf %2, %4 : vector<1024x32xf32>
    %cst_5 = arith.constant 0.000000e+00 : f32
    %6 = vector.broadcast %cst_5 : f32 to vector<1024x32xf32>
    %7 = arith.maximumf %5, %6 : vector<1024x32xf32>
    %c0_6 = arith.constant 0 : index
    %c0_7 = arith.constant 0 : index
    %8 = vector.load %arg4[%c0_6, %c0_7] : memref<32x32xf32, #tpu.memory_space<vmem>>, vector<32x32xf32>
    %cst_8 = arith.constant dense<0.000000e+00> : vector<1024x32xf32>
    %9 = tpu.matmul %7, %8, %cst_8 {dimension_numbers = #tpu.dot_dimension_numbers<[1], [0], [0], [1], [0, 0, 1, 1], [], []>} : vector<1024x32xf32>, vector<32x32xf32>, vector<1024x32xf32> -> vector<1024x32xf32>
    %c0_9 = arith.constant 0 : index
    %c0_10 = arith.constant 0 : index
    %10 = vector.load %arg5[%c0_9, %c0_10] : memref<1x32xf32, #tpu.memory_space<vmem>>, vector<1x32xf32>
    %11 = vector.broadcast %10 : vector<1x32xf32> to vector<1024x32xf32>
    %12 = arith.addf %9, %11 : vector<1024x32xf32>
    %cst_11 = arith.constant 0.000000e+00 : f32
    %13 = vector.broadcast %cst_11 : f32 to vector<1024x32xf32>
    %14 = arith.maximumf %12, %13 : vector<1024x32xf32>
    %c0_12 = arith.constant 0 : index
    %c0_13 = arith.constant 0 : index
    %15 = vector.load %arg6[%c0_12, %c0_13] : memref<32x32xf32, #tpu.memory_space<vmem>>, vector<32x32xf32>
    %cst_14 = arith.constant dense<0.000000e+00> : vector<1024x32xf32>
    %16 = tpu.matmul %14, %15, %cst_14 {dimension_numbers = #tpu.dot_dimension_numbers<[1], [0], [0], [1], [0, 0, 1, 1], [], []>} : vector<1024x32xf32>, vector<32x32xf32>, vector<1024x32xf32> -> vector<1024x32xf32>
    %c0_15 = arith.constant 0 : index
    %c0_16 = arith.constant 0 : index
    %17 = vector.load %arg7[%c0_15, %c0_16] : memref<1x32xf32, #tpu.memory_space<vmem>>, vector<1x32xf32>
    %18 = vector.broadcast %17 : vector<1x32xf32> to vector<1024x32xf32>
    %19 = arith.addf %16, %18 : vector<1024x32xf32>
    %cst_17 = arith.constant 0.000000e+00 : f32
    %20 = vector.broadcast %cst_17 : f32 to vector<1024x32xf32>
    %21 = arith.maximumf %19, %20 : vector<1024x32xf32>
    %c0_18 = arith.constant 0 : index
    %c0_19 = arith.constant 0 : index
    %22 = vector.load %arg8[%c0_18, %c0_19] : memref<32x128xf32, #tpu.memory_space<vmem>>, vector<32x128xf32>
    %cst_20 = arith.constant dense<0.000000e+00> : vector<1024x128xf32>
    %23 = tpu.matmul %21, %22, %cst_20 {dimension_numbers = #tpu.dot_dimension_numbers<[1], [0], [0], [1], [0, 0, 1, 1], [], []>} : vector<1024x32xf32>, vector<32x128xf32>, vector<1024x128xf32> -> vector<1024x128xf32>
    %c0_21 = arith.constant 0 : index
    %c0_22 = arith.constant 0 : index
    %24 = vector.load %arg9[%c0_21, %c0_22] : memref<1x128xf32, #tpu.memory_space<vmem>>, vector<1x128xf32>
    %25 = vector.broadcast %24 : vector<1x128xf32> to vector<1024x128xf32>
    %26 = arith.addf %23, %25 : vector<1024x128xf32>
    %27 = tpu.iota {dimensions = array<i32: 1>} : vector<1024x128xi32>
    %c16_i32 = arith.constant 16 : i32
    %28 = vector.broadcast %c16_i32 : i32 to vector<1024x128xi32>
    %29 = arith.cmpi eq, %27, %28 : vector<1024x128xi32>
    %30 = math.tanh %26 : vector<1024x128xf32>
    %31 = arith.select %29, %30, %26 : vector<1024x128xi1>, vector<1024x128xf32>
    %c0_23 = arith.constant 0 : index
    %c0_24 = arith.constant 0 : index
    %32 = vector.load %arg10[%c0_23, %c0_24] : memref<1024x128xf32, #tpu.memory_space<vmem>>, vector<1024x128xf32>
    tpu.vector_store %arg10[%c0_23, %c0_24], %31 {strides = array<i32>} : memref<1024x128xf32, #tpu.memory_space<vmem>>, vector<1024x128xf32>,
    return
  }
  func.func @transform_0(%arg0: i32) -> (i32, i32) {
    %c0_i32 = arith.constant 0 : i32
    %c0_i32_0 = arith.constant 0 : i32
    return %arg0, %c0_i32 : i32, i32
  }
  func.func @transform_1(%arg0: i32) -> (i32, i32) {
    %c0_i32 = arith.constant 0 : i32
    %c0_i32_0 = arith.constant 0 : i32
    %c0_i32_1 = arith.constant 0 : i32
    return %c0_i32, %c0_i32_0 : i32, i32
  }
  func.func @transform_2(%arg0: i32) -> (i32, i32) {
    %c0_i32 = arith.constant 0 : i32
    %c0_i32_0 = arith.constant 0 : i32
    %c0_i32_1 = arith.constant 0 : i32
    return %c0_i32, %c0_i32_0 : i32, i32
  }
  func.func @transform_3(%arg0: i32) -> (i32, i32) {
    %c0_i32 = arith.constant 0 : i32
    %c0_i32_0 = arith.constant 0 : i32
    %c0_i32_1 = arith.constant 0 : i32
    return %c0_i32, %c0_i32_0 : i32, i32
  }
  func.func @transform_4(%arg0: i32) -> (i32, i32) {
    %c0_i32 = arith.constant 0 : i32
    %c0_i32_0 = arith.constant 0 : i32
    %c0_i32_1 = arith.constant 0 : i32
    return %c0_i32, %c0_i32_0 : i32, i32
  }
  func.func @transform_5(%arg0: i32) -> (i32, i32) {
    %c0_i32 = arith.constant 0 : i32
    %c0_i32_0 = arith.constant 0 : i32
    %c0_i32_1 = arith.constant 0 : i32
    return %c0_i32, %c0_i32_0 : i32, i32
  }
  func.func @transform_6(%arg0: i32) -> (i32, i32) {
    %c0_i32 = arith.constant 0 : i32
    %c0_i32_0 = arith.constant 0 : i32
    %c0_i32_1 = arith.constant 0 : i32
    return %c0_i32, %c0_i32_0 : i32, i32
  }
  func.func @transform_7(%arg0: i32) -> (i32, i32) {
    %c0_i32 = arith.constant 0 : i32
    %c0_i32_0 = arith.constant 0 : i32
    %c0_i32_1 = arith.constant 0 : i32
    return %c0_i32, %c0_i32_0 : i32, i32
  }
  func.func @transform_8(%arg0: i32) -> (i32, i32) {
    %c0_i32 = arith.constant 0 : i32
    %c0_i32_0 = arith.constant 0 : i32
    %c0_i32_1 = arith.constant 0 : i32
    return %c0_i32, %c0_i32_0 : i32, i32
  }
  func.func @transform_9(%arg0: i32) -> (i32, i32) {
    %c0_i32 = arith.constant 0 : i32
    %c0_i32_0 = arith.constant 0 : i32
    return %arg0, %c0_i32 : i32, i32
  }
}

</mosaic_0001>

<llo_original>
// kernel: catan_forward.1
$region0: #{catan_forward.1}
  #allocation0 [shape = 'u32[]', space=smem, size = 0x4, offset = 0x4, fixed_abs, tag = 'smem constant byte address 0x4 - core index']
  #allocation1 [shape = 'u32[144,128]{1,0:T(1,128)}', space=vmem, size = 0x12000, scoped, tag = 'internal scratch']
  %s0 = inlined_call_operand.vmem [shape: f32[2048,32], index: 0, kind: input, shape index: {}]
  %s1 = inlined_call_operand.vmem [shape: f32[32,32], index: 1, kind: input, shape index: {}]
  %s2 = inlined_call_operand.vmem [shape: f32[1,32], index: 2, kind: input, shape index: {}]
  %s3 = inlined_call_operand.vmem [shape: f32[32,32], index: 3, kind: input, shape index: {}]
  %s4 = inlined_call_operand.vmem [shape: f32[1,32], index: 4, kind: input, shape index: {}]
  %s5 = inlined_call_operand.vmem [shape: f32[32,32], index: 5, kind: input, shape index: {}]
  %s6 = inlined_call_operand.vmem [shape: f32[1,32], index: 6, kind: input, shape index: {}]
  %s7 = inlined_call_operand.vmem [shape: f32[32,128], index: 7, kind: input, shape index: {}]
  %s8 = inlined_call_operand.vmem [shape: f32[1,128], index: 8, kind: input, shape index: {}]
  %s9 = inlined_call_operand.vmem [shape: f32[2048,128], index: 9, kind: output, shape index: {}]
  %s10 = sld [smem:[#allocation0]]
  $region69: #{catan_forward.1} parent=0
    _
  %s12 = ssub.s32 1, %s10
  %s13 = scalar_select 0, %s12, %s10
  loop: start=0, step=1, limit=4
  $region2: #{catan_forward.1} parent=0 // loop_pre_header
    _
  $region3: #{catan_forward.1} parent=0 // loop_header
    %s15 = sphi 0, %s19
    %p16 = scmp.ge.s32.totalorder %s15, 4
    %s25 = sphi 0, %s27
    %s28 = sphi 0, %s25
    %s29 = sphi 0, %s28
    %s45 = sphi 0, %s29
    %s49 = sphi 0, %s49
    %s51 = sphi 0, %s49
    %s52 = sphi 0, %s51
    %s66 = sphi 0, %s52
    %s70 = sphi 0, %s70
    %s72 = sphi 0, %s70
    %s73 = sphi 0, %s72
    %s87 = sphi 0, %s73
    %s91 = sphi 0, %s91
    %s93 = sphi 0, %s91
    %s94 = sphi 0, %s93
    %s108 = sphi 0, %s94
    %s112 = sphi 0, %s112
    %s114 = sphi 0, %s112
    %s115 = sphi 0, %s114
    %s129 = sphi 0, %s115
    %s133 = sphi 0, %s133
    %s135 = sphi 0, %s133
    %s136 = sphi 0, %s135
    %s150 = sphi 0, %s136
    %s154 = sphi 0, %s154
    %s156 = sphi 0, %s154
    %s157 = sphi 0, %s156
    %s171 = sphi 0, %s157
    %s175 = sphi 0, %s175
    %s177 = sphi 0, %s175
    %s178 = sphi 0, %s177
    %s192 = sphi 0, %s178
    %s196 = sphi 0, %s196
    %s198 = sphi 0, %s196
    %s199 = sphi 0, %s198
    %s213 = sphi 0, %s199
    %s219 = sphi 0, %s221
    %s222 = sphi 0, %s219
    %s223 = sphi 0, %s222
    %s239 = sphi 0, %s223
  $region4: #{catan_forward.1} parent=0 // loop_header_branch
    %18 = sbr.rel (%p16) target = $region8
  $region5: #{catan_forward.1} parent=0 // loop_body
    %s20 = ssub.s32 %s15, 1
    %s21 = ssub.s32 %s15, 2
    %s22 = sadd.s32 %s15, 1
    %s23 = ssub.s32 %s15, %s22
    %p24 = scmp.eq.s32.totalorder %s23, 0
    %s26 = sadd.s32 %s25, 1
    %s27 = scalar_select %p24, %s25, %s26
    %p30 = pneg %p24
    %p31 = scmp.eq.s32.totalorder %s15, 1
    %p32 = por %p30, %p31
    %p33 = scmp.ne.s32.totalorder %s25, %s28
    %p34 = scmp.eq.s32.totalorder %s15, 0
    %p35 = por %p33, %p34
    %p36 = scmp.ne.s32.totalorder %s25, %s28
    %p37 = scmp.eq.s32.totalorder %s20, 1
    %p38 = por %p36, %p37
    %p39 = scmp.ne.s32.totalorder %s28, %s29
    %p40 = scmp.eq.s32.totalorder %s20, 0
    %p41 = por %p39, %p40
    %p42 = scmp.ne.s32.totalorder %s28, %s29
    %p43 = scmp.eq.s32.totalorder %s21, 1
    %p44 = por %p42, %p43
    %p46 = scmp.ne.s32.totalorder %s29, %s45
    %p47 = scmp.eq.s32.totalorder %s21, 0
    %p48 = por %p46, %p47
    %s50 = sadd.s32 %s49, 1
    %p53 = scmp.eq.s32.totalorder %s15, 1
    %p54 = scmp.ne.s32.totalorder %s49, %s51
    %p55 = scmp.eq.s32.totalorder %s15, 0
    %p56 = por %p54, %p55
    %p57 = scmp.ne.s32.totalorder %s49, %s51
    %p58 = scmp.eq.s32.totalorder %s20, 1
    %p59 = por %p57, %p58
    %p60 = scmp.ne.s32.totalorder %s51, %s52
    %p61 = scmp.eq.s32.totalorder %s20, 0
    %p62 = por %p60, %p61
    %p63 = scmp.ne.s32.totalorder %s51, %s52
    %p64 = scmp.eq.s32.totalorder %s21, 1
    %p65 = por %p63, %p64
    %p67 = scmp.ne.s32.totalorder %s52, %s66
    %p68 = scmp.eq.s32.totalorder %s21, 0
    %p69 = por %p67, %p68
    %s71 = sadd.s32 %s70, 1
    %p74 = scmp.eq.s32.totalorder %s15, 1
    %p75 = scmp.ne.s32.totalorder %s70, %s72
    %p76 = scmp.eq.s32.totalorder %s15, 0
    %p77 = por %p75, %p76
    %p78 = scmp.ne.s32.totalorder %s70, %s72
    %p79 = scmp.eq.s32.totalorder %s20, 1
    %p80 = por %p78, %p79
    %p81 = scmp.ne.s32.totalorder %s72, %s73
    %p82 = scmp.eq.s32.totalorder %s20, 0
    %p83 = por %p81, %p82
    %p84 = scmp.ne.s32.totalorder %s72, %s73
    %p85 = scmp.eq.s32.totalorder %s21, 1
    %p86 = por %p84, %p85
    %p88 = scmp.ne.s32.totalorder %s73, %s87
    %p89 = scmp.eq.s32.totalorder %s21, 0
    %p90 = por %p88, %p89
    %s92 = sadd.s32 %s91, 1
    %p95 = scmp.eq.s32.totalorder %s15, 1
    %p96 = scmp.ne.s32.totalorder %s91, %s93
    %p97 = scmp.eq.s32.totalorder %s15, 0
    %p98 = por %p96, %p97
    %p99 = scmp.ne.s32.totalorder %s91, %s93
    %p100 = scmp.eq.s32.totalorder %s20, 1
    %p101 = por %p99, %p100
    %p102 = scmp.ne.s32.totalorder %s93, %s94
    %p103 = scmp.eq.s32.totalorder %s20, 0
    %p104 = por %p102, %p103
    %p105 = scmp.ne.s32.totalorder %s93, %s94
    %p106 = scmp.eq.s32.totalorder %s21, 1
    %p107 = por %p105, %p106
    %p109 = scmp.ne.s32.totalorder %s94, %s108
    %p110 = scmp.eq.s32.totalorder %s21, 0
    %p111 = por %p109, %p110
    %s113 = sadd.s32 %s112, 1
    %p116 = scmp.eq.s32.totalorder %s15, 1
    %p117 = scmp.ne.s32.totalorder %s112, %s114
    %p118 = scmp.eq.s32.totalorder %s15, 0
    %p119 = por %p117, %p118
    %p120 = scmp.ne.s32.totalorder %s112, %s114
    %p121 = scmp.eq.s32.totalorder %s20, 1
    %p122 = por %p120, %p121
    %p123 = scmp.ne.s32.totalorder %s114, %s115
    %p124 = scmp.eq.s32.totalorder %s20, 0
    %p125 = por %p123, %p124
    %p126 = scmp.ne.s32.totalorder %s114, %s115
    %p127 = scmp.eq.s32.totalorder %s21, 1
    %p128 = por %p126, %p127
    %p130 = scmp.ne.s32.totalorder %s115, %s129
    %p131 = scmp.eq.s32.totalorder %s21, 0
    %p132 = por %p130, %p131
    %s134 = sadd.s32 %s133, 1
    %p137 = scmp.eq.s32.totalorder %s15, 1
    %p138 = scmp.ne.s32.totalorder %s133, %s135
    %p139 = scmp.eq.s32.totalorder %s15, 0
    %p140 = por %p138, %p139
    %p141 = scmp.ne.s32.totalorder %s133, %s135
    %p142 = scmp.eq.s32.totalorder %s20, 1
    %p143 = por %p141, %p142
    %p144 = scmp.ne.s32.totalorder %s135, %s136
    %p145 = scmp.eq.s32.totalorder %s20, 0
    %p146 = por %p144, %p145
    %p147 = scmp.ne.s32.totalorder %s135, %s136
    %p148 = scmp.eq.s32.totalorder %s21, 1
    %p149 = por %p147, %p148
    %p151 = scmp.ne.s32.totalorder %s136, %s150
    %p152 = scmp.eq.s32.totalorder %s21, 0
    %p153 = por %p151, %p152
    %s155 = sadd.s32 %s154, 1
    %p158 = scmp.eq.s32.totalorder %s15, 1
    %p159 = scmp.ne.s32.totalorder %s154, %s156
    %p160 = scmp.eq.s32.totalorder %s15, 0
    %p161 = por %p159, %p160
    %p162 = scmp.ne.s32.totalorder %s154, %s156
    %p163 = scmp.eq.s32.totalorder %s20, 1
    %p164 = por %p162, %p163
    %p165 = scmp.ne.s32.totalorder %s156, %s157
    %p166 = scmp.eq.s32.totalorder %s20, 0
    %p167 = por %p165, %p166
    %p168 = scmp.ne.s32.totalorder %s156, %s157
    %p169 = scmp.eq.s32.totalorder %s21, 1
    %p170 = por %p168, %p169
    %p172 = scmp.ne.s32.totalorder %s157, %s171
    %p173 = scmp.eq.s32.totalorder %s21, 0
    %p174 = por %p172, %p173
    %s176 = sadd.s32 %s175, 1
    %p179 = scmp.eq.s32.totalorder %s15, 1
    %p180 = scmp.ne.s32.totalorder %s175, %s177
    %p181 = scmp.eq.s32.totalorder %s15, 0
    %p182 = por %p180, %p181
    %p183 = scmp.ne.s32.totalorder %s175, %s177
    %p184 = scmp.eq.s32.totalorder %s20, 1
    %p185 = por %p183, %p184
    %p186 = scmp.ne.s32.totalorder %s177, %s178
    %p187 = scmp.eq.s32.totalorder %s20, 0
    %p188 = por %p186, %p187
    %p189 = scmp.ne.s32.totalorder %s177, %s178
    %p190 = scmp.eq.s32.totalorder %s21, 1
    %p191 = por %p189, %p190
    %p193 = scmp.ne.s32.totalorder %s178, %s192
    %p194 = scmp.eq.s32.totalorder %s21, 0
    %p195 = por %p193, %p194
    %s197 = sadd.s32 %s196, 1
    %p200 = scmp.eq.s32.totalorder %s15, 1
    %p201 = scmp.ne.s32.totalorder %s196, %s198
    %p202 = scmp.eq.s32.totalorder %s15, 0
    %p203 = por %p201, %p202
    %p204 = scmp.ne.s32.totalorder %s196, %s198
    %p205 = scmp.eq.s32.totalorder %s20, 1
    %p206 = por %p204, %p205
    %p207 = scmp.ne.s32.totalorder %s198, %s199
    %p208 = scmp.eq.s32.totalorder %s20, 0
    %p209 = por %p207, %p208
    %p210 = scmp.ne.s32.totalorder %s198, %s199
    %p211 = scmp.eq.s32.totalorder %s21, 1
    %p212 = por %p210, %p211
    %p214 = scmp.ne.s32.totalorder %s199, %s213
    %p215 = scmp.eq.s32.totalorder %s21, 0
    %p216 = por %p214, %p215
    %s217 = ssub.s32 %s15, %s22
    %p218 = scmp.eq.s32.totalorder %s217, 0
    %s220 = sadd.s32 %s219, 1
    %s221 = scalar_select %p218, %s219, %s220
    %p224 = pneg %p218
    %p225 = scmp.eq.s32.totalorder %s15, 1
    %p226 = por %p224, %p225
    %p227 = scmp.ne.s32.totalorder %s219, %s222
    %p228 = scmp.eq.s32.totalorder %s15, 0
    %p229 = por %p227, %p228
    %p230 = scmp.ne.s32.totalorder %s219, %s222
    %p231 = scmp.eq.s32.totalorder %s20, 1
    %p232 = por %p230, %p231
    %p233 = scmp.ne.s32.totalorder %s222, %s223
    %p234 = scmp.eq.s32.totalorder %s20, 0
    %p235 = por %p233, %p234
    %p236 = scmp.ne.s32.totalorder %s222, %s223
    %p237 = scmp.eq.s32.totalorder %s21, 1
    %p238 = por %p236, %p237
    %p240 = scmp.ne.s32.totalorder %s223, %s239
    %p241 = scmp.eq.s32.totalorder %s21, 0
    %p242 = por %p240, %p241
    %p243 = scmp.le.s32.totalorder 1, %s15
    %p244 = scmp.lt.s32.totalorder %s15, 3
    %p245 = pnand %p243, %p244
    %p246 = pneg %p245
    // Predicated region
    $region9: #{catan_forward.1} parent=5 // pred_check
      _
    $region10: #{catan_forward.1} parent=5 // pred_check_branch
      %248 = sbr.rel (%p245) target = $region12
    $region11: #{catan_forward.1} parent=5 // pred_region
      %s249 = ssub.s32 %s15, 1
      // Predicated region
      $region13: #{catan_forward.1} parent=11 // pred_check
        %p250 = pneg %p62
      $region14: #{catan_forward.1} parent=11 // pred_check_branch
        %252 = sbr.rel (%p250) target = $region16
      $region15: #{catan_forward.1} parent=11 // pred_region
        _
      $region16: #{catan_forward.1} parent=11 // pred_fallthru
        _
      // Predicated region
      $region17: #{catan_forward.1} parent=11 // pred_check
        %p253 = pneg %p83
      $region18: #{catan_forward.1} parent=11 // pred_check_branch
        %255 = sbr.rel (%p253) target = $region20
      $region19: #{catan_forward.1} parent=11 // pred_region
        _
      $region20: #{catan_forward.1} parent=11 // pred_fallthru
        _
      // Predicated region
      $region21: #{catan_forward.1} parent=11 // pred_check
        %p256 = pneg %p104
      $region22: #{catan_forward.1} parent=11 // pred_check_branch
        %258 = sbr.rel (%p256) target = $region24
      $region23: #{catan_forward.1} parent=11 // pred_region
        _
      $region24: #{catan_forward.1} parent=11 // pred_fallthru
        _
      // Predicated region
      $region25: #{catan_forward.1} parent=11 // pred_check
        %p259 = pneg %p125
      $region26: #{catan_forward.1} parent=11 // pred_check_branch
        %261 = sbr.rel (%p259) target = $region28
      $region27: #{catan_forward.1} parent=11 // pred_region
        _
      $region28: #{catan_forward.1} parent=11 // pred_fallthru
        _
      // Predicated region
      $region29: #{catan_forward.1} parent=11 // pred_check
        %p262 = pneg %p146
      $region30: #{catan_forward.1} parent=11 // pred_check_branch
        %264 = sbr.rel (%p262) target = $region32
      $region31: #{catan_forward.1} parent=11 // pred_region
        _
      $region32: #{catan_forward.1} parent=11 // pred_fallthru
        _
      // Predicated region
      $region33: #{catan_forward.1} parent=11 // pred_check
        %p265 = pneg %p167
      $region34: #{catan_forward.1} parent=11 // pred_check_branch
        %267 = sbr.rel (%p265) target = $region36
      $region35: #{catan_forward.1} parent=11 // pred_region
        _
      $region36: #{catan_forward.1} parent=11 // pred_fallthru
        _
      // Predicated region
      $region37: #{catan_forward.1} parent=11 // pred_check
        %p268 = pneg %p188
      $region38: #{catan_forward.1} parent=11 // pred_check_branch
        %270 = sbr.rel (%p268) target = $region40
      $region39: #{catan_forward.1} parent=11 // pred_region
        _
      $region40: #{catan_forward.1} parent=11 // pred_fallthru
        _
      // Predicated region
      $region41: #{catan_forward.1} parent=11 // pred_check
        %p271 = pneg %p209
      $region42: #{catan_forward.1} parent=11 // pred_check_branch
        %273 = sbr.rel (%p271) target = $region44
      $region43: #{catan_forward.1} parent=11 // pred_region
        _
      $region44: #{catan_forward.1} parent=11 // pred_fallthru
        _
    $region12: #{catan_forward.1} parent=5 // pred_fallthru
      _
    %p274 = scmp.lt.s32.totalorder %s15, 2
    // Predicated region
    $region45: #{catan_forward.1} parent=5 // pred_check
      %p275 = pneg %p274
    $region46: #{catan_forward.1} parent=5 // pred_check_branch
      %277 = sbr.rel (%p275) target = $region48
    $region47: #{catan_forward.1} parent=5 // pred_region
      // Predicated region
      $region49: #{catan_forward.1} parent=47 // pred_check
        %p278 = pneg %p35
      $region50: #{catan_forward.1} parent=47 // pred_check_branch
        %280 = sbr.rel (%p278) target = $region52
      $region51: #{catan_forward.1} parent=47 // pred_region
        %s281 = smul.u32 128, %s15
        %p282 = scmp.lt.s32.totalorder %s281, 255
        %s283 = scalar_select %p282, %s281, 255
        %s284 = smul.addr %s283, 8
        %s285 = scalar_lea.vmem %s0, %s284
        %s286 = smul.u32 128, %s15
      $region52: #{catan_forward.1} parent=47 // pred_fallthru
        _
    $region48: #{catan_forward.1} parent=5 // pred_fallthru
      _
    %p287 = scmp.le.s32.totalorder 1, %s15
    %p288 = scmp.lt.s32.totalorder %s15, 3
    %p289 = pnand %p287, %p288
    %p290 = pneg %p289
    // Predicated region
    $region53: #{catan_forward.1} parent=5 // pred_check
      _
    $region54: #{catan_forward.1} parent=5 // pred_check_branch
      %292 = sbr.rel (%p289) target = $region56
    $region55: #{catan_forward.1} parent=5 // pred_region
      %s293 = ssub.s32 %s15, 1
      %s294 = smul.u32 128, %s20
      %p295 = scmp.lt.s32.totalorder %s294, 255
      %s296 = scalar_select %p295, %s294, 255
      %s297 = smul.addr %s296, 8
      %s298 = scalar_lea.vmem %s0, %s297
      %p299 = pneg %p41
      %p300 = pneg %p38
      %p301 = pneg %p62
      %p302 = pneg %p59
      %p303 = pneg %p83
      %p304 = pneg %p80
      %p305 = pneg %p104
      %p306 = pneg %p101
      %p307 = pneg %p125
      %p308 = pneg %p122
      %p309 = pneg %p146
      %p310 = pneg %p143
      %p311 = pneg %p167
      %p312 = pneg %p164
      %p313 = pneg %p188
      %p314 = pneg %p185
      %p315 = pneg %p209
      %p316 = pneg %p206
      %p317 = pneg %p235
      %p318 = pneg %p232
      %s319 = smul.u32 128, %s20
      %p320 = scmp.lt.s32.totalorder %s319, 255
      %s321 = scalar_select %p320, %s319, 255
      %s322 = smul.addr %s321, 8
      %s323 = scalar_lea.vmem %s9, %s322
      %s324 = smul.u32 128, %s20
      %p325 = scmp.lt.s32.totalorder %s324, 255
      %s326 = scalar_select %p325, %s324, 255
      %s327 = smul.addr %s326, 8
      %s328 = scalar_lea.vmem %s0, %s327
      %s329 = smul.u32 128, %s20
      %s330 = smul.u32 128, %s20
      %p331 = scmp.lt.s32.totalorder %s330, 255
      %s332 = scalar_select %p331, %s330, 255
      %s333 = smul.addr %s332, 8
      %s334 = scalar_lea.vmem %s9, %s333
      %s335 = smul.u32 128, %s20
      %v336 = vld [vmem:[%s328] sm:$0xff]
      %v337 = vld [vmem:[%s328 + $0x8] sm:$0xff]
      %v338 = vld [vmem:[%s328 + $0x10] sm:$0xff]
      %v339 = vld [vmem:[%s328 + $0x18] sm:$0xff]
      %v340 = vld [vmem:[%s328 + $0x20] sm:$0xff]
      %v341 = vld [vmem:[%s328 + $0x28] sm:$0xff]
      %v342 = vld [vmem:[%s328 + $0x30] sm:$0xff]
      %v343 = vld [vmem:[%s328 + $0x38] sm:$0xff]
      %v344 = vld [vmem:[%s328 + $0x40] sm:$0xff]
      %v345 = vld [vmem:[%s328 + $0x48] sm:$0xff]
      %v346 = vld [vmem:[%s328 + $0x50] sm:$0xff]
      %v347 = vld [vmem:[%s328 + $0x58] sm:$0xff]
      %v348 = vld [vmem:[%s328 + $0x60] sm:$0xff]
      %v349 = vld [vmem:[%s328 + $0x68] sm:$0xff]
      %v350 = vld [vmem:[%s328 + $0x70] sm:$0xff]
      %v351 = vld [vmem:[%s328 + $0x78] sm:$0xff]
      %v352 = vld [vmem:[%s328 + $0x80] sm:$0xff]
      %v353 = vld [vmem:[%s328 + $0x88] sm:$0xff]
      %v354 = vld [vmem:[%s328 + $0x90] sm:$0xff]
      %v355 = vld [vmem:[%s328 + $0x98] sm:$0xff]
      %v356 = vld [vmem:[%s328 + $0xa0] sm:$0xff]
      %v357 = vld [vmem:[%s328 + $0xa8] sm:$0xff]
      %v358 = vld [vmem:[%s328 + $0xb0] sm:$0xff]
      %v359 = vld [vmem:[%s328 + $0xb8] sm:$0xff]
      %v360 = vld [vmem:[%s328 + $0xc0] sm:$0xff]
      %v361 = vld [vmem:[%s328 + $0xc8] sm:$0xff]
      %v362 = vld [vmem:[%s328 + $0xd0] sm:$0xff]
      %v363 = vld [vmem:[%s328 + $0xd8] sm:$0xff]
      %v364 = vld [vmem:[%s328 + $0xe0] sm:$0xff]
      %v365 = vld [vmem:[%s328 + $0xe8] sm:$0xff]
      %v366 = vld [vmem:[%s328 + $0xf0] sm:$0xff]
      %v367 = vld [vmem:[%s328 + $0xf8] sm:$0xff]
      %v368 = vld [vmem:[%s328 + $0x100] sm:$0xff]
      %v369 = vld [vmem:[%s328 + $0x108] sm:$0xff]
      %v370 = vld [vmem:[%s328 + $0x110] sm:$0xff]
      %v371 = vld [vmem:[%s328 + $0x118] sm:$0xff]
      %v372 = vld [vmem:[%s328 + $0x120] sm:$0xff]
      %v373 = vld [vmem:[%s328 + $0x128] sm:$0xff]
      %v374 = vld [vmem:[%s328 + $0x130] sm:$0xff]
      %v375 = vld [vmem:[%s328 + $0x138] sm:$0xff]
      %v376 = vld [vmem:[%s328 + $0x140] sm:$0xff]
      %v377 = vld [vmem:[%s328 + $0x148] sm:$0xff]
      %v378 = vld [vmem:[%s328 + $0x150] sm:$0xff]
      %v379 = vld [vmem:[%s328 + $0x158] sm:$0xff]
      %v380 = vld [vmem:[%s328 + $0x160] sm:$0xff]
      %v381 = vld [vmem:[%s328 + $0x168] sm:$0xff]
      %v382 = vld [vmem:[%s328 + $0x170] sm:$0xff]
      %v383 = vld [vmem:[%s328 + $0x178] sm:$0xff]
      %v384 = vld [vmem:[%s328 + $0x180] sm:$0xff]
      %v385 = vld [vmem:[%s328 + $0x188] sm:$0xff]
      %v386 = vld [vmem:[%s328 + $0x190] sm:$0xff]
      %v387 = vld [vmem:[%s328 + $0x198] sm:$0xff]
      %v388 = vld [vmem:[%s328 + $0x1a0] sm:$0xff]
      %v389 = vld [vmem:[%s328 + $0x1a8] sm:$0xff]
      %v390 = vld [vmem:[%s328 + $0x1b0] sm:$0xff]
      %v391 = vld [vmem:[%s328 + $0x1b8] sm:$0xff]
      %v392 = vld [vmem:[%s328 + $0x1c0] sm:$0xff]
      %v393 = vld [vmem:[%s328 + $0x1c8] sm:$0xff]
      %v394 = vld [vmem:[%s328 + $0x1d0] sm:$0xff]
      %v395 = vld [vmem:[%s328 + $0x1d8] sm:$0xff]
      %v396 = vld [vmem:[%s328 + $0x1e0] sm:$0xff]
      %v397 = vld [vmem:[%s328 + $0x1e8] sm:$0xff]
      %v398 = vld [vmem:[%s328 + $0x1f0] sm:$0xff]
      %v399 = vld [vmem:[%s328 + $0x1f8] sm:$0xff]
      %v400 = vld [vmem:[%s328 + $0x200] sm:$0xff]
      %v401 = vld [vmem:[%s328 + $0x208] sm:$0xff]
      %v402 = vld [vmem:[%s328 + $0x210] sm:$0xff]
      %v403 = vld [vmem:[%s328 + $0x218] sm:$0xff]
      %v404 = vld [vmem:[%s328 + $0x220] sm:$0xff]
      %v405 = vld [vmem:[%s328 + $0x228] sm:$0xff]
      %v406 = vld [vmem:[%s328 + $0x230] sm:$0xff]
      %v407 = vld [vmem:[%s328 + $0x238] sm:$0xff]
      %v408 = vld [vmem:[%s328 + $0x240] sm:$0xff]
      %v409 = vld [vmem:[%s328 + $0x248] sm:$0xff]
      %v410 = vld [vmem:[%s328 + $0x250] sm:$0xff]
      %v411 = vld [vmem:[%s328 + $0x258] sm:$0xff]
      %v412 = vld [vmem:[%s328 + $0x260] sm:$0xff]
      %v413 = vld [vmem:[%s328 + $0x268] sm:$0xff]
      %v414 = vld [vmem:[%s328 + $0x270] sm:$0xff]
      %v415 = vld [vmem:[%s328 + $0x278] sm:$0xff]
      %v416 = vld [vmem:[%s328 + $0x280] sm:$0xff]
      %v417 = vld [vmem:[%s328 + $0x288] sm:$0xff]
      %v418 = vld [vmem:[%s328 + $0x290] sm:$0xff]
      %v419 = vld [vmem:[%s328 + $0x298] sm:$0xff]
      %v420 = vld [vmem:[%s328 + $0x2a0] sm:$0xff]
      %v421 = vld [vmem:[%s328 + $0x2a8] sm:$0xff]
      %v422 = vld [vmem:[%s328 + $0x2b0] sm:$0xff]
      %v423 = vld [vmem:[%s328 + $0x2b8] sm:$0xff]
      %v424 = vld [vmem:[%s328 + $0x2c0] sm:$0xff]
      %v425 = vld [vmem:[%s328 + $0x2c8] sm:$0xff]
      %v426 = vld [vmem:[%s328 + $0x2d0] sm:$0xff]
      %v427 = vld [vmem:[%s328 + $0x2d8] sm:$0xff]
      %v428 = vld [vmem:[%s328 + $0x2e0] sm:$0xff]
      %v429 = vld [vmem:[%s328 + $0x2e8] sm:$0xff]
      %v430 = vld [vmem:[%s328 + $0x2f0] sm:$0xff]
      %v431 = vld [vmem:[%s328 + $0x2f8] sm:$0xff]
      %v432 = vld [vmem:[%s328 + $0x300] sm:$0xff]
      %v433 = vld [vmem:[%s328 + $0x308] sm:$0xff]
      %v434 = vld [vmem:[%s328 + $0x310] sm:$0xff]
      %v435 = vld [vmem:[%s328 + $0x318] sm:$0xff]
      %v436 = vld [vmem:[%s328 + $0x320] sm:$0xff]
      %v437 = vld [vmem:[%s328 + $0x328] sm:$0xff]
      %v438 = vld [vmem:[%s328 + $0x330] sm:$0xff]
      %v439 = vld [vmem:[%s328 + $0x338] sm:$0xff]
      %v440 = vld [vmem:[%s328 + $0x340] sm:$0xff]
      %v441 = vld [vmem:[%s328 + $0x348] sm:$0xff]
      %v442 = vld [vmem:[%s328 + $0x350] sm:$0xff]
      %v443 = vld [vmem:[%s328 + $0x358] sm:$0xff]
      %v444 = vld [vmem:[%s328 + $0x360] sm:$0xff]
      %v445 = vld [vmem:[%s328 + $0x368] sm:$0xff]
      %v446 = vld [vmem:[%s328 + $0x370] sm:$0xff]
      %v447 = vld [vmem:[%s328 + $0x378] sm:$0xff]
      %v448 = vld [vmem:[%s328 + $0x380] sm:$0xff]
      %v449 = vld [vmem:[%s328 + $0x388] sm:$0xff]
      %v450 = vld [vmem:[%s328 + $0x390] sm:$0xff]
      %v451 = vld [vmem:[%s328 + $0x398] sm:$0xff]
      %v452 = vld [vmem:[%s328 + $0x3a0] sm:$0xff]
      %v453 = vld [vmem:[%s328 + $0x3a8] sm:$0xff]
      %v454 = vld [vmem:[%s328 + $0x3b0] sm:$0xff]
      %v455 = vld [vmem:[%s328 + $0x3b8] sm:$0xff]
      %v456 = vld [vmem:[%s328 + $0x3c0] sm:$0xff]
      %v457 = vld [vmem:[%s328 + $0x3c8] sm:$0xff]
      %v458 = vld [vmem:[%s328 + $0x3d0] sm:$0xff]
      %v459 = vld [vmem:[%s328 + $0x3d8] sm:$0xff]
      %v460 = vld [vmem:[%s328 + $0x3e0] sm:$0xff]
      %v461 = vld [vmem:[%s328 + $0x3e8] sm:$0xff]
      %v462 = vld [vmem:[%s328 + $0x3f0] sm:$0xff]
      %v463 = vld [vmem:[%s328 + $0x3f8] sm:$0xff]
      %v464 = vld [vmem:[%s1] sm:$0xff]
      %v465 = vld [vmem:[%s1 + $0x8] sm:$0xff]
      %v466 = vld [vmem:[%s1 + $0x10] sm:$0xff]
      %v467 = vld [vmem:[%s1 + $0x18] sm:$0xff]
      %v468 = vld [vmem:[%s2] sm:$0x1]
      %v470 = vlaneseq
      %v471 = vshrl.u32 %v470, 7
      %v472 = vsub.s32 0, %v471
      %v473 = vrot.slane %v468, %v472
      %vm475 = vcmask 261120
      %v477 = vsel %vm475, %v336, 0
      %v480 = vsel %vm475, %v337, 0
      %v483 = vsel %vm475, %v338, 0
      %v486 = vsel %vm475, %v339, 0
      %v489 = vsel %vm475, %v340, 0
      %v492 = vsel %vm475, %v341, 0
      %v495 = vsel %vm475, %v342, 0
      %v498 = vsel %vm475, %v343, 0
      %v501 = vsel %vm475, %v344, 0
      %v504 = vsel %vm475, %v345, 0
      %v507 = vsel %vm475, %v346, 0
      %v510 = vsel %vm475, %v347, 0
      %v513 = vsel %vm475, %v348, 0
      %v516 = vsel %vm475, %v349, 0
      %v519 = vsel %vm475, %v350, 0
      %v522 = vsel %vm475, %v351, 0
      %v525 = vsel %vm475, %v352, 0
      %v528 = vsel %vm475, %v353, 0
      %v531 = vsel %vm475, %v354, 0
      %v534 = vsel %vm475, %v355, 0
      %v537 = vsel %vm475, %v356, 0
      %v540 = vsel %vm475, %v357, 0
      %v543 = vsel %vm475, %v358, 0
      %v546 = vsel %vm475, %v359, 0
      %v549 = vsel %vm475, %v360, 0
      %v552 = vsel %vm475, %v361, 0
      %v555 = vsel %vm475, %v362, 0
      %v558 = vsel %vm475, %v363, 0
      %v561 = vsel %vm475, %v364, 0
      %v564 = vsel %vm475, %v365, 0
      %v567 = vsel %vm475, %v366, 0
      %v570 = vsel %vm475, %v367, 0
      %v573 = vsel %vm475, %v368, 0
      %v576 = vsel %vm475, %v369, 0
      %v579 = vsel %vm475, %v370, 0
      %v582 = vsel %vm475, %v371, 0
      %v585 = vsel %vm475, %v372, 0
      %v588 = vsel %vm475, %v373, 0
      %v591 = vsel %vm475, %v374, 0
      %v594 = vsel %vm475, %v375, 0
      %v597 = vsel %vm475, %v376, 0
      %v600 = vsel %vm475, %v377, 0
      %v603 = vsel %vm475, %v378, 0
      %v606 = vsel %vm475, %v379, 0
      %v609 = vsel %vm475, %v380, 0
      %v612 = vsel %vm475, %v381, 0
      %v615 = vsel %vm475, %v382, 0
      %v618 = vsel %vm475, %v383, 0
      %v621 = vsel %vm475, %v384, 0
      %v624 = vsel %vm475, %v385, 0
      %v627 = vsel %vm475, %v386, 0
      %v630 = vsel %vm475, %v387, 0
      %v633 = vsel %vm475, %v388, 0
      %v636 = vsel %vm475, %v389, 0
      %v639 = vsel %vm475, %v390, 0
      %v642 = vsel %vm475, %v391, 0
      %v645 = vsel %vm475, %v392, 0
      %v648 = vsel %vm475, %v393, 0
      %v651 = vsel %vm475, %v394, 0
      %v654 = vsel %vm475, %v395, 0
      %v657 = vsel %vm475, %v396, 0
      %v660 = vsel %vm475, %v397, 0
      %v663 = vsel %vm475, %v398, 0
      %v666 = vsel %vm475, %v399, 0
      %v669 = vsel %vm475, %v400, 0
      %v672 = vsel %vm475, %v401, 0
      %v675 = vsel %vm475, %v402, 0
      %v678 = vsel %vm475, %v403, 0
      %v681 = vsel %vm475, %v404, 0
      %v684 = vsel %vm475, %v405, 0
      %v687 = vsel %vm475, %v406, 0
      %v690 = vsel %vm475, %v407, 0
      %v693 = vsel %vm475, %v408, 0
      %v696 = vsel %vm475, %v409, 0
      %v699 = vsel %vm475, %v410, 0
      %v702 = vsel %vm475, %v411, 0
      %v705 = vsel %vm475, %v412, 0
      %v708 = vsel %vm475, %v413, 0
      %v711 = vsel %vm475, %v414, 0
      %v714 = vsel %vm475, %v415, 0
      %v717 = vsel %vm475, %v416, 0
      %v720 = vsel %vm475, %v417, 0
      %v723 = vsel %vm475, %v418, 0
      %v726 = vsel %vm475, %v419, 0
      %v729 = vsel %vm475, %v420, 0
      %v732 = vsel %vm475, %v421, 0
      %v735 = vsel %vm475, %v422, 0
      %v738 = vsel %vm475, %v423, 0
      %v741 = vsel %vm475, %v424, 0
      %v744 = vsel %vm475, %v425, 0
      %v747 = vsel %vm475, %v426, 0
      %v750 = vsel %vm475, %v427, 0
      %v753 = vsel %vm475, %v428, 0
      %v756 = vsel %vm475, %v429, 0
      %v759 = vsel %vm475, %v430, 0
      %v762 = vsel %vm475, %v431, 0
      %v765 = vsel %vm475, %v432, 0
      %v768 = vsel %vm475, %v433, 0
      %v771 = vsel %vm475, %v434, 0
      %v774 = vsel %vm475, %v435, 0
      %v777 = vsel %vm475, %v436, 0
      %v780 = vsel %vm475, %v437, 0
      %v783 = vsel %vm475, %v438, 0
      %v786 = vsel %vm475, %v439, 0
      %v789 = vsel %vm475, %v440, 0
      %v792 = vsel %vm475, %v441, 0
      %v795 = vsel %vm475, %v442, 0
      %v798 = vsel %vm475, %v443, 0
      %v801 = vsel %vm475, %v444, 0
      %v804 = vsel %vm475, %v445, 0
      %v807 = vsel %vm475, %v446, 0
      %v810 = vsel %vm475, %v447, 0
      %v813 = vsel %vm475, %v448, 0
      %v816 = vsel %vm475, %v449, 0
      %v819 = vsel %vm475, %v450, 0
      %v822 = vsel %vm475, %v451, 0
      %v825 = vsel %vm475, %v452, 0
      %v828 = vsel %vm475, %v453, 0
      %v831 = vsel %vm475, %v454, 0
      %v834 = vsel %vm475, %v455, 0
      %v837 = vsel %vm475, %v456, 0
      %v840 = vsel %vm475, %v457, 0
      %v843 = vsel %vm475, %v458, 0
      %v846 = vsel %vm475, %v459, 0
      %v849 = vsel %vm475, %v460, 0
      %v852 = vsel %vm475, %v461, 0
      %v855 = vsel %vm475, %v462, 0
      %v858 = vsel %vm475, %v463, 0
      %860 = vmatprep.subr.mxu0 0.0
      %861 = vmatpush1.msra.mxu0 %v464
      %862 = vmatprep.subr.mxu0 0.0
      %863 = vmatpush1.msra.mxu0 %v465
      %864 = vmatprep.subr.mxu0 0.0
      %865 = vmatpush1.msra.mxu0 %v466
      %866 = vmatprep.subr.mxu0 0.0
      %867 = vmatpush1.msra.mxu0 %v467
      %868 = vmatprep.subr.mxu0 0.0
      %869 = vmatpush1.msra.mxu0 0.0
      %870 = vmatprep.subr.mxu0 0.0
      %871 = vmatpush1.msra.mxu0 0.0
      %872 = vmatprep.subr.mxu0 0.0
      %873 = vmatpush1.msra.mxu0 0.0
      %874 = vmatprep.subr.mxu0 0.0
      %875 = vmatpush1.msra.mxu0 0.0
      %876 = vmatprep.subr.mxu0 0.0
      %877 = vmatpush1.msra.mxu0 0.0
      %878 = vmatprep.subr.mxu0 0.0
      %879 = vmatpush1.msra.mxu0 0.0
      %880 = vmatprep.subr.mxu0 0.0
      %881 = vmatpush1.msra.mxu0 0.0
      %882 = vmatprep.subr.mxu0 0.0
      %883 = vmatpush1.msra.mxu0 0.0
      %884 = vmatprep.subr.mxu0 0.0
      %885 = vmatpush1.msra.mxu0 0.0
      %886 = vmatprep.subr.mxu0 0.0
      %887 = vmatpush1.msra.mxu0 0.0
      %888 = vmatprep.subr.mxu0 0.0
      %889 = vmatpush1.msra.mxu0 0.0
      %890 = vmatprep.subr.mxu0 0.0
      %891 = vmatpush1.msra.mxu0 0.0
      %892 = vmatprep.subr.mxu0 0.0
      %893 = vmatpush1.msra.mxu0 0.0
      %894 = vmatprep.subr.mxu0 0.0
      %895 = vmatpush1.msra.mxu0 0.0
      %896 = vmatprep.subr.mxu0 0.0
      %897 = vmatpush1.msra.mxu0 0.0
      %898 = vmatprep.subr.mxu0 0.0
      %899 = vmatpush1.msra.mxu0 0.0
      %900 = vmatprep.subr.mxu0 0.0
      %901 = vmatpush1.msra.mxu0 0.0
      %902 = vmatprep.subr.mxu0 0.0
      %903 = vmatpush1.msra.mxu0 0.0
      %904 = vmatprep.subr.mxu0 0.0
      %905 = vmatpush1.msra.mxu0 0.0
      %906 = vmatprep.subr.mxu0 0.0
      %907 = vmatpush1.msra.mxu0 0.0
      %908 = vmatprep.subr.mxu0 0.0
      %909 = vmatpush1.msra.mxu0 0.0
      %910 = vmatprep.subr.mxu0 0.0
      %911 = vmatpush1.msra.mxu0 0.0
      %912 = vmatprep.subr.mxu0 0.0
      %913 = vmatpush1.msra.mxu0 0.0
      %914 = vmatprep.subr.mxu0 0.0
      %915 = vmatpush1.msra.mxu0 0.0
      %916 = vmatprep.subr.mxu0 0.0
      %917 = vmatpush1.msra.mxu0 0.0
      %918 = vmatprep.subr.mxu0 0.0
      %919 = vmatpush1.msra.mxu0 0.0
      %920 = vmatprep.subr.mxu0 0.0
      %921 = vmatpush1.msra.mxu0 0.0
      %922 = vmatprep.subr.mxu0 0.0
      %923 = vmatpush1.msra.mxu0 0.0
      %924 = vmatprep.mubr.f32.mxu0 0.0
      %925 = vmatmul.mubr.f32.gmra.mrb[0].mxu0 %v477
      %v926 = vpop.f32.mrb[0].mxu0
      %v927 = vadd.f32 %v473, %v926
      %v928 = vpop.f32.mrb[0].mxu0
      %929 = vmatprep.mubr.f32.mxu0 0.0
      %930 = vmatmul.mubr.f32.gmra.mrb[0].mxu0 %v480
      %v931 = vpop.f32.mrb[0].mxu0
      %v932 = vadd.f32 %v473, %v931
      %v933 = vpop.f32.mrb[0].mxu0
      %934 = vmatprep.mubr.f32.mxu0 0.0
      %935 = vmatmul.mubr.f32.gmra.mrb[0].mxu0 %v483
      %v936 = vpop.f32.mrb[0].mxu0
      %v937 = vadd.f32 %v473, %v936
      %v938 = vpop.f32.mrb[0].mxu0
      %939 = vmatprep.mubr.f32.mxu0 0.0
      %940 = vmatmul.mubr.f32.gmra.mrb[0].mxu0 %v486
      %v941 = vpop.f32.mrb[0].mxu0
      %v942 = vadd.f32 %v473, %v941
      %v943 = vpop.f32.mrb[0].mxu0
      %944 = vmatprep.mubr.f32.mxu0 0.0
      %945 = vmatmul.mubr.f32.gmra.mrb[0].mxu0 %v489
      %v946 = vpop.f32.mrb[0].mxu0
      %v947 = vadd.f32 %v473, %v946
      %v948 = vpop.f32.mrb[0].mxu0
      %949 = vmatprep.mubr.f32.mxu0 0.0
      %950 = vmatmul.mubr.f32.gmra.mrb[0].mxu0 %v492
      %v951 = vpop.f32.mrb[0].mxu0
      %v952 = vadd.f32 %v473, %v951
      %v953 = vpop.f32.mrb[0].mxu0
      %954 = vmatprep.mubr.f32.mxu0 0.0
      %955 = vmatmul.mubr.f32.gmra.mrb[0].mxu0 %v495
      %v956 = vpop.f32.mrb[0].mxu0
      %v957 = vadd.f32 %v473, %v956
      %v958 = vpop.f32.mrb[0].mxu0
      %959 = vmatprep.mubr.f32.mxu0 0.0
      %960 = vmatmul.mubr.f32.gmra.mrb[0].mxu0 %v498
      %v961 = vpop.f32.mrb[0].mxu0
      %v962 = vadd.f32 %v473, %v961
      %v963 = vpop.f32.mrb[0].mxu0
      %964 = vmatprep.mubr.f32.mxu0 0.0
      %965 = vmatmul.mubr.f32.gmra.mrb[0].mxu0 %v501
      %v966 = vpop.f32.mrb[0].mxu0
      %v967 = vadd.f32 %v473, %v966
      %v968 = vpop.f32.mrb[0].mxu0
      %969 = vmatprep.mubr.f32.mxu0 0.0
      %970 = vmatmul.mubr.f32.gmra.mrb[0].mxu0 %v504
      %v971 = vpop.f32.mrb[0].mxu0
      %v972 = vadd.f32 %v473, %v971
      %v973 = vpop.f32.mrb[0].mxu0
      %974 = vmatprep.mubr.f32.mxu0 0.0
      %975 = vmatmul.mubr.f32.gmra.mrb[0].mxu0 %v507
      %v976 = vpop.f32.mrb[0].mxu0
      %v977 = vadd.f32 %v473, %v976
      %v978 = vpop.f32.mrb[0].mxu0
      %979 = vmatprep.mubr.f32.mxu0 0.0
      %980 = vmatmul.mubr.f32.gmra.mrb[0].mxu0 %v510
      %v981 = vpop.f32.mrb[0].mxu0
      %v982 = vadd.f32 %v473, %v981
      %v983 = vpop.f32.mrb[0].mxu0
      %984 = vmatprep.mubr.f32.mxu0 0.0
      %985 = vmatmul.mubr.f32.gmra.mrb[0].mxu0 %v513
      %v986 = vpop.f32.mrb[0].mxu0
      %v987 = vadd.f32 %v473, %v986
      %v988 = vpop.f32.mrb[0].mxu0
      %989 = vmatprep.mubr.f32.mxu0 0.0
      %990 = vmatmul.mubr.f32.gmra.mrb[0].mxu0 %v516
      %v991 = vpop.f32.mrb[0].mxu0
      %v992 = vadd.f32 %v473, %v991
      %v993 = vpop.f32.mrb[0].mxu0
      %994 = vmatprep.mubr.f32.mxu0 0.0
      %995 = vmatmul.mubr.f32.gmra.mrb[0].mxu0 %v519
      %v996 = vpop.f32.mrb[0].mxu0
      %v997 = vadd.f32 %v473, %v996
      %v998 = vpop.f32.mrb[0].mxu0
      %999 = vmatprep.mubr.f32.mxu0 0.0
      %1000 = vmatmul.mubr.f32.gmra.mrb[0].mxu0 %v522
      %v1001 = vpop.f32.mrb[0].mxu0
      %v1002 = vadd.f32 %v473, %v1001
      %v1003 = vpop.f32.mrb[0].mxu0
      %1004 = vmatprep.mubr.f32.mxu0 0.0
      %1005 = vmatmul.mubr.f32.gmra.mrb[0].mxu0 %v525
      %v1006 = vpop.f32.mrb[0].mxu0
      %v1007 = vadd.f32 %v473, %v1006
      %v1008 = vpop.f32.mrb[0].mxu0
      %1009 = vmatprep.mubr.f32.mxu0 0.0
      %1010 = vmatmul.mubr.f32.gmra.mrb[0].mxu0 %v528
      %v1011 = vpop.f32.mrb[0].mxu0
      %v1012 = vadd.f32 %v473, %v1011
      %v1013 = vpop.f32.mrb[0].mxu0
      %1014 = vmatprep.mubr.f32.mxu0 0.0
      %1015 = vmatmul.mubr.f32.gmra.mrb[0].mxu0 %v531
      %v1016 = vpop.f32.mrb[0].mxu0
      %v1017 = vadd.f32 %v473, %v1016
      %v1018 = vpop.f32.mrb[0].mxu0
      %1019 = vmatprep.mubr.f32.mxu0 0.0
      %1020 = vmatmul.mubr.f32.gmra.mrb[0].mxu0 %v534
      %v1021 = vpop.f32.mrb[0].mxu0
      %v1022 = vadd.f32 %v473, %v1021
      %v1023 = vpop.f32.mrb[0].mxu0
      %1024 = vmatprep.mubr.f32.mxu0 0.0
      %1025 = vmatmul.mubr.f32.gmra.mrb[0].mxu0 %v537
      %v1026 = vpop.f32.mrb[0].mxu0
      %v1027 = vadd.f32 %v473, %v1026
      %v1028 = vpop.f32.mrb[0].mxu0
      %1029 = vmatprep.mubr.f32.mxu0 0.0
      %1030 = vmatmul.mubr.f32.gmra.mrb[0].mxu0 %v540
      %v1031 = vpop.f32.mrb[0].mxu0
      %v1032 = vadd.f32 %v473, %v1031
      %v1033 = vpop.f32.mrb[0].mxu0
      %1034 = vmatprep.mubr.f32.mxu0 0.0
      %1035 = vmatmul.mubr.f32.gmra.mrb[0].mxu0 %v543
      %v1036 = vpop.f32.mrb[0].mxu0
      %v1037 = vadd.f32 %v473, %v1036
      %v1038 = vpop.f32.mrb[0].mxu0
      %1039 = vmatprep.mubr.f32.mxu0 0.0
      %1040 = vmatmul.mubr.f32.gmra.mrb[0].mxu0 %v546
      %v1041 = vpop.f32.mrb[0].mxu0
      %v1042 = vadd.f32 %v473, %v1041
      %v1043 = vpop.f32.mrb[0].mxu0
      %1044 = vmatprep.mubr.f32.mxu0 0.0
      %1045 = vmatmul.mubr.f32.gmra.mrb[0].mxu0 %v549
      %v1046 = vpop.f32.mrb[0].mxu0
      %v1047 = vadd.f32 %v473, %v1046
      %v1048 = vpop.f32.mrb[0].mxu0
      %1049 = vmatprep.mubr.f32.mxu0 0.0
      %1050 = vmatmul.mubr.f32.gmra.mrb[0].mxu0 %v552
      %v1051 = vpop.f32.mrb[0].mxu0
      %v1052 = vadd.f32 %v473, %v1051
      %v1053 = vpop.f32.mrb[0].mxu0
      %1054 = vmatprep.mubr.f32.mxu0 0.0
      %1055 = vmatmul.mubr.f32.gmra.mrb[0].mxu0 %v555
      %v1056 = vpop.f32.mrb[0].mxu0
      %v1057 = vadd.f32 %v473, %v1056
      %v1058 = vpop.f32.mrb[0].mxu0
      %1059 = vmatprep.mubr.f32.mxu0 0.0
      %1060 = vmatmul.mubr.f32.gmra.mrb[0].mxu0 %v558
      %v1061 = vpop.f32.mrb[0].mxu0
      %v1062 = vadd.f32 %v473, %v1061
      %v1063 = vpop.f32.mrb[0].mxu0
      %1064 = vmatprep.mubr.f32.mxu0 0.0
      %1065 = vmatmul.mubr.f32.gmra.mrb[0].mxu0 %v561
      %v1066 = vpop.f32.mrb[0].mxu0
      %v1067 = vadd.f32 %v473, %v1066
      %v1068 = vpop.f32.mrb[0].mxu0
      %1069 = vmatprep.mubr.f32.mxu0 0.0
      %1070 = vmatmul.mubr.f32.gmra.mrb[0].mxu0 %v564
      %v1071 = vpop.f32.mrb[0].mxu0
      %v1072 = vadd.f32 %v473, %v1071
      %v1073 = vpop.f32.mrb[0].mxu0
      %1074 = vmatprep.mubr.f32.mxu0 0.0
      %1075 = vmatmul.mubr.f32.gmra.mrb[0].mxu0 %v567
      %v1076 = vpop.f32.mrb[0].mxu0
      %v1077 = vadd.f32 %v473, %v1076
      %v1078 = vpop.f32.mrb[0].mxu0
      %1079 = vmatprep.mubr.f32.mxu0 0.0
      %1080 = vmatmul.mubr.f32.gmra.mrb[0].mxu0 %v570
      %v1081 = vpop.f32.mrb[0].mxu0
      %v1082 = vadd.f32 %v473, %v1081
      %v1083 = vpop.f32.mrb[0].mxu0
      %1084 = vmatprep.mubr.f32.mxu0 0.0
      %1085 = vmatmul.mubr.f32.gmra.mrb[0].mxu0 %v573
      %v1086 = vpop.f32.mrb[0].mxu0
      %v1087 = vadd.f32 %v473, %v1086
      %v1088 = vpop.f32.mrb[0].mxu0
      %1089 = vmatprep.mubr.f32.mxu0 0.0
      %1090 = vmatmul.mubr.f32.gmra.mrb[0].mxu0 %v576
      %v1091 = vpop.f32.mrb[0].mxu0
      %v1092 = vadd.f32 %v473, %v1091
      %v1093 = vpop.f32.mrb[0].mxu0
      %1094 = vmatprep.mubr.f32.mxu0 0.0
      %1095 = vmatmul.mubr.f32.gmra.mrb[0].mxu0 %v579
      %v1096 = vpop.f32.mrb[0].mxu0
      %v1097 = vadd.f32 %v473, %v1096
      %v1098 = vpop.f32.mrb[0].mxu0
      %1099 = vmatprep.mubr.f32.mxu0 0.0
      %1100 = vmatmul.mubr.f32.gmra.mrb[0].mxu0 %v582
      %v1101 = vpop.f32.mrb[0].mxu0
      %v1102 = vadd.f32 %v473, %v1101
      %v1103 = vpop.f32.mrb[0].mxu0
      %1104 = vmatprep.mubr.f32.mxu0 0.0
      %1105 = vmatmul.mubr.f32.gmra.mrb[0].mxu0 %v585
      %v1106 = vpop.f32.mrb[0].mxu0
      %v1107 = vadd.f32 %v473, %v1106
      %v1108 = vpop.f32.mrb[0].mxu0
      %1109 = vmatprep.mubr.f32.mxu0 0.0
      %1110 = vmatmul.mubr.f32.gmra.mrb[0].mxu0 %v588
      %v1111 = vpop.f32.mrb[0].mxu0
      %v1112 = vadd.f32 %v473, %v1111
      %v1113 = vpop.f32.mrb[0].mxu0
      %1114 = vmatprep.mubr.f32.mxu0 0.0
      %1115 = vmatmul.mubr.f32.gmra.mrb[0].mxu0 %v591
      %v1116 = vpop.f32.mrb[0].mxu0
      %v1117 = vadd.f32 %v473, %v1116
      %v1118 = vpop.f32.mrb[0].mxu0
      %1119 = vmatprep.mubr.f32.mxu0 0.0
      %1120 = vmatmul.mubr.f32.gmra.mrb[0].mxu0 %v594
      %v1121 = vpop.f32.mrb[0].mxu0
      %v1122 = vadd.f32 %v473, %v1121
      %v1123 = vpop.f32.mrb[0].mxu0
      %1124 = vmatprep.mubr.f32.mxu0 0.0
      %1125 = vmatmul.mubr.f32.gmra.mrb[0].mxu0 %v597
      %v1126 = vpop.f32.mrb[0].mxu0
      %v1127 = vadd.f32 %v473, %v1126
      %v1128 = vpop.f32.mrb[0].mxu0
      %1129 = vmatprep.mubr.f32.mxu0 0.0
      %1130 = vmatmul.mubr.f32.gmra.mrb[0].mxu0 %v600
      %v1131 = vpop.f32.mrb[0].mxu0
      %v1132 = vadd.f32 %v473, %v1131
      %v1133 = vpop.f32.mrb[0].mxu0
      %1134 = vmatprep.mubr.f32.mxu0 0.0
      %1135 = vmatmul.mubr.f32.gmra.mrb[0].mxu0 %v603
      %v1136 = vpop.f32.mrb[0].mxu0
      %v1137 = vadd.f32 %v473, %v1136
      %v1138 = vpop.f32.mrb[0].mxu0
      %1139 = vmatprep.mubr.f32.mxu0 0.0
      %1140 = vmatmul.mubr.f32.gmra.mrb[0].mxu0 %v606
      %v1141 = vpop.f32.mrb[0].mxu0
      %v1142 = vadd.f32 %v473, %v1141
      %v1143 = vpop.f32.mrb[0].mxu0
      %1144 = vmatprep.mubr.f32.mxu0 0.0
      %1145 = vmatmul.mubr.f32.gmra.mrb[0].mxu0 %v609
      %v1146 = vpop.f32.mrb[0].mxu0
      %v1147 = vadd.f32 %v473, %v1146
      %v1148 = vpop.f32.mrb[0].mxu0
      %1149 = vmatprep.mubr.f32.mxu0 0.0
      %1150 = vmatmul.mubr.f32.gmra.mrb[0].mxu0 %v612
      %v1151 = vpop.f32.mrb[0].mxu0
      %v1152 = vadd.f32 %v473, %v1151
      %v1153 = vpop.f32.mrb[0].mxu0
      %1154 = vmatprep.mubr.f32.mxu0 0.0
      %1155 = vmatmul.mubr.f32.gmra.mrb[0].mxu0 %v615
      %v1156 = vpop.f32.mrb[0].mxu0
      %v1157 = vadd.f32 %v473, %v1156
      %v1158 = vpop.f32.mrb[0].mxu0
      %1159 = vmatprep.mubr.f32.mxu0 0.0
      %1160 = vmatmul.mubr.f32.gmra.mrb[0].mxu0 %v618
      %v1161 = vpop.f32.mrb[0].mxu0
      %v1162 = vadd.f32 %v473, %v1161
      %v1163 = vpop.f32.mrb[0].mxu0
      %1164 = vmatprep.mubr.f32.mxu0 0.0
      %1165 = vmatmul.mubr.f32.gmra.mrb[0].mxu0 %v621
      %v1166 = vpop.f32.mrb[0].mxu0
      %v1167 = vadd.f32 %v473, %v1166
      %v1168 = vpop.f32.mrb[0].mxu0
      %1169 = vmatprep.mubr.f32.mxu0 0.0
      %1170 = vmatmul.mubr.f32.gmra.mrb[0].mxu0 %v624
      %v1171 = vpop.f32.mrb[0].mxu0
      %v1172 = vadd.f32 %v473, %v1171
      %v1173 = vpop.f32.mrb[0].mxu0
      %1174 = vmatprep.mubr.f32.mxu0 0.0
      %1175 = vmatmul.mubr.f32.gmra.mrb[0].mxu0 %v627
      %v1176 = vpop.f32.mrb[0].mxu0
      %v1177 = vadd.f32 %v473, %v1176
      %v1178 = vpop.f32.mrb[0].mxu0
      %1179 = vmatprep.mubr.f32.mxu0 0.0
      %1180 = vmatmul.mubr.f32.gmra.mrb[0].mxu0 %v630
      %v1181 = vpop.f32.mrb[0].mxu0
      %v1182 = vadd.f32 %v473, %v1181
      %v1183 = vpop.f32.mrb[0].mxu0
      %1184 = vmatprep.mubr.f32.mxu0 0.0
      %1185 = vmatmul.mubr.f32.gmra.mrb[0].mxu0 %v633
      %v1186 = vpop.f32.mrb[0].mxu0
      %v1187 = vadd.f32 %v473, %v1186
      %v1188 = vpop.f32.mrb[0].mxu0
      %1189 = vmatprep.mubr.f32.mxu0 0.0
      %1190 = vmatmul.mubr.f32.gmra.mrb[0].mxu0 %v636
      %v1191 = vpop.f32.mrb[0].mxu0
      %v1192 = vadd.f32 %v473, %v1191
      %v1193 = vpop.f32.mrb[0].mxu0
      %1194 = vmatprep.mubr.f32.mxu0 0.0
      %1195 = vmatmul.mubr.f32.gmra.mrb[0].mxu0 %v639
      %v1196 = vpop.f32.mrb[0].mxu0
      %v1197 = vadd.f32 %v473, %v1196
      %v1198 = vpop.f32.mrb[0].mxu0
      %1199 = vmatprep.mubr.f32.mxu0 0.0
      %1200 = vmatmul.mubr.f32.gmra.mrb[0].mxu0 %v642
      %v1201 = vpop.f32.mrb[0].mxu0
      %v1202 = vadd.f32 %v473, %v1201
      %v1203 = vpop.f32.mrb[0].mxu0
      %1204 = vmatprep.mubr.f32.mxu0 0.0
      %1205 = vmatmul.mubr.f32.gmra.mrb[0].mxu0 %v645
      %v1206 = vpop.f32.mrb[0].mxu0
      %v1207 = vadd.f32 %v473, %v1206
      %v1208 = vpop.f32.mrb[0].mxu0
      %1209 = vmatprep.mubr.f32.mxu0 0.0
      %1210 = vmatmul.mubr.f32.gmra.mrb[0].mxu0 %v648
      %v1211 = vpop.f32.mrb[0].mxu0
      %v1212 = vadd.f32 %v473, %v1211
      %v1213 = vpop.f32.mrb[0].mxu0
      %1214 = vmatprep.mubr.f32.mxu0 0.0
      %1215 = vmatmul.mubr.f32.gmra.mrb[0].mxu0 %v651
      %v1216 = vpop.f32.mrb[0].mxu0
      %v1217 = vadd.f32 %v473, %v1216
      %v1218 = vpop.f32.mrb[0].mxu0
      %1219 = vmatprep.mubr.f32.mxu0 0.0
      %1220 = vmatmul.mubr.f32.gmra.mrb[0].mxu0 %v654
      %v1221 = vpop.f32.mrb[0].mxu0
      %v1222 = vadd.f32 %v473, %v1221
      %v1223 = vpop.f32.mrb[0].mxu0
      %1224 = vmatprep.mubr.f32.mxu0 0.0
      %1225 = vmatmul.mubr.f32.gmra.mrb[0].mxu0 %v657
      %v1226 = vpop.f32.mrb[0].mxu0
      %v1227 = vadd.f32 %v473, %v1226
      %v1228 = vpop.f32.mrb[0].mxu0
      %1229 = vmatprep.mubr.f32.mxu0 0.0
      %1230 = vmatmul.mubr.f32.gmra.mrb[0].mxu0 %v660
      %v1231 = vpop.f32.mrb[0].mxu0
      %v1232 = vadd.f32 %v473, %v1231
      %v1233 = vpop.f32.mrb[0].mxu0
      %1234 = vmatprep.mubr.f32.mxu0 0.0
      %1235 = vmatmul.mubr.f32.gmra.mrb[0].mxu0 %v663
      %v1236 = vpop.f32.mrb[0].mxu0
      %v1237 = vadd.f32 %v473, %v1236
      %v1238 = vpop.f32.mrb[0].mxu0
      %1239 = vmatprep.mubr.f32.mxu0 0.0
      %1240 = vmatmul.mubr.f32.gmra.mrb[0].mxu0 %v666
      %v1241 = vpop.f32.mrb[0].mxu0
      %v1242 = vadd.f32 %v473, %v1241
      %v1243 = vpop.f32.mrb[0].mxu0
      %1244 = vmatprep.mubr.f32.mxu0 0.0
      %1245 = vmatmul.mubr.f32.gmra.mrb[0].mxu0 %v669
      %v1246 = vpop.f32.mrb[0].mxu0
      %v1247 = vadd.f32 %v473, %v1246
      %v1248 = vpop.f32.mrb[0].mxu0
      %1249 = vmatprep.mubr.f32.mxu0 0.0
      %1250 = vmatmul.mubr.f32.gmra.mrb[0].mxu0 %v672
      %v1251 = vpop.f32.mrb[0].mxu0
      %v1252 = vadd.f32 %v473, %v1251
      %v1253 = vpop.f32.mrb[0].mxu0
      %1254 = vmatprep.mubr.f32.mxu0 0.0
      %1255 = vmatmul.mubr.f32.gmra.mrb[0].mxu0 %v675
      %v1256 = vpop.f32.mrb[0].mxu0
      %v1257 = vadd.f32 %v473, %v1256
      %v1258 = vpop.f32.mrb[0].mxu0
      %1259 = vmatprep.mubr.f32.mxu0 0.0
      %1260 = vmatmul.mubr.f32.gmra.mrb[0].mxu0 %v678
      %v1261 = vpop.f32.mrb[0].mxu0
      %v1262 = vadd.f32 %v473, %v1261
      %v1263 = vpop.f32.mrb[0].mxu0
      %1264 = vmatprep.mubr.f32.mxu0 0.0
      %1265 = vmatmul.mubr.f32.gmra.mrb[0].mxu0 %v681
      %v1266 = vpop.f32.mrb[0].mxu0
      %v1267 = vadd.f32 %v473, %v1266
      %v1268 = vpop.f32.mrb[0].mxu0
      %1269 = vmatprep.mubr.f32.mxu0 0.0
      %1270 = vmatmul.mubr.f32.gmra.mrb[0].mxu0 %v684
      %v1271 = vpop.f32.mrb[0].mxu0
      %v1272 = vadd.f32 %v473, %v1271
      %v1273 = vpop.f32.mrb[0].mxu0
      %1274 = vmatprep.mubr.f32.mxu0 0.0
      %1275 = vmatmul.mubr.f32.gmra.mrb[0].mxu0 %v687
      %v1276 = vpop.f32.mrb[0].mxu0
      %v1277 = vadd.f32 %v473, %v1276
      %v1278 = vpop.f32.mrb[0].mxu0
      %1279 = vmatprep.mubr.f32.mxu0 0.0
      %1280 = vmatmul.mubr.f32.gmra.mrb[0].mxu0 %v690
      %v1281 = vpop.f32.mrb[0].mxu0
      %v1282 = vadd.f32 %v473, %v1281
      %v1283 = vpop.f32.mrb[0].mxu0
      %1284 = vmatprep.mubr.f32.mxu0 0.0
      %1285 = vmatmul.mubr.f32.gmra.mrb[0].mxu0 %v693
      %v1286 = vpop.f32.mrb[0].mxu0
      %v1287 = vadd.f32 %v473, %v1286
      %v1288 = vpop.f32.mrb[0].mxu0
      %1289 = vmatprep.mubr.f32.mxu0 0.0
      %1290 = vmatmul.mubr.f32.gmra.mrb[0].mxu0 %v696
      %v1291 = vpop.f32.mrb[0].mxu0
      %v1292 = vadd.f32 %v473, %v1291
      %v1293 = vpop.f32.mrb[0].mxu0
      %1294 = vmatprep.mubr.f32.mxu0 0.0
      %1295 = vmatmul.mubr.f32.gmra.mrb[0].mxu0 %v699
      %v1296 = vpop.f32.mrb[0].mxu0
      %v1297 = vadd.f32 %v473, %v1296
      %v1298 = vpop.f32.mrb[0].mxu0
      %1299 = vmatprep.mubr.f32.mxu0 0.0
      %1300 = vmatmul.mubr.f32.gmra.mrb[0].mxu0 %v702
      %v1301 = vpop.f32.mrb[0].mxu0
      %v1302 = vadd.f32 %v473, %v1301
      %v1303 = vpop.f32.mrb[0].mxu0
      %1304 = vmatprep.mubr.f32.mxu0 0.0
      %1305 = vmatmul.mubr.f32.gmra.mrb[0].mxu0 %v705
      %v1306 = vpop.f32.mrb[0].mxu0
      %v1307 = vadd.f32 %v473, %v1306
      %v1308 = vpop.f32.mrb[0].mxu0
      %1309 = vmatprep.mubr.f32.mxu0 0.0
      %1310 = vmatmul.mubr.f32.gmra.mrb[0].mxu0 %v708
      %v1311 = vpop.f32.mrb[0].mxu0
      %v1312 = vadd.f32 %v473, %v1311
      %v1313 = vpop.f32.mrb[0].mxu0
      %1314 = vmatprep.mubr.f32.mxu0 0.0
      %1315 = vmatmul.mubr.f32.gmra.mrb[0].mxu0 %v711
      %v1316 = vpop.f32.mrb[0].mxu0
      %v1317 = vadd.f32 %v473, %v1316
      %v1318 = vpop.f32.mrb[0].mxu0
      %1319 = vmatprep.mubr.f32.mxu0 0.0
      %1320 = vmatmul.mubr.f32.gmra.mrb[0].mxu0 %v714
      %v1321 = vpop.f32.mrb[0].mxu0
      %v1322 = vadd.f32 %v473, %v1321
      %v1323 = vpop.f32.mrb[0].mxu0
      %1324 = vmatprep.mubr.f32.mxu0 0.0
      %1325 = vmatmul.mubr.f32.gmra.mrb[0].mxu0 %v717
      %v1326 = vpop.f32.mrb[0].mxu0
      %v1327 = vadd.f32 %v473, %v1326
      %v1328 = vpop.f32.mrb[0].mxu0
      %1329 = vmatprep.mubr.f32.mxu0 0.0
      %1330 = vmatmul.mubr.f32.gmra.mrb[0].mxu0 %v720
      %v1331 = vpop.f32.mrb[0].mxu0
      %v1332 = vadd.f32 %v473, %v1331
      %v1333 = vpop.f32.mrb[0].mxu0
      %1334 = vmatprep.mubr.f32.mxu0 0.0
      %1335 = vmatmul.mubr.f32.gmra.mrb[0].mxu0 %v723
      %v1336 = vpop.f32.mrb[0].mxu0
      %v1337 = vadd.f32 %v473, %v1336
      %v1338 = vpop.f32.mrb[0].mxu0
      %1339 = vmatprep.mubr.f32.mxu0 0.0
      %1340 = vmatmul.mubr.f32.gmra.mrb[0].mxu0 %v726
      %v1341 = vpop.f32.mrb[0].mxu0
      %v1342 = vadd.f32 %v473, %v1341
      %v1343 = vpop.f32.mrb[0].mxu0
      %1344 = vmatprep.mubr.f32.mxu0 0.0
      %1345 = vmatmul.mubr.f32.gmra.mrb[0].mxu0 %v729
      %v1346 = vpop.f32.mrb[0].mxu0
      %v1347 = vadd.f32 %v473, %v1346
      %v1348 = vpop.f32.mrb[0].mxu0
      %1349 = vmatprep.mubr.f32.mxu0 0.0
      %1350 = vmatmul.mubr.f32.gmra.mrb[0].mxu0 %v732
      %v1351 = vpop.f32.mrb[0].mxu0
      %v1352 = vadd.f32 %v473, %v1351
      %v1353 = vpop.f32.mrb[0].mxu0
      %1354 = vmatprep.mubr.f32.mxu0 0.0
      %1355 = vmatmul.mubr.f32.gmra.mrb[0].mxu0 %v735
      %v1356 = vpop.f32.mrb[0].mxu0
      %v1357 = vadd.f32 %v473, %v1356
      %v1358 = vpop.f32.mrb[0].mxu0
      %1359 = vmatprep.mubr.f32.mxu0 0.0
      %1360 = vmatmul.mubr.f32.gmra.mrb[0].mxu0 %v738
      %v1361 = vpop.f32.mrb[0].mxu0
      %v1362 = vadd.f32 %v473, %v1361
      %v1363 = vpop.f32.mrb[0].mxu0
      %1364 = vmatprep.mubr.f32.mxu0 0.0
      %1365 = vmatmul.mubr.f32.gmra.mrb[0].mxu0 %v741
      %v1366 = vpop.f32.mrb[0].mxu0
      %v1367 = vadd.f32 %v473, %v1366
      %v1368 = vpop.f32.mrb[0].mxu0
      %1369 = vmatprep.mubr.f32.mxu0 0.0
      %1370 = vmatmul.mubr.f32.gmra.mrb[0].mxu0 %v744
      %v1371 = vpop.f32.mrb[0].mxu0
      %v1372 = vadd.f32 %v473, %v1371
      %v1373 = vpop.f32.mrb[0].mxu0
      %1374 = vmatprep.mubr.f32.mxu0 0.0
      %1375 = vmatmul.mubr.f32.gmra.mrb[0].mxu0 %v747
      %v1376 = vpop.f32.mrb[0].mxu0
      %v1377 = vadd.f32 %v473, %v1376
      %v1378 = vpop.f32.mrb[0].mxu0
      %1379 = vmatprep.mubr.f32.mxu0 0.0
      %1380 = vmatmul.mubr.f32.gmra.mrb[0].mxu0 %v750
      %v1381 = vpop.f32.mrb[0].mxu0
      %v1382 = vadd.f32 %v473, %v1381
      %v1383 = vpop.f32.mrb[0].mxu0
      %1384 = vmatprep.mubr.f32.mxu0 0.0
      %1385 = vmatmul.mubr.f32.gmra.mrb[0].mxu0 %v753
      %v1386 = vpop.f32.mrb[0].mxu0
      %v1387 = vadd.f32 %v473, %v1386
      %v1388 = vpop.f32.mrb[0].mxu0
      %1389 = vmatprep.mubr.f32.mxu0 0.0
      %1390 = vmatmul.mubr.f32.gmra.mrb[0].mxu0 %v756
      %v1391 = vpop.f32.mrb[0].mxu0
      %v1392 = vadd.f32 %v473, %v1391
      %v1393 = vpop.f32.mrb[0].mxu0
      %1394 = vmatprep.mubr.f32.mxu0 0.0
      %1395 = vmatmul.mubr.f32.gmra.mrb[0].mxu0 %v759
      %v1396 = vpop.f32.mrb[0].mxu0
      %v1397 = vadd.f32 %v473, %v1396
      %v1398 = vpop.f32.mrb[0].mxu0
      %1399 = vmatprep.mubr.f32.mxu0 0.0
      %1400 = vmatmul.mubr.f32.gmra.mrb[0].mxu0 %v762
      %v1401 = vpop.f32.mrb[0].mxu0
      %v1402 = vadd.f32 %v473, %v1401
      %v1403 = vpop.f32.mrb[0].mxu0
      %1404 = vmatprep.mubr.f32.mxu0 0.0
      %1405 = vmatmul.mubr.f32.gmra.mrb[0].mxu0 %v765
      %v1406 = vpop.f32.mrb[0].mxu0
      %v1407 = vadd.f32 %v473, %v1406
      %v1408 = vpop.f32.mrb[0].mxu0
      %1409 = vmatprep.mubr.f32.mxu0 0.0
      %1410 = vmatmul.mubr.f32.gmra.mrb[0].mxu0 %v768
      %v1411 = vpop.f32.mrb[0].mxu0
      %v1412 = vadd.f32 %v473, %v1411
      %v1413 = vpop.f32.mrb[0].mxu0
      %1414 = vmatprep.mubr.f32.mxu0 0.0
      %1415 = vmatmul.mubr.f32.gmra.mrb[0].mxu0 %v771
      %v1416 = vpop.f32.mrb[0].mxu0
      %v1417 = vadd.f32 %v473, %v1416
      %v1418 = vpop.f32.mrb[0].mxu0
      %1419 = vmatprep.mubr.f32.mxu0 0.0
      %1420 = vmatmul.mubr.f32.gmra.mrb[0].mxu0 %v774
      %v1421 = vpop.f32.mrb[0].mxu0
      %v1422 = vadd.f32 %v473, %v1421
      %v1423 = vpop.f32.mrb[0].mxu0
      %1424 = vmatprep.mubr.f32.mxu0 0.0
      %1425 = vmatmul.mubr.f32.gmra.mrb[0].mxu0 %v777
      %v1426 = vpop.f32.mrb[0].mxu0
      %v1427 = vadd.f32 %v473, %v1426
      %v1428 = vpop.f32.mrb[0].mxu0
      %1429 = vmatprep.mubr.f32.mxu0 0.0
      %1430 = vmatmul.mubr.f32.gmra.mrb[0].mxu0 %v780
      %v1431 = vpop.f32.mrb[0].mxu0
      %v1432 = vadd.f32 %v473, %v1431
      %v1433 = vpop.f32.mrb[0].mxu0
      %1434 = vmatprep.mubr.f32.mxu0 0.0
      %1435 = vmatmul.mubr.f32.gmra.mrb[0].mxu0 %v783
      %v1436 = vpop.f32.mrb[0].mxu0
      %v1437 = vadd.f32 %v473, %v1436
      %v1438 = vpop.f32.mrb[0].mxu0
      %1439 = vmatprep.mubr.f32.mxu0 0.0
      %1440 = vmatmul.mubr.f32.gmra.mrb[0].mxu0 %v786
      %v1441 = vpop.f32.mrb[0].mxu0
      %v1442 = vadd.f32 %v473, %v1441
      %v1443 = vpop.f32.mrb[0].mxu0
      %1444 = vmatprep.mubr.f32.mxu0 0.0
      %1445 = vmatmul.mubr.f32.gmra.mrb[0].mxu0 %v789
      %v1446 = vpop.f32.mrb[0].mxu0
      %v1447 = vadd.f32 %v473, %v1446
      %v1448 = vpop.f32.mrb[0].mxu0
      %1449 = vmatprep.mubr.f32.mxu0 0.0
      %1450 = vmatmul.mubr.f32.gmra.mrb[0].mxu0 %v792
      %v1451 = vpop.f32.mrb[0].mxu0
      %v1452 = vadd.f32 %v473, %v1451
      %v1453 = vpop.f32.mrb[0].mxu0
      %1454 = vmatprep.mubr.f32.mxu0 0.0
      %1455 = vmatmul.mubr.f32.gmra.mrb[0].mxu0 %v795
      %v1456 = vpop.f32.mrb[0].mxu0
      %v1457 = vadd.f32 %v473, %v1456
      %v1458 = vpop.f32.mrb[0].mxu0
      %1459 = vmatprep.mubr.f32.mxu0 0.0
      %1460 = vmatmul.mubr.f32.gmra.mrb[0].mxu0 %v798
      %v1461 = vpop.f32.mrb[0].mxu0
      %v1462 = vadd.f32 %v473, %v1461
      %v1463 = vpop.f32.mrb[0].mxu0
      %1464 = vmatprep.mubr.f32.mxu0 0.0
      %1465 = vmatmul.mubr.f32.gmra.mrb[0].mxu0 %v801
      %v1466 = vpop.f32.mrb[0].mxu0
      %v1467 = vadd.f32 %v473, %v1466
      %v1468 = vpop.f32.mrb[0].mxu0
      %1469 = vmatprep.mubr.f32.mxu0 0.0
      %1470 = vmatmul.mubr.f32.gmra.mrb[0].mxu0 %v804
      %v1471 = vpop.f32.mrb[0].mxu0
      %v1472 = vadd.f32 %v473, %v1471
      %v1473 = vpop.f32.mrb[0].mxu0
      %1474 = vmatprep.mubr.f32.mxu0 0.0
      %1475 = vmatmul.mubr.f32.gmra.mrb[0].mxu0 %v807
      %v1476 = vpop.f32.mrb[0].mxu0
      %v1477 = vadd.f32 %v473, %v1476
      %v1478 = vpop.f32.mrb[0].mxu0
      %1479 = vmatprep.mubr.f32.mxu0 0.0
      %1480 = vmatmul.mubr.f32.gmra.mrb[0].mxu0 %v810
      %v1481 = vpop.f32.mrb[0].mxu0
      %v1482 = vadd.f32 %v473, %v1481
      %v1483 = vpop.f32.mrb[0].mxu0
      %1484 = vmatprep.mubr.f32.mxu0 0.0
      %1485 = vmatmul.mubr.f32.gmra.mrb[0].mxu0 %v813
      %v1486 = vpop.f32.mrb[0].mxu0
      %v1487 = vadd.f32 %v473, %v1486
      %v1488 = vpop.f32.mrb[0].mxu0
      %1489 = vmatprep.mubr.f32.mxu0 0.0
      %1490 = vmatmul.mubr.f32.gmra.mrb[0].mxu0 %v816
      %v1491 = vpop.f32.mrb[0].mxu0
      %v1492 = vadd.f32 %v473, %v1491
      %v1493 = vpop.f32.mrb[0].mxu0
      %1494 = vmatprep.mubr.f32.mxu0 0.0
      %1495 = vmatmul.mubr.f32.gmra.mrb[0].mxu0 %v819
      %v1496 = vpop.f32.mrb[0].mxu0
      %v1497 = vadd.f32 %v473, %v1496
      %v1498 = vpop.f32.mrb[0].mxu0
      %1499 = vmatprep.mubr.f32.mxu0 0.0
      %1500 = vmatmul.mubr.f32.gmra.mrb[0].mxu0 %v822
      %v1501 = vpop.f32.mrb[0].mxu0
      %v1502 = vadd.f32 %v473, %v1501
      %v1503 = vpop.f32.mrb[0].mxu0
      %1504 = vmatprep.mubr.f32.mxu0 0.0
      %1505 = vmatmul.mubr.f32.gmra.mrb[0].mxu0 %v825
      %v1506 = vpop.f32.mrb[0].mxu0
      %v1507 = vadd.f32 %v473, %v1506
      %v1508 = vpop.f32.mrb[0].mxu0
      %1509 = vmatprep.mubr.f32.mxu0 0.0
      %1510 = vmatmul.mubr.f32.gmra.mrb[0].mxu0 %v828
      %v1511 = vpop.f32.mrb[0].mxu0
      %v1512 = vadd.f32 %v473, %v1511
      %v1513 = vpop.f32.mrb[0].mxu0
      %1514 = vmatprep.mubr.f32.mxu0 0.0
      %1515 = vmatmul.mubr.f32.gmra.mrb[0].mxu0 %v831
      %v1516 = vpop.f32.mrb[0].mxu0
      %v1517 = vadd.f32 %v473, %v1516
      %v1518 = vpop.f32.mrb[0].mxu0
      %1519 = vmatprep.mubr.f32.mxu0 0.0
      %1520 = vmatmul.mubr.f32.gmra.mrb[0].mxu0 %v834
      %v1521 = vpop.f32.mrb[0].mxu0
      %v1522 = vadd.f32 %v473, %v1521
      %v1523 = vpop.f32.mrb[0].mxu0
      %1524 = vmatprep.mubr.f32.mxu0 0.0
      %1525 = vmatmul.mubr.f32.gmra.mrb[0].mxu0 %v837
      %v1526 = vpop.f32.mrb[0].mxu0
      %v1527 = vadd.f32 %v473, %v1526
      %v1528 = vpop.f32.mrb[0].mxu0
      %1529 = vmatprep.mubr.f32.mxu0 0.0
      %1530 = vmatmul.mubr.f32.gmra.mrb[0].mxu0 %v840
      %v1531 = vpop.f32.mrb[0].mxu0
      %v1532 = vadd.f32 %v473, %v1531
      %v1533 = vpop.f32.mrb[0].mxu0
      %1534 = vmatprep.mubr.f32.mxu0 0.0
      %1535 = vmatmul.mubr.f32.gmra.mrb[0].mxu0 %v843
      %v1536 = vpop.f32.mrb[0].mxu0
      %v1537 = vadd.f32 %v473, %v1536
      %v1538 = vpop.f32.mrb[0].mxu0
      %1539 = vmatprep.mubr.f32.mxu0 0.0
      %1540 = vmatmul.mubr.f32.gmra.mrb[0].mxu0 %v846
      %v1541 = vpop.f32.mrb[0].mxu0
      %v1542 = vadd.f32 %v473, %v1541
      %v1543 = vpop.f32.mrb[0].mxu0
      %1544 = vmatprep.mubr.f32.mxu0 0.0
      %1545 = vmatmul.mubr.f32.gmra.mrb[0].mxu0 %v849
      %v1546 = vpop.f32.mrb[0].mxu0
      %v1547 = vadd.f32 %v473, %v1546
      %v1548 = vpop.f32.mrb[0].mxu0
      %1549 = vmatprep.mubr.f32.mxu0 0.0
      %1550 = vmatmul.mubr.f32.gmra.mrb[0].mxu0 %v852
      %v1551 = vpop.f32.mrb[0].mxu0
      %v1552 = vadd.f32 %v473, %v1551
      %v1553 = vpop.f32.mrb[0].mxu0
      %1554 = vmatprep.mubr.f32.mxu0 0.0
      %1555 = vmatmul.mubr.f32.gmra.mrb[0].mxu0 %v855
      %v1556 = vpop.f32.mrb[0].mxu0
      %v1557 = vadd.f32 %v473, %v1556
      %v1558 = vpop.f32.mrb[0].mxu0
      %1559 = vmatprep.mubr.f32.mxu0 0.0
      %1560 = vmatmul.mubr.f32.gmra.mrb[0].mxu0 %v858
      %v1561 = vpop.f32.mrb[0].mxu0
      %v1562 = vadd.f32 %v473, %v1561
      %v1563 = vpop.f32.mrb[0].mxu0
      %1564 = vdwg.mxu0
      %v1565 = vmax.f32 %v927, 0.0
      %v1566 = vmax.f32 %v932, 0.0
      %v1567 = vmax.f32 %v937, 0.0
      %v1568 = vmax.f32 %v942, 0.0
      %v1569 = vmax.f32 %v947, 0.0
      %v1570 = vmax.f32 %v952, 0.0
      %v1571 = vmax.f32 %v957, 0.0
      %v1572 = vmax.f32 %v962, 0.0
      %v1573 = vmax.f32 %v967, 0.0
      %v1574 = vmax.f32 %v972, 0.0
      %v1575 = vmax.f32 %v977, 0.0
      %v1576 = vmax.f32 %v982, 0.0
      %v1577 = vmax.f32 %v987, 0.0
      %v1578 = vmax.f32 %v992, 0.0
      %v1579 = vmax.f32 %v997, 0.0
      %v1580 = vmax.f32 %v1002, 0.0
      %v1581 = vmax.f32 %v1007, 0.0
      %v1582 = vmax.f32 %v1012, 0.0
      %v1583 = vmax.f32 %v1017, 0.0
      %v1584 = vmax.f32 %v1022, 0.0
      %v1585 = vmax.f32 %v1027, 0.0
      %v1586 = vmax.f32 %v1032, 0.0
      %v1587 = vmax.f32 %v1037, 0.0
      %v1588 = vmax.f32 %v1042, 0.0
      %v1589 = vmax.f32 %v1047, 0.0
      %v1590 = vmax.f32 %v1052, 0.0
      %v1591 = vmax.f32 %v1057, 0.0
      %v1592 = vmax.f32 %v1062, 0.0
      %v1593 = vmax.f32 %v1067, 0.0
      %v1594 = vmax.f32 %v1072, 0.0
      %v1595 = vmax.f32 %v1077, 0.0
      %v1596 = vmax.f32 %v1082, 0.0
      %v1597 = vmax.f32 %v1087, 0.0
      %v1598 = vmax.f32 %v1092, 0.0
      %v1599 = vmax.f32 %v1097, 0.0
      %v1600 = vmax.f32 %v1102, 0.0
      %v1601 = vmax.f32 %v1107, 0.0
      %v1602 = vmax.f32 %v1112, 0.0
      %v1603 = vmax.f32 %v1117, 0.0
      %v1604 = vmax.f32 %v1122, 0.0
      %v1605 = vmax.f32 %v1127, 0.0
      %v1606 = vmax.f32 %v1132, 0.0
      %v1607 = vmax.f32 %v1137, 0.0
      %v1608 = vmax.f32 %v1142, 0.0
      %v1609 = vmax.f32 %v1147, 0.0
      %v1610 = vmax.f32 %v1152, 0.0
      %v1611 = vmax.f32 %v1157, 0.0
      %v1612 = vmax.f32 %v1162, 0.0
      %v1613 = vmax.f32 %v1167, 0.0
      %v1614 = vmax.f32 %v1172, 0.0
      %v1615 = vmax.f32 %v1177, 0.0
      %v1616 = vmax.f32 %v1182, 0.0
      %v1617 = vmax.f32 %v1187, 0.0
      %v1618 = vmax.f32 %v1192, 0.0
      %v1619 = vmax.f32 %v1197, 0.0
      %v1620 = vmax.f32 %v1202, 0.0
      %v1621 = vmax.f32 %v1207, 0.0
      %v1622 = vmax.f32 %v1212, 0.0
      %v1623 = vmax.f32 %v1217, 0.0
      %v1624 = vmax.f32 %v1222, 0.0
      %v1625 = vmax.f32 %v1227, 0.0
      %v1626 = vmax.f32 %v1232, 0.0
      %v1627 = vmax.f32 %v1237, 0.0
      %v1628 = vmax.f32 %v1242, 0.0
      %v1629 = vmax.f32 %v1247, 0.0
      %v1630 = vmax.f32 %v1252, 0.0
      %v1631 = vmax.f32 %v1257, 0.0
      %v1632 = vmax.f32 %v1262, 0.0
      %v1633 = vmax.f32 %v1267, 0.0
      %v1634 = vmax.f32 %v1272, 0.0
      %v1635 = vmax.f32 %v1277, 0.0
      %v1636 = vmax.f32 %v1282, 0.0
      %v1637 = vmax.f32 %v1287, 0.0
      %v1638 = vmax.f32 %v1292, 0.0
      %v1639 = vmax.f32 %v1297, 0.0
      %v1640 = vmax.f32 %v1302, 0.0
      %v1641 = vmax.f32 %v1307, 0.0
      %v1642 = vmax.f32 %v1312, 0.0
      %v1643 = vmax.f32 %v1317, 0.0
      %v1644 = vmax.f32 %v1322, 0.0
      %v1645 = vmax.f32 %v1327, 0.0
      %v1646 = vmax.f32 %v1332, 0.0
      %v1647 = vmax.f32 %v1337, 0.0
      %v1648 = vmax.f32 %v1342, 0.0
      %v1649 = vmax.f32 %v1347, 0.0
      %v1650 = vmax.f32 %v1352, 0.0
      %v1651 = vmax.f32 %v1357, 0.0
      %v1652 = vmax.f32 %v1362, 0.0
      %v1653 = vmax.f32 %v1367, 0.0
      %v1654 = vmax.f32 %v1372, 0.0
      %v1655 = vmax.f32 %v1377, 0.0
      %v1656 = vmax.f32 %v1382, 0.0
      %v1657 = vmax.f32 %v1387, 0.0
      %v1658 = vmax.f32 %v1392, 0.0
      %v1659 = vmax.f32 %v1397, 0.0
      %v1660 = vmax.f32 %v1402, 0.0
      %v1661 = vmax.f32 %v1407, 0.0
      %v1662 = vmax.f32 %v1412, 0.0
      %v1663 = vmax.f32 %v1417, 0.0
      %v1664 = vmax.f32 %v1422, 0.0
      %v1665 = vmax.f32 %v1427, 0.0
      %v1666 = vmax.f32 %v1432, 0.0
      %v1667 = vmax.f32 %v1437, 0.0
      %v1668 = vmax.f32 %v1442, 0.0
      %v1669 = vmax.f32 %v1447, 0.0
      %v1670 = vmax.f32 %v1452, 0.0
      %v1671 = vmax.f32 %v1457, 0.0
      %v1672 = vmax.f32 %v1462, 0.0
      %v1673 = vmax.f32 %v1467, 0.0
      %v1674 = vmax.f32 %v1472, 0.0
      %v1675 = vmax.f32 %v1477, 0.0
      %v1676 = vmax.f32 %v1482, 0.0
      %v1677 = vmax.f32 %v1487, 0.0
      %v1678 = vmax.f32 %v1492, 0.0
      %v1679 = vmax.f32 %v1497, 0.0
      %v1680 = vmax.f32 %v1502, 0.0
      %v1681 = vmax.f32 %v1507, 0.0
      %v1682 = vmax.f32 %v1512, 0.0
      %v1683 = vmax.f32 %v1517, 0.0
      %v1684 = vmax.f32 %v1522, 0.0
      %v1685 = vmax.f32 %v1527, 0.0
      %v1686 = vmax.f32 %v1532, 0.0
      %v1687 = vmax.f32 %v1537, 0.0
      %v1688 = vmax.f32 %v1542, 0.0
      %v1689 = vmax.f32 %v1547, 0.0
      %v1690 = vmax.f32 %v1552, 0.0
      %v1691 = vmax.f32 %v1557, 0.0
      %v1692 = vmax.f32 %v1562, 0.0
      %v1693 = vld [vmem:[%s3] sm:$0xff]
      %v1694 = vld [vmem:[%s3 + $0x8] sm:$0xff]
      %v1695 = vld [vmem:[%s3 + $0x10] sm:$0xff]
      %v1696 = vld [vmem:[%s3 + $0x18] sm:$0xff]
      %v1697 = vld [vmem:[%s4] sm:$0x1]
      %v1699 = vlaneseq
      %v1700 = vshrl.u32 %v1699, 7
      %v1701 = vsub.s32 0, %v1700
      %v1702 = vrot.slane %v1697, %v1701
      %v1705 = vsel %vm475, %v1565, 0
      %v1708 = vsel %vm475, %v1566, 0
      %v1711 = vsel %vm475, %v1567, 0
      %v1714 = vsel %vm475, %v1568, 0
      %v1717 = vsel %vm475, %v1569, 0
      %v1720 = vsel %vm475, %v1570, 0
      %v1723 = vsel %vm475, %v1571, 0
      %v1726 = vsel %vm475, %v1572, 0
      %v1729 = vsel %vm475, %v1573, 0
      %v1732 = vsel %vm475, %v1574, 0
      %v1735 = vsel %vm475, %v1575, 0
      %v1738 = vsel %vm475, %v1576, 0
      %v1741 = vsel %vm475, %v1577, 0
      %v1744 = vsel %vm475, %v1578, 0
      %v1747 = vsel %vm475, %v1579, 0
      %v1750 = vsel %vm475, %v1580, 0
      %v1753 = vsel %vm475, %v1581, 0
      %v1756 = vsel %vm475, %v1582, 0
      %v1759 = vsel %vm475, %v1583, 0
      %v1762 = vsel %vm475, %v1584, 0
      %v1765 = vsel %vm475, %v1585, 0
      %v1768 = vsel %vm475, %v1586, 0
      %v1771 = vsel %vm475, %v1587, 0
      %v1774 = vsel %vm475, %v1588, 0
      %v1777 = vsel %vm475, %v1589, 0
      %v1780 = vsel %vm475, %v1590, 0
      %v1783 = vsel %vm475, %v1591, 0
      %v1786 = vsel %vm475, %v1592, 0
      %v1789 = vsel %vm475, %v1593, 0
      %v1792 = vsel %vm475, %v1594, 0
      %v1795 = vsel %vm475, %v1595, 0
      %v1798 = vsel %vm475, %v1596, 0
      %v1801 = vsel %vm475, %v1597, 0
      %v1804 = vsel %vm475, %v1598, 0
      %v1807 = vsel %vm475, %v1599, 0
      %v1810 = vsel %vm475, %v1600, 0
      %v1813 = vsel %vm475, %v1601, 0
      %v1816 = vsel %vm475, %v1602, 0
      %v1819 = vsel %vm475, %v1603, 0
      %v1822 = vsel %vm475, %v1604, 0
      %v1825 = vsel %vm475, %v1605, 0
      %v1828 = vsel %vm475, %v1606, 0
      %v1831 = vsel %vm475, %v1607, 0
      %v1834 = vsel %vm475, %v1608, 0
      %v1837 = vsel %vm475, %v1609, 0
      %v1840 = vsel %vm475, %v1610, 0
      %v1843 = vsel %vm475, %v1611, 0
      %v1846 = vsel %vm475, %v1612, 0
      %v1849 = vsel %vm475, %v1613, 0
      %v1852 = vsel %vm475, %v1614, 0
      %v1855 = vsel %vm475, %v1615, 0
      %v1858 = vsel %vm475, %v1616, 0
      %v1861 = vsel %vm475, %v1617, 0
      %v1864 = vsel %vm475, %v1618, 0
      %v1867 = vsel %vm475, %v1619, 0
      %v1870 = vsel %vm475, %v1620, 0
      %v1873 = vsel %vm475, %v1621, 0
      %v1876 = vsel %vm475, %v1622, 0
      %v1879 = vsel %vm475, %v1623, 0
      %v1882 = vsel %vm475, %v1624, 0
      %v1885 = vsel %vm475, %v1625, 0
      %v1888 = vsel %vm475, %v1626, 0
      %v1891 = vsel %vm475, %v1627, 0
      %v1894 = vsel %vm475, %v1628, 0
      %v1897 = vsel %vm475, %v1629, 0
      %v1900 = vsel %vm475, %v1630, 0
      %v1903 = vsel %vm475, %v1631, 0
      %v1906 = vsel %vm475, %v1632, 0
      %v1909 = vsel %vm475, %v1633, 0
      %v1912 = vsel %vm475, %v1634, 0
      %v1915 = vsel %vm475, %v1635, 0
      %v1918 = vsel %vm475, %v1636, 0
      %v1921 = vsel %vm475, %v1637, 0
      %v1924 = vsel %vm475, %v1638, 0
      %v1927 = vsel %vm475, %v1639, 0
      %v1930 = vsel %vm475, %v1640, 0
      %v1933 = vsel %vm475, %v1641, 0
      %v1936 = vsel %vm475, %v1642, 0
      %v1939 = vsel %vm475, %v1643, 0
      %v1942 = vsel %vm475, %v1644, 0
      %v1945 = vsel %vm475, %v1645, 0
      %v1948 = vsel %vm475, %v1646, 0
      %v1951 = vsel %vm475, %v1647, 0
      %v1954 = vsel %vm475, %v1648, 0
      %v1957 = vsel %vm475, %v1649, 0
      %v1960 = vsel %vm475, %v1650, 0
      %v1963 = vsel %vm475, %v1651, 0
      %v1966 = vsel %vm475, %v1652, 0
      %v1969 = vsel %vm475, %v1653, 0
      %v1972 = vsel %vm475, %v1654, 0
      %v1975 = vsel %vm475, %v1655, 0
      %v1978 = vsel %vm475, %v1656, 0
      %v1981 = vsel %vm475, %v1657, 0
      %v1984 = vsel %vm475, %v1658, 0
      %v1987 = vsel %vm475, %v1659, 0
      %v1990 = vsel %vm475, %v1660, 0
      %v1993 = vsel %vm475, %v1661, 0
      %v1996 = vsel %vm475, %v1662, 0
      %v1999 = vsel %vm475, %v1663, 0
      %v2002 = vsel %vm475, %v1664, 0
      %v2005 = vsel %vm475, %v1665, 0
      %v2008 = vsel %vm475, %v1666, 0
      %v2011 = vsel %vm475, %v1667, 0
      %v2014 = vsel %vm475, %v1668, 0
      %v2017 = vsel %vm475, %v1669, 0
      %v2020 = vsel %vm475, %v1670, 0
      %v2023 = vsel %vm475, %v1671, 0
      %v2026 = vsel %vm475, %v1672, 0
      %v2029 = vsel %vm475, %v1673, 0
      %v2032 = vsel %vm475, %v1674, 0
      %v2035 = vsel %vm475, %v1675, 0
      %v2038 = vsel %vm475, %v1676, 0
      %v2041 = vsel %vm475, %v1677, 0
      %v2044 = vsel %vm475, %v1678, 0
      %v2047 = vsel %vm475, %v1679, 0
      %v2050 = vsel %vm475, %v1680, 0
      %v2053 = vsel %vm475, %v1681, 0
      %v2056 = vsel %vm475, %v1682, 0
      %v2059 = vsel %vm475, %v1683, 0
      %v2062 = vsel %vm475, %v1684, 0
      %v2065 = vsel %vm475, %v1685, 0
      %v2068 = vsel %vm475, %v1686, 0
      %v2071 = vsel %vm475, %v1687, 0
      %v2074 = vsel %vm475, %v1688, 0
      %v2077 = vsel %vm475, %v1689, 0
      %v2080 = vsel %vm475, %v1690, 0
      %v2083 = vsel %vm475, %v1691, 0
      %v2086 = vsel %vm475, %v1692, 0
      %2088 = vmatprep.subr.mxu0 0.0
      %2089 = vmatpush1.msra.mxu0 %v1693
      %2090 = vmatprep.subr.mxu0 0.0
      %2091 = vmatpush1.msra.mxu0 %v1694
      %2092 = vmatprep.subr.mxu0 0.0
      %2093 = vmatpush1.msra.mxu0 %v1695
      %2094 = vmatprep.subr.mxu0 0.0
      %2095 = vmatpush1.msra.mxu0 %v1696
      %2096 = vmatprep.subr.mxu0 0.0
      %2097 = vmatpush1.msra.mxu0 0.0
      %2098 = vmatprep.subr.mxu0 0.0
      %2099 = vmatpush1.msra.mxu0 0.0
      %2100 = vmatprep.subr.mxu0 0.0
      %2101 = vmatpush1.msra.mxu0 0.0
      %2102 = vmatprep.subr.mxu0 0.0
      %2103 = vmatpush1.msra.mxu0 0.0
      %2104 = vmatprep.subr.mxu0 0.0
      %2105 = vmatpush1.msra.mxu0 0.0
      %2106 = vmatprep.subr.mxu0 0.0
      %2107 = vmatpush1.msra.mxu0 0.0
      %2108 = vmatprep.subr.mxu0 0.0
      %2109 = vmatpush1.msra.mxu0 0.0
      %2110 = vmatprep.subr.mxu0 0.0
      %2111 = vmatpush1.msra.mxu0 0.0
      %2112 = vmatprep.subr.mxu0 0.0
      %2113 = vmatpush1.msra.mxu0 0.0
      %2114 = vmatprep.subr.mxu0 0.0
      %2115 = vmatpush1.msra.mxu0 0.0
      %2116 = vmatprep.subr.mxu0 0.0
      %2117 = vmatpush1.msra.mxu0 0.0
      %2118 = vmatprep.subr.mxu0 0.0
      %2119 = vmatpush1.msra.mxu0 0.0
      %2120 = vmatprep.subr.mxu0 0.0
      %2121 = vmatpush1.msra.mxu0 0.0
      %2122 = vmatprep.subr.mxu0 0.0
      %2123 = vmatpush1.msra.mxu0 0.0
      %2124 = vmatprep.subr.mxu0 0.0
      %2125 = vmatpush1.msra.mxu0 0.0
      %2126 = vmatprep.subr.mxu0 0.0
      %2127 = vmatpush1.msra.mxu0 0.0
      %2128 = vmatprep.subr.mxu0 0.0
      %2129 = vmatpush1.msra.mxu0 0.0
      %2130 = vmatprep.subr.mxu0 0.0
      %2131 = vmatpush1.msra.mxu0 0.0
      %2132 = vmatprep.subr.mxu0 0.0
      %2133 = vmatpush1.msra.mxu0 0.0
      %2134 = vmatprep.subr.mxu0 0.0
      %2135 = vmatpush1.msra.mxu0 0.0
      %2136 = vmatprep.subr.mxu0 0.0
      %2137 = vmatpush1.msra.mxu0 0.0
      %2138 = vmatprep.subr.mxu0 0.0
      %2139 = vmatpush1.msra.mxu0 0.0
      %2140 = vmatprep.subr.mxu0 0.0
      %2141 = vmatpush1.msra.mxu0 0.0
      %2142 = vmatprep.subr.mxu0 0.0
      %2143 = vmatpush1.msra.mxu0 0.0
      %2144 = vmatprep.subr.mxu0 0.0
      %2145 = vmatpush1.msra.mxu0 0.0
      %2146 = vmatprep.subr.mxu0 0.0
      %2147 = vmatpush1.msra.mxu0 0.0
      %2148 = vmatprep.subr.mxu0 0.0
      %2149 = vmatpush1.msra.mxu0 0.0
      %2150 = vmatprep.subr.mxu0 0.0
      %2151 = vmatpush1.msra.mxu0 0.0
      %2152 = vmatprep.mubr.f32.mxu0 0.0
      %2153 = vmatmul.mubr.f32.gmra.mrb[0].mxu0 %v1705
      %v2154 = vpop.f32.mrb[0].mxu0
      %v2155 = vadd.f32 %v1702, %v2154
      %v2156 = vpop.f32.mrb[0].mxu0
      %2157 = vmatprep.mubr.f32.mxu0 0.0
      %2158 = vmatmul.mubr.f32.gmra.mrb[0].mxu0 %v1708
      %v2159 = vpop.f32.mrb[0].mxu0
      %v2160 = vadd.f32 %v1702, %v2159
      %v2161 = vpop.f32.mrb[0].mxu0
      %2162 = vmatprep.mubr.f32.mxu0 0.0
      %2163 = vmatmul.mubr.f32.gmra.mrb[0].mxu0 %v1711
      %v2164 = vpop.f32.mrb[0].mxu0
      %v2165 = vadd.f32 %v1702, %v2164
      %v2166 = vpop.f32.mrb[0].mxu0
      %2167 = vmatprep.mubr.f32.mxu0 0.0
      %2168 = vmatmul.mubr.f32.gmra.mrb[0].mxu0 %v1714
      %v2169 = vpop.f32.mrb[0].mxu0
      %v2170 = vadd.f32 %v1702, %v2169
      %v2171 = vpop.f32.mrb[0].mxu0
      %2172 = vmatprep.mubr.f32.mxu0 0.0
      %2173 = vmatmul.mubr.f32.gmra.mrb[0].mxu0 %v1717
      %v2174 = vpop.f32.mrb[0].mxu0
      %v2175 = vadd.f32 %v1702, %v2174
      %v2176 = vpop.f32.mrb[0].mxu0
      %2177 = vmatprep.mubr.f32.mxu0 0.0
      %2178 = vmatmul.mubr.f32.gmra.mrb[0].mxu0 %v1720
      %v2179 = vpop.f32.mrb[0].mxu0
      %v2180 = vadd.f32 %v1702, %v2179
      %v2181 = vpop.f32.mrb[0].mxu0
      %2182 = vmatprep.mubr.f32.mxu0 0.0
      %2183 = vmatmul.mubr.f32.gmra.mrb[0].mxu0 %v1723
      %v2184 = vpop.f32.mrb[0].mxu0
      %v2185 = vadd.f32 %v1702, %v2184
      %v2186 = vpop.f32.mrb[0].mxu0
      %2187 = vmatprep.mubr.f32.mxu0 0.0
      %2188 = vmatmul.mubr.f32.gmra.mrb[0].mxu0 %v1726
      %v2189 = vpop.f32.mrb[0].mxu0
      %v2190 = vadd.f32 %v1702, %v2189
      %v2191 = vpop.f32.mrb[0].mxu0
      %2192 = vmatprep.mubr.f32.mxu0 0.0
      %2193 = vmatmul.mubr.f32.gmra.mrb[0].mxu0 %v1729
      %v2194 = vpop.f32.mrb[0].mxu0
      %v2195 = vadd.f32 %v1702, %v2194
      %v2196 = vpop.f32.mrb[0].mxu0
      %2197 = vmatprep.mubr.f32.mxu0 0.0
      %2198 = vmatmul.mubr.f32.gmra.mrb[0].mxu0 %v1732
      %v2199 = vpop.f32.mrb[0].mxu0
      %v2200 = vadd.f32 %v1702, %v2199
      %v2201 = vpop.f32.mrb[0].mxu0
      %2202 = vmatprep.mubr.f32.mxu0 0.0
      %2203 = vmatmul.mubr.f32.gmra.mrb[0].mxu0 %v1735
      %v2204 = vpop.f32.mrb[0].mxu0
      %v2205 = vadd.f32 %v1702, %v2204
      %v2206 = vpop.f32.mrb[0].mxu0
      %2207 = vmatprep.mubr.f32.mxu0 0.0
      %2208 = vmatmul.mubr.f32.gmra.mrb[0].mxu0 %v1738
      %v2209 = vpop.f32.mrb[0].mxu0
      %v2210 = vadd.f32 %v1702, %v2209
      %v2211 = vpop.f32.mrb[0].mxu0
      %2212 = vmatprep.mubr.f32.mxu0 0.0
      %2213 = vmatmul.mubr.f32.gmra.mrb[0].mxu0 %v1741
      %v2214 = vpop.f32.mrb[0].mxu0
      %v2215 = vadd.f32 %v1702, %v2214
      %v2216 = vpop.f32.mrb[0].mxu0
      %2217 = vmatprep.mubr.f32.mxu0 0.0
      %2218 = vmatmul.mubr.f32.gmra.mrb[0].mxu0 %v1744
      %v2219 = vpop.f32.mrb[0].mxu0
      %v2220 = vadd.f32 %v1702, %v2219
      %v2221 = vpop.f32.mrb[0].mxu0
      %2222 = vmatprep.mubr.f32.mxu0 0.0
      %2223 = vmatmul.mubr.f32.gmra.mrb[0].mxu0 %v1747
      %v2224 = vpop.f32.mrb[0].mxu0
      %v2225 = vadd.f32 %v1702, %v2224
      %v2226 = vpop.f32.mrb[0].mxu0
      %2227 = vmatprep.mubr.f32.mxu0 0.0
      %2228 = vmatmul.mubr.f32.gmra.mrb[0].mxu0 %v1750
      %v2229 = vpop.f32.mrb[0].mxu0
      %v2230 = vadd.f32 %v1702, %v2229
      %v2231 = vpop.f32.mrb[0].mxu0
      %2232 = vmatprep.mubr.f32.mxu0 0.0
      %2233 = vmatmul.mubr.f32.gmra.mrb[0].mxu0 %v1753
      %v2234 = vpop.f32.mrb[0].mxu0
      %v2235 = vadd.f32 %v1702, %v2234
      %v2236 = vpop.f32.mrb[0].mxu0
      %2237 = vmatprep.mubr.f32.mxu0 0.0
      %2238 = vmatmul.mubr.f32.gmra.mrb[0].mxu0 %v1756
      %v2239 = vpop.f32.mrb[0].mxu0
      %v2240 = vadd.f32 %v1702, %v2239
      %v2241 = vpop.f32.mrb[0].mxu0
      %2242 = vmatprep.mubr.f32.mxu0 0.0
      %2243 = vmatmul.mubr.f32.gmra.mrb[0].mxu0 %v1759
      %v2244 = vpop.f32.mrb[0].mxu0
      %v2245 = vadd.f32 %v1702, %v2244
      %v2246 = vpop.f32.mrb[0].mxu0
      %2247 = vmatprep.mubr.f32.mxu0 0.0
      %2248 = vmatmul.mubr.f32.gmra.mrb[0].mxu0 %v1762
      %v2249 = vpop.f32.mrb[0].mxu0
      %v2250 = vadd.f32 %v1702, %v2249
      %v2251 = vpop.f32.mrb[0].mxu0
      %2252 = vmatprep.mubr.f32.mxu0 0.0
      %2253 = vmatmul.mubr.f32.gmra.mrb[0].mxu0 %v1765
      %v2254 = vpop.f32.mrb[0].mxu0
      %v2255 = vadd.f32 %v1702, %v2254
      %v2256 = vpop.f32.mrb[0].mxu0
      %2257 = vmatprep.mubr.f32.mxu0 0.0
      %2258 = vmatmul.mubr.f32.gmra.mrb[0].mxu0 %v1768
      %v2259 = vpop.f32.mrb[0].mxu0
      %v2260 = vadd.f32 %v1702, %v2259
      %v2261 = vpop.f32.mrb[0].mxu0
      %2262 = vmatprep.mubr.f32.mxu0 0.0
      %2263 = vmatmul.mubr.f32.gmra.mrb[0].mxu0 %v1771
      %v2264 = vpop.f32.mrb[0].mxu0
      %v2265 = vadd.f32 %v1702, %v2264
      %v2266 = vpop.f32.mrb[0].mxu0
      %2267 = vmatprep.mubr.f32.mxu0 0.0
      %2268 = vmatmul.mubr.f32.gmra.mrb[0].mxu0 %v1774
      %v2269 = vpop.f32.mrb[0].mxu0
      %v2270 = vadd.f32 %v1702, %v2269
      %v2271 = vpop.f32.mrb[0].mxu0
      %2272 = vmatprep.mubr.f32.mxu0 0.0
      %2273 = vmatmul.mubr.f32.gmra.mrb[0].mxu0 %v1777
      %v2274 = vpop.f32.mrb[0].mxu0
      %v2275 = vadd.f32 %v1702, %v2274
      %v2276 = vpop.f32.mrb[0].mxu0
      %2277 = vmatprep.mubr.f32.mxu0 0.0
      %2278 = vmatmul.mubr.f32.gmra.mrb[0].mxu0 %v1780
      %v2279 = vpop.f32.mrb[0].mxu0
      %v2280 = vadd.f32 %v1702, %v2279
      %v2281 = vpop.f32.mrb[0].mxu0
      %2282 = vmatprep.mubr.f32.mxu0 0.0
      %2283 = vmatmul.mubr.f32.gmra.mrb[0].mxu0 %v1783
      %v2284 = vpop.f32.mrb[0].mxu0
      %v2285 = vadd.f32 %v1702, %v2284
      %v2286 = vpop.f32.mrb[0].mxu0
      %2287 = vmatprep.mubr.f32.mxu0 0.0
      %2288 = vmatmul.mubr.f32.gmra.mrb[0].mxu0 %v1786
      %v2289 = vpop.f32.mrb[0].mxu0
      %v2290 = vadd.f32 %v1702, %v2289
      %v2291 = vpop.f32.mrb[0].mxu0
      %2292 = vmatprep.mubr.f32.mxu0 0.0
      %2293 = vmatmul.mubr.f32.gmra.mrb[0].mxu0 %v1789
      %v2294 = vpop.f32.mrb[0].mxu0
      %v2295 = vadd.f32 %v1702, %v2294
      %v2296 = vpop.f32.mrb[0].mxu0
      %2297 = vmatprep.mubr.f32.mxu0 0.0
      %2298 = vmatmul.mubr.f32.gmra.mrb[0].mxu0 %v1792
      %v2299 = vpop.f32.mrb[0].mxu0
      %v2300 = vadd.f32 %v1702, %v2299
      %v2301 = vpop.f32.mrb[0].mxu0
      %2302 = vmatprep.mubr.f32.mxu0 0.0
      %2303 = vmatmul.mubr.f32.gmra.mrb[0].mxu0 %v1795
      %v2304 = vpop.f32.mrb[0].mxu0
      %v2305 = vadd.f32 %v1702, %v2304
      %v2306 = vpop.f32.mrb[0].mxu0
      %2307 = vmatprep.mubr.f32.mxu0 0.0
      %2308 = vmatmul.mubr.f32.gmra.mrb[0].mxu0 %v1798
      %v2309 = vpop.f32.mrb[0].mxu0
      %v2310 = vadd.f32 %v1702, %v2309
      %v2311 = vpop.f32.mrb[0].mxu0
      %2312 = vmatprep.mubr.f32.mxu0 0.0
      %2313 = vmatmul.mubr.f32.gmra.mrb[0].mxu0 %v1801
      %v2314 = vpop.f32.mrb[0].mxu0
      %v2315 = vadd.f32 %v1702, %v2314
      %v2316 = vpop.f32.mrb[0].mxu0
      %2317 = vmatprep.mubr.f32.mxu0 0.0
      %2318 = vmatmul.mubr.f32.gmra.mrb[0].mxu0 %v1804
      %v2319 = vpop.f32.mrb[0].mxu0
      %v2320 = vadd.f32 %v1702, %v2319
      %v2321 = vpop.f32.mrb[0].mxu0
      %2322 = vmatprep.mubr.f32.mxu0 0.0
      %2323 = vmatmul.mubr.f32.gmra.mrb[0].mxu0 %v1807
      %v2324 = vpop.f32.mrb[0].mxu0
      %v2325 = vadd.f32 %v1702, %v2324
      %v2326 = vpop.f32.mrb[0].mxu0
      %2327 = vmatprep.mubr.f32.mxu0 0.0
      %2328 = vmatmul.mubr.f32.gmra.mrb[0].mxu0 %v1810
      %v2329 = vpop.f32.mrb[0].mxu0
      %v2330 = vadd.f32 %v1702, %v2329
      %v2331 = vpop.f32.mrb[0].mxu0
      %2332 = vmatprep.mubr.f32.mxu0 0.0
      %2333 = vmatmul.mubr.f32.gmra.mrb[0].mxu0 %v1813
      %v2334 = vpop.f32.mrb[0].mxu0
      %v2335 = vadd.f32 %v1702, %v2334
      %v2336 = vpop.f32.mrb[0].mxu0
      %2337 = vmatprep.mubr.f32.mxu0 0.0
      %2338 = vmatmul.mubr.f32.gmra.mrb[0].mxu0 %v1816
      %v2339 = vpop.f32.mrb[0].mxu0
      %v2340 = vadd.f32 %v1702, %v2339
      %v2341 = vpop.f32.mrb[0].mxu0
      %2342 = vmatprep.mubr.f32.mxu0 0.0
      %2343 = vmatmul.mubr.f32.gmra.mrb[0].mxu0 %v1819
      %v2344 = vpop.f32.mrb[0].mxu0
      %v2345 = vadd.f32 %v1702, %v2344
      %v2346 = vpop.f32.mrb[0].mxu0
      %2347 = vmatprep.mubr.f32.mxu0 0.0
      %2348 = vmatmul.mubr.f32.gmra.mrb[0].mxu0 %v1822
      %v2349 = vpop.f32.mrb[0].mxu0
      %v2350 = vadd.f32 %v1702, %v2349
      %v2351 = vpop.f32.mrb[0].mxu0
      %2352 = vmatprep.mubr.f32.mxu0 0.0
      %2353 = vmatmul.mubr.f32.gmra.mrb[0].mxu0 %v1825
      %v2354 = vpop.f32.mrb[0].mxu0
      %v2355 = vadd.f32 %v1702, %v2354
      %v2356 = vpop.f32.mrb[0].mxu0
      %2357 = vmatprep.mubr.f32.mxu0 0.0
      %2358 = vmatmul.mubr.f32.gmra.mrb[0].mxu0 %v1828
      %v2359 = vpop.f32.mrb[0].mxu0
      %v2360 = vadd.f32 %v1702, %v2359
      %v2361 = vpop.f32.mrb[0].mxu0
      %2362 = vmatprep.mubr.f32.mxu0 0.0
      %2363 = vmatmul.mubr.f32.gmra.mrb[0].mxu0 %v1831
      %v2364 = vpop.f32.mrb[0].mxu0
      %v2365 = vadd.f32 %v1702, %v2364
      %v2366 = vpop.f32.mrb[0].mxu0
      %2367 = vmatprep.mubr.f32.mxu0 0.0
      %2368 = vmatmul.mubr.f32.gmra.mrb[0].mxu0 %v1834
      %v2369 = vpop.f32.mrb[0].mxu0
      %v2370 = vadd.f32 %v1702, %v2369
      %v2371 = vpop.f32.mrb[0].mxu0
      %2372 = vmatprep.mubr.f32.mxu0 0.0
      %2373 = vmatmul.mubr.f32.gmra.mrb[0].mxu0 %v1837
      %v2374 = vpop.f32.mrb[0].mxu0
      %v2375 = vadd.f32 %v1702, %v2374
      %v2376 = vpop.f32.mrb[0].mxu0
      %2377 = vmatprep.mubr.f32.mxu0 0.0
      %2378 = vmatmul.mubr.f32.gmra.mrb[0].mxu0 %v1840
      %v2379 = vpop.f32.mrb[0].mxu0
      %v2380 = vadd.f32 %v1702, %v2379
      %v2381 = vpop.f32.mrb[0].mxu0
      %2382 = vmatprep.mubr.f32.mxu0 0.0
      %2383 = vmatmul.mubr.f32.gmra.mrb[0].mxu0 %v1843
      %v2384 = vpop.f32.mrb[0].mxu0
      %v2385 = vadd.f32 %v1702, %v2384
      %v2386 = vpop.f32.mrb[0].mxu0
      %2387 = vmatprep.mubr.f32.mxu0 0.0
      %2388 = vmatmul.mubr.f32.gmra.mrb[0].mxu0 %v1846
      %v2389 = vpop.f32.mrb[0].mxu0
      %v2390 = vadd.f32 %v1702, %v2389
      %v2391 = vpop.f32.mrb[0].mxu0
      %2392 = vmatprep.mubr.f32.mxu0 0.0
      %2393 = vmatmul.mubr.f32.gmra.mrb[0].mxu0 %v1849
      %v2394 = vpop.f32.mrb[0].mxu0
      %v2395 = vadd.f32 %v1702, %v2394
      %v2396 = vpop.f32.mrb[0].mxu0
      %2397 = vmatprep.mubr.f32.mxu0 0.0
      %2398 = vmatmul.mubr.f32.gmra.mrb[0].mxu0 %v1852
      %v2399 = vpop.f32.mrb[0].mxu0
      %v2400 = vadd.f32 %v1702, %v2399
      %v2401 = vpop.f32.mrb[0].mxu0
      %2402 = vmatprep.mubr.f32.mxu0 0.0
      %2403 = vmatmul.mubr.f32.gmra.mrb[0].mxu0 %v1855
      %v2404 = vpop.f32.mrb[0].mxu0
      %v2405 = vadd.f32 %v1702, %v2404
      %v2406 = vpop.f32.mrb[0].mxu0
      %2407 = vmatprep.mubr.f32.mxu0 0.0
      %2408 = vmatmul.mubr.f32.gmra.mrb[0].mxu0 %v1858
      %v2409 = vpop.f32.mrb[0].mxu0
      %v2410 = vadd.f32 %v1702, %v2409
      %v2411 = vpop.f32.mrb[0].mxu0
      %2412 = vmatprep.mubr.f32.mxu0 0.0
      %2413 = vmatmul.mubr.f32.gmra.mrb[0].mxu0 %v1861
      %v2414 = vpop.f32.mrb[0].mxu0
      %v2415 = vadd.f32 %v1702, %v2414
      %v2416 = vpop.f32.mrb[0].mxu0
      %2417 = vmatprep.mubr.f32.mxu0 0.0
      %2418 = vmatmul.mubr.f32.gmra.mrb[0].mxu0 %v1864
      %v2419 = vpop.f32.mrb[0].mxu0
      %v2420 = vadd.f32 %v1702, %v2419
      %v2421 = vpop.f32.mrb[0].mxu0
      %2422 = vmatprep.mubr.f32.mxu0 0.0
      %2423 = vmatmul.mubr.f32.gmra.mrb[0].mxu0 %v1867
      %v2424 = vpop.f32.mrb[0].mxu0
      %v2425 = vadd.f32 %v1702, %v2424
      %v2426 = vpop.f32.mrb[0].mxu0
      %2427 = vmatprep.mubr.f32.mxu0 0.0
      %2428 = vmatmul.mubr.f32.gmra.mrb[0].mxu0 %v1870
      %v2429 = vpop.f32.mrb[0].mxu0
      %v2430 = vadd.f32 %v1702, %v2429
      %v2431 = vpop.f32.mrb[0].mxu0
      %2432 = vmatprep.mubr.f32.mxu0 0.0
      %2433 = vmatmul.mubr.f32.gmra.mrb[0].mxu0 %v1873
      %v2434 = vpop.f32.mrb[0].mxu0
      %v2435 = vadd.f32 %v1702, %v2434
      %v2436 = vpop.f32.mrb[0].mxu0
      %2437 = vmatprep.mubr.f32.mxu0 0.0
      %2438 = vmatmul.mubr.f32.gmra.mrb[0].mxu0 %v1876
      %v2439 = vpop.f32.mrb[0].mxu0
      %v2440 = vadd.f32 %v1702, %v2439
      %v2441 = vpop.f32.mrb[0].mxu0
      %2442 = vmatprep.mubr.f32.mxu0 0.0
      %2443 = vmatmul.mubr.f32.gmra.mrb[0].mxu0 %v1879
      %v2444 = vpop.f32.mrb[0].mxu0
      %v2445 = vadd.f32 %v1702, %v2444
      %v2446 = vpop.f32.mrb[0].mxu0
      %2447 = vmatprep.mubr.f32.mxu0 0.0
      %2448 = vmatmul.mubr.f32.gmra.mrb[0].mxu0 %v1882
      %v2449 = vpop.f32.mrb[0].mxu0
      %v2450 = vadd.f32 %v1702, %v2449
      %v2451 = vpop.f32.mrb[0].mxu0
      %2452 = vmatprep.mubr.f32.mxu0 0.0
      %2453 = vmatmul.mubr.f32.gmra.mrb[0].mxu0 %v1885
      %v2454 = vpop.f32.mrb[0].mxu0
      %v2455 = vadd.f32 %v1702, %v2454
      %v2456 = vpop.f32.mrb[0].mxu0
      %2457 = vmatprep.mubr.f32.mxu0 0.0
      %2458 = vmatmul.mubr.f32.gmra.mrb[0].mxu0 %v1888
      %v2459 = vpop.f32.mrb[0].mxu0
      %v2460 = vadd.f32 %v1702, %v2459
      %v2461 = vpop.f32.mrb[0].mxu0
      %2462 = vmatprep.mubr.f32.mxu0 0.0
      %2463 = vmatmul.mubr.f32.gmra.mrb[0].mxu0 %v1891
      %v2464 = vpop.f32.mrb[0].mxu0
      %v2465 = vadd.f32 %v1702, %v2464
      %v2466 = vpop.f32.mrb[0].mxu0
      %2467 = vmatprep.mubr.f32.mxu0 0.0
      %2468 = vmatmul.mubr.f32.gmra.mrb[0].mxu0 %v1894
      %v2469 = vpop.f32.mrb[0].mxu0
      %v2470 = vadd.f32 %v1702, %v2469
      %v2471 = vpop.f32.mrb[0].mxu0
      %2472 = vmatprep.mubr.f32.mxu0 0.0
      %2473 = vmatmul.mubr.f32.gmra.mrb[0].mxu0 %v1897
      %v2474 = vpop.f32.mrb[0].mxu0
      %v2475 = vadd.f32 %v1702, %v2474
      %v2476 = vpop.f32.mrb[0].mxu0
      %2477 = vmatprep.mubr.f32.mxu0 0.0
      %2478 = vmatmul.mubr.f32.gmra.mrb[0].mxu0 %v1900
      %v2479 = vpop.f32.mrb[0].mxu0
      %v2480 = vadd.f32 %v1702, %v2479
      %v2481 = vpop.f32.mrb[0].mxu0
      %2482 = vmatprep.mubr.f32.mxu0 0.0
      %2483 = vmatmul.mubr.f32.gmra.mrb[0].mxu0 %v1903
      %v2484 = vpop.f32.mrb[0].mxu0
      %v2485 = vadd.f32 %v1702, %v2484
      %v2486 = vpop.f32.mrb[0].mxu0
      %2487 = vmatprep.mubr.f32.mxu0 0.0
      %2488 = vmatmul.mubr.f32.gmra.mrb[0].mxu0 %v1906
      %v2489 = vpop.f32.mrb[0].mxu0
      %v2490 = vadd.f32 %v1702, %v2489
      %v2491 = vpop.f32.mrb[0].mxu0
      %2492 = vmatprep.mubr.f32.mxu0 0.0
      %2493 = vmatmul.mubr.f32.gmra.mrb[0].mxu0 %v1909
      %v2494 = vpop.f32.mrb[0].mxu0
      %v2495 = vadd.f32 %v1702, %v2494
      %v2496 = vpop.f32.mrb[0].mxu0
      %2497 = vmatprep.mubr.f32.mxu0 0.0
      %2498 = vmatmul.mubr.f32.gmra.mrb[0].mxu0 %v1912
      %v2499 = vpop.f32.mrb[0].mxu0
      %v2500 = vadd.f32 %v1702, %v2499
      %v2501 = vpop.f32.mrb[0].mxu0
      %2502 = vmatprep.mubr.f32.mxu0 0.0
      %2503 = vmatmul.mubr.f32.gmra.mrb[0].mxu0 %v1915
      %v2504 = vpop.f32.mrb[0].mxu0
      %v2505 = vadd.f32 %v1702, %v2504
      %v2506 = vpop.f32.mrb[0].mxu0
      %2507 = vmatprep.mubr.f32.mxu0 0.0
      %2508 = vmatmul.mubr.f32.gmra.mrb[0].mxu0 %v1918
      %v2509 = vpop.f32.mrb[0].mxu0
      %v2510 = vadd.f32 %v1702, %v2509
      %v2511 = vpop.f32.mrb[0].mxu0
      %2512 = vmatprep.mubr.f32.mxu0 0.0
      %2513 = vmatmul.mubr.f32.gmra.mrb[0].mxu0 %v1921
      %v2514 = vpop.f32.mrb[0].mxu0
      %v2515 = vadd.f32 %v1702, %v2514
      %v2516 = vpop.f32.mrb[0].mxu0
      %2517 = vmatprep.mubr.f32.mxu0 0.0
      %2518 = vmatmul.mubr.f32.gmra.mrb[0].mxu0 %v1924
      %v2519 = vpop.f32.mrb[0].mxu0
      %v2520 = vadd.f32 %v1702, %v2519
      %v2521 = vpop.f32.mrb[0].mxu0
      %2522 = vmatprep.mubr.f32.mxu0 0.0
      %2523 = vmatmul.mubr.f32.gmra.mrb[0].mxu0 %v1927
      %v2524 = vpop.f32.mrb[0].mxu0
      %v2525 = vadd.f32 %v1702, %v2524
      %v2526 = vpop.f32.mrb[0].mxu0
      %2527 = vmatprep.mubr.f32.mxu0 0.0
      %2528 = vmatmul.mubr.f32.gmra.mrb[0].mxu0 %v1930
      %v2529 = vpop.f32.mrb[0].mxu0
      %v2530 = vadd.f32 %v1702, %v2529
      %v2531 = vpop.f32.mrb[0].mxu0
      %2532 = vmatprep.mubr.f32.mxu0 0.0
      %2533 = vmatmul.mubr.f32.gmra.mrb[0].mxu0 %v1933
      %v2534 = vpop.f32.mrb[0].mxu0
      %v2535 = vadd.f32 %v1702, %v2534
      %v2536 = vpop.f32.mrb[0].mxu0
      %2537 = vmatprep.mubr.f32.mxu0 0.0
      %2538 = vmatmul.mubr.f32.gmra.mrb[0].mxu0 %v1936
      %v2539 = vpop.f32.mrb[0].mxu0
      %v2540 = vadd.f32 %v1702, %v2539
      %v2541 = vpop.f32.mrb[0].mxu0
      %2542 = vmatprep.mubr.f32.mxu0 0.0
      %2543 = vmatmul.mubr.f32.gmra.mrb[0].mxu0 %v1939
      %v2544 = vpop.f32.mrb[0].mxu0
      %v2545 = vadd.f32 %v1702, %v2544
      %v2546 = vpop.f32.mrb[0].mxu0
      %2547 = vmatprep.mubr.f32.mxu0 0.0
      %2548 = vmatmul.mubr.f32.gmra.mrb[0].mxu0 %v1942
      %v2549 = vpop.f32.mrb[0].mxu0
      %v2550 = vadd.f32 %v1702, %v2549
      %v2551 = vpop.f32.mrb[0].mxu0
      %2552 = vmatprep.mubr.f32.mxu0 0.0
      %2553 = vmatmul.mubr.f32.gmra.mrb[0].mxu0 %v1945
      %v2554 = vpop.f32.mrb[0].mxu0
      %v2555 = vadd.f32 %v1702, %v2554
      %v2556 = vpop.f32.mrb[0].mxu0
      %2557 = vmatprep.mubr.f32.mxu0 0.0
      %2558 = vmatmul.mubr.f32.gmra.mrb[0].mxu0 %v1948
      %v2559 = vpop.f32.mrb[0].mxu0
      %v2560 = vadd.f32 %v1702, %v2559
      %v2561 = vpop.f32.mrb[0].mxu0
      %2562 = vmatprep.mubr.f32.mxu0 0.0
      %2563 = vmatmul.mubr.f32.gmra.mrb[0].mxu0 %v1951
      %v2564 = vpop.f32.mrb[0].mxu0
      %v2565 = vadd.f32 %v1702, %v2564
      %v2566 = vpop.f32.mrb[0].mxu0
      %2567 = vmatprep.mubr.f32.mxu0 0.0
      %2568 = vmatmul.mubr.f32.gmra.mrb[0].mxu0 %v1954
      %v2569 = vpop.f32.mrb[0].mxu0
      %v2570 = vadd.f32 %v1702, %v2569
      %v2571 = vpop.f32.mrb[0].mxu0
      %2572 = vmatprep.mubr.f32.mxu0 0.0
      %2573 = vmatmul.mubr.f32.gmra.mrb[0].mxu0 %v1957
      %v2574 = vpop.f32.mrb[0].mxu0
      %v2575 = vadd.f32 %v1702, %v2574
      %v2576 = vpop.f32.mrb[0].mxu0
      %2577 = vmatprep.mubr.f32.mxu0 0.0
      %2578 = vmatmul.mubr.f32.gmra.mrb[0].mxu0 %v1960
      %v2579 = vpop.f32.mrb[0].mxu0
      %v2580 = vadd.f32 %v1702, %v2579
      %v2581 = vpop.f32.mrb[0].mxu0
      %2582 = vmatprep.mubr.f32.mxu0 0.0
      %2583 = vmatmul.mubr.f32.gmra.mrb[0].mxu0 %v1963
      %v2584 = vpop.f32.mrb[0].mxu0
      %v2585 = vadd.f32 %v1702, %v2584
      %v2586 = vpop.f32.mrb[0].mxu0
      %2587 = vmatprep.mubr.f32.mxu0 0.0
      %2588 = vmatmul.mubr.f32.gmra.mrb[0].mxu0 %v1966
      %v2589 = vpop.f32.mrb[0].mxu0
      %v2590 = vadd.f32 %v1702, %v2589
      %v2591 = vpop.f32.mrb[0].mxu0
      %2592 = vmatprep.mubr.f32.mxu0 0.0
      %2593 = vmatmul.mubr.f32.gmra.mrb[0].mxu0 %v1969
      %v2594 = vpop.f32.mrb[0].mxu0
      %v2595 = vadd.f32 %v1702, %v2594
      %v2596 = vpop.f32.mrb[0].mxu0
      %2597 = vmatprep.mubr.f32.mxu0 0.0
      %2598 = vmatmul.mubr.f32.gmra.mrb[0].mxu0 %v1972
      %v2599 = vpop.f32.mrb[0].mxu0
      %v2600 = vadd.f32 %v1702, %v2599
      %v2601 = vpop.f32.mrb[0].mxu0
      %2602 = vmatprep.mubr.f32.mxu0 0.0
      %2603 = vmatmul.mubr.f32.gmra.mrb[0].mxu0 %v1975
      %v2604 = vpop.f32.mrb[0].mxu0
      %v2605 = vadd.f32 %v1702, %v2604
      %v2606 = vpop.f32.mrb[0].mxu0
      %2607 = vmatprep.mubr.f32.mxu0 0.0
      %2608 = vmatmul.mubr.f32.gmra.mrb[0].mxu0 %v1978
      %v2609 = vpop.f32.mrb[0].mxu0
      %v2610 = vadd.f32 %v1702, %v2609
      %v2611 = vpop.f32.mrb[0].mxu0
      %2612 = vmatprep.mubr.f32.mxu0 0.0
      %2613 = vmatmul.mubr.f32.gmra.mrb[0].mxu0 %v1981
      %v2614 = vpop.f32.mrb[0].mxu0
      %v2615 = vadd.f32 %v1702, %v2614
      %v2616 = vpop.f32.mrb[0].mxu0
      %2617 = vmatprep.mubr.f32.mxu0 0.0
      %2618 = vmatmul.mubr.f32.gmra.mrb[0].mxu0 %v1984
      %v2619 = vpop.f32.mrb[0].mxu0
      %v2620 = vadd.f32 %v1702, %v2619
      %v2621 = vpop.f32.mrb[0].mxu0
      %2622 = vmatprep.mubr.f32.mxu0 0.0
      %2623 = vmatmul.mubr.f32.gmra.mrb[0].mxu0 %v1987
      %v2624 = vpop.f32.mrb[0].mxu0
      %v2625 = vadd.f32 %v1702, %v2624
      %v2626 = vpop.f32.mrb[0].mxu0
      %2627 = vmatprep.mubr.f32.mxu0 0.0
      %2628 = vmatmul.mubr.f32.gmra.mrb[0].mxu0 %v1990
      %v2629 = vpop.f32.mrb[0].mxu0
      %v2630 = vadd.f32 %v1702, %v2629
      %v2631 = vpop.f32.mrb[0].mxu0
      %2632 = vmatprep.mubr.f32.mxu0 0.0
      %2633 = vmatmul.mubr.f32.gmra.mrb[0].mxu0 %v1993
      %v2634 = vpop.f32.mrb[0].mxu0
      %v2635 = vadd.f32 %v1702, %v2634
      %v2636 = vpop.f32.mrb[0].mxu0
      %2637 = vmatprep.mubr.f32.mxu0 0.0
      %2638 = vmatmul.mubr.f32.gmra.mrb[0].mxu0 %v1996
      %v2639 = vpop.f32.mrb[0].mxu0
      %v2640 = vadd.f32 %v1702, %v2639
      %v2641 = vpop.f32.mrb[0].mxu0
      %2642 = vmatprep.mubr.f32.mxu0 0.0
      %2643 = vmatmul.mubr.f32.gmra.mrb[0].mxu0 %v1999
      %v2644 = vpop.f32.mrb[0].mxu0
      %v2645 = vadd.f32 %v1702, %v2644
      %v2646 = vpop.f32.mrb[0].mxu0
      %2647 = vmatprep.mubr.f32.mxu0 0.0
      %2648 = vmatmul.mubr.f32.gmra.mrb[0].mxu0 %v2002
      %v2649 = vpop.f32.mrb[0].mxu0
      %v2650 = vadd.f32 %v1702, %v2649
      %v2651 = vpop.f32.mrb[0].mxu0
      %2652 = vmatprep.mubr.f32.mxu0 0.0
      %2653 = vmatmul.mubr.f32.gmra.mrb[0].mxu0 %v2005
      %v2654 = vpop.f32.mrb[0].mxu0
      %v2655 = vadd.f32 %v1702, %v2654
      %v2656 = vpop.f32.mrb[0].mxu0
      %2657 = vmatprep.mubr.f32.mxu0 0.0
      %2658 = vmatmul.mubr.f32.gmra.mrb[0].mxu0 %v2008
      %v2659 = vpop.f32.mrb[0].mxu0
      %v2660 = vadd.f32 %v1702, %v2659
      %v2661 = vpop.f32.mrb[0].mxu0
      %2662 = vmatprep.mubr.f32.mxu0 0.0
      %2663 = vmatmul.mubr.f32.gmra.mrb[0].mxu0 %v2011
      %v2664 = vpop.f32.mrb[0].mxu0
      %v2665 = vadd.f32 %v1702, %v2664
      %v2666 = vpop.f32.mrb[0].mxu0
      %2667 = vmatprep.mubr.f32.mxu0 0.0
      %2668 = vmatmul.mubr.f32.gmra.mrb[0].mxu0 %v2014
      %v2669 = vpop.f32.mrb[0].mxu0
      %v2670 = vadd.f32 %v1702, %v2669
      %v2671 = vpop.f32.mrb[0].mxu0
      %2672 = vmatprep.mubr.f32.mxu0 0.0
      %2673 = vmatmul.mubr.f32.gmra.mrb[0].mxu0 %v2017
      %v2674 = vpop.f32.mrb[0].mxu0
      %v2675 = vadd.f32 %v1702, %v2674
      %v2676 = vpop.f32.mrb[0].mxu0
      %2677 = vmatprep.mubr.f32.mxu0 0.0
      %2678 = vmatmul.mubr.f32.gmra.mrb[0].mxu0 %v2020
      %v2679 = vpop.f32.mrb[0].mxu0
      %v2680 = vadd.f32 %v1702, %v2679
      %v2681 = vpop.f32.mrb[0].mxu0
      %2682 = vmatprep.mubr.f32.mxu0 0.0
      %2683 = vmatmul.mubr.f32.gmra.mrb[0].mxu0 %v2023
      %v2684 = vpop.f32.mrb[0].mxu0
      %v2685 = vadd.f32 %v1702, %v2684
      %v2686 = vpop.f32.mrb[0].mxu0
      %2687 = vmatprep.mubr.f32.mxu0 0.0
      %2688 = vmatmul.mubr.f32.gmra.mrb[0].mxu0 %v2026
      %v2689 = vpop.f32.mrb[0].mxu0
      %v2690 = vadd.f32 %v1702, %v2689
      %v2691 = vpop.f32.mrb[0].mxu0
      %2692 = vmatprep.mubr.f32.mxu0 0.0
      %2693 = vmatmul.mubr.f32.gmra.mrb[0].mxu0 %v2029
      %v2694 = vpop.f32.mrb[0].mxu0
      %v2695 = vadd.f32 %v1702, %v2694
      %v2696 = vpop.f32.mrb[0].mxu0
      %2697 = vmatprep.mubr.f32.mxu0 0.0
      %2698 = vmatmul.mubr.f32.gmra.mrb[0].mxu0 %v2032
      %v2699 = vpop.f32.mrb[0].mxu0
      %v2700 = vadd.f32 %v1702, %v2699
      %v2701 = vpop.f32.mrb[0].mxu0
      %2702 = vmatprep.mubr.f32.mxu0 0.0
      %2703 = vmatmul.mubr.f32.gmra.mrb[0].mxu0 %v2035
      %v2704 = vpop.f32.mrb[0].mxu0
      %v2705 = vadd.f32 %v1702, %v2704
      %v2706 = vpop.f32.mrb[0].mxu0
      %2707 = vmatprep.mubr.f32.mxu0 0.0
      %2708 = vmatmul.mubr.f32.gmra.mrb[0].mxu0 %v2038
      %v2709 = vpop.f32.mrb[0].mxu0
      %v2710 = vadd.f32 %v1702, %v2709
      %v2711 = vpop.f32.mrb[0].mxu0
      %2712 = vmatprep.mubr.f32.mxu0 0.0
      %2713 = vmatmul.mubr.f32.gmra.mrb[0].mxu0 %v2041
      %v2714 = vpop.f32.mrb[0].mxu0
      %v2715 = vadd.f32 %v1702, %v2714
      %v2716 = vpop.f32.mrb[0].mxu0
      %2717 = vmatprep.mubr.f32.mxu0 0.0
      %2718 = vmatmul.mubr.f32.gmra.mrb[0].mxu0 %v2044
      %v2719 = vpop.f32.mrb[0].mxu0
      %v2720 = vadd.f32 %v1702, %v2719
      %v2721 = vpop.f32.mrb[0].mxu0
      %2722 = vmatprep.mubr.f32.mxu0 0.0
      %2723 = vmatmul.mubr.f32.gmra.mrb[0].mxu0 %v2047
      %v2724 = vpop.f32.mrb[0].mxu0
      %v2725 = vadd.f32 %v1702, %v2724
      %v2726 = vpop.f32.mrb[0].mxu0
      %2727 = vmatprep.mubr.f32.mxu0 0.0
      %2728 = vmatmul.mubr.f32.gmra.mrb[0].mxu0 %v2050
      %v2729 = vpop.f32.mrb[0].mxu0
      %v2730 = vadd.f32 %v1702, %v2729
      %v2731 = vpop.f32.mrb[0].mxu0
      %2732 = vmatprep.mubr.f32.mxu0 0.0
      %2733 = vmatmul.mubr.f32.gmra.mrb[0].mxu0 %v2053
      %v2734 = vpop.f32.mrb[0].mxu0
      %v2735 = vadd.f32 %v1702, %v2734
      %v2736 = vpop.f32.mrb[0].mxu0
      %2737 = vmatprep.mubr.f32.mxu0 0.0
      %2738 = vmatmul.mubr.f32.gmra.mrb[0].mxu0 %v2056
      %v2739 = vpop.f32.mrb[0].mxu0
      %v2740 = vadd.f32 %v1702, %v2739
      %v2741 = vpop.f32.mrb[0].mxu0
      %2742 = vmatprep.mubr.f32.mxu0 0.0
      %2743 = vmatmul.mubr.f32.gmra.mrb[0].mxu0 %v2059
      %v2744 = vpop.f32.mrb[0].mxu0
      %v2745 = vadd.f32 %v1702, %v2744
      %v2746 = vpop.f32.mrb[0].mxu0
      %2747 = vmatprep.mubr.f32.mxu0 0.0
      %2748 = vmatmul.mubr.f32.gmra.mrb[0].mxu0 %v2062
      %v2749 = vpop.f32.mrb[0].mxu0
      %v2750 = vadd.f32 %v1702, %v2749
      %v2751 = vpop.f32.mrb[0].mxu0
      %2752 = vmatprep.mubr.f32.mxu0 0.0
      %2753 = vmatmul.mubr.f32.gmra.mrb[0].mxu0 %v2065
      %v2754 = vpop.f32.mrb[0].mxu0
      %v2755 = vadd.f32 %v1702, %v2754
      %v2756 = vpop.f32.mrb[0].mxu0
      %2757 = vmatprep.mubr.f32.mxu0 0.0
      %2758 = vmatmul.mubr.f32.gmra.mrb[0].mxu0 %v2068
      %v2759 = vpop.f32.mrb[0].mxu0
      %v2760 = vadd.f32 %v1702, %v2759
      %v2761 = vpop.f32.mrb[0].mxu0
      %2762 = vmatprep.mubr.f32.mxu0 0.0
      %2763 = vmatmul.mubr.f32.gmra.mrb[0].mxu0 %v2071
      %v2764 = vpop.f32.mrb[0].mxu0
      %v2765 = vadd.f32 %v1702, %v2764
      %v2766 = vpop.f32.mrb[0].mxu0
      %2767 = vmatprep.mubr.f32.mxu0 0.0
      %2768 = vmatmul.mubr.f32.gmra.mrb[0].mxu0 %v2074
      %v2769 = vpop.f32.mrb[0].mxu0
      %v2770 = vadd.f32 %v1702, %v2769
      %v2771 = vpop.f32.mrb[0].mxu0
      %2772 = vmatprep.mubr.f32.mxu0 0.0
      %2773 = vmatmul.mubr.f32.gmra.mrb[0].mxu0 %v2077
      %v2774 = vpop.f32.mrb[0].mxu0
      %v2775 = vadd.f32 %v1702, %v2774
      %v2776 = vpop.f32.mrb[0].mxu0
      %2777 = vmatprep.mubr.f32.mxu0 0.0
      %2778 = vmatmul.mubr.f32.gmra.mrb[0].mxu0 %v2080
      %v2779 = vpop.f32.mrb[0].mxu0
      %v2780 = vadd.f32 %v1702, %v2779
      %v2781 = vpop.f32.mrb[0].mxu0
      %2782 = vmatprep.mubr.f32.mxu0 0.0
      %2783 = vmatmul.mubr.f32.gmra.mrb[0].mxu0 %v2083
      %v2784 = vpop.f32.mrb[0].mxu0
      %v2785 = vadd.f32 %v1702, %v2784
      %v2786 = vpop.f32.mrb[0].mxu0
      %2787 = vmatprep.mubr.f32.mxu0 0.0
      %2788 = vmatmul.mubr.f32.gmra.mrb[0].mxu0 %v2086
      %v2789 = vpop.f32.mrb[0].mxu0
      %v2790 = vadd.f32 %v1702, %v2789
      %v2791 = vpop.f32.mrb[0].mxu0
      %2792 = vdwg.mxu0
      %v2793 = vmax.f32 %v2155, 0.0
      %v2794 = vmax.f32 %v2160, 0.0
      %v2795 = vmax.f32 %v2165, 0.0
      %v2796 = vmax.f32 %v2170, 0.0
      %v2797 = vmax.f32 %v2175, 0.0
      %v2798 = vmax.f32 %v2180, 0.0
      %v2799 = vmax.f32 %v2185, 0.0
      %v2800 = vmax.f32 %v2190, 0.0
      %v2801 = vmax.f32 %v2195, 0.0
      %v2802 = vmax.f32 %v2200, 0.0
      %v2803 = vmax.f32 %v2205, 0.0
      %v2804 = vmax.f32 %v2210, 0.0
      %v2805 = vmax.f32 %v2215, 0.0
      %v2806 = vmax.f32 %v2220, 0.0
      %v2807 = vmax.f32 %v2225, 0.0
      %v2808 = vmax.f32 %v2230, 0.0
      %v2809 = vmax.f32 %v2235, 0.0
      %v2810 = vmax.f32 %v2240, 0.0
      %v2811 = vmax.f32 %v2245, 0.0
      %v2812 = vmax.f32 %v2250, 0.0
      %v2813 = vmax.f32 %v2255, 0.0
      %v2814 = vmax.f32 %v2260, 0.0
      %v2815 = vmax.f32 %v2265, 0.0
      %v2816 = vmax.f32 %v2270, 0.0
      %v2817 = vmax.f32 %v2275, 0.0
      %v2818 = vmax.f32 %v2280, 0.0
      %v2819 = vmax.f32 %v2285, 0.0
      %v2820 = vmax.f32 %v2290, 0.0
      %v2821 = vmax.f32 %v2295, 0.0
      %v2822 = vmax.f32 %v2300, 0.0
      %v2823 = vmax.f32 %v2305, 0.0
      %v2824 = vmax.f32 %v2310, 0.0
      %v2825 = vmax.f32 %v2315, 0.0
      %v2826 = vmax.f32 %v2320, 0.0
      %v2827 = vmax.f32 %v2325, 0.0
      %v2828 = vmax.f32 %v2330, 0.0
      %v2829 = vmax.f32 %v2335, 0.0
      %v2830 = vmax.f32 %v2340, 0.0
      %v2831 = vmax.f32 %v2345, 0.0
      %v2832 = vmax.f32 %v2350, 0.0
      %v2833 = vmax.f32 %v2355, 0.0
      %v2834 = vmax.f32 %v2360, 0.0
      %v2835 = vmax.f32 %v2365, 0.0
      %v2836 = vmax.f32 %v2370, 0.0
      %v2837 = vmax.f32 %v2375, 0.0
      %v2838 = vmax.f32 %v2380, 0.0
      %v2839 = vmax.f32 %v2385, 0.0
      %v2840 = vmax.f32 %v2390, 0.0
      %v2841 = vmax.f32 %v2395, 0.0
      %v2842 = vmax.f32 %v2400, 0.0
      %v2843 = vmax.f32 %v2405, 0.0
      %v2844 = vmax.f32 %v2410, 0.0
      %v2845 = vmax.f32 %v2415, 0.0
      %v2846 = vmax.f32 %v2420, 0.0
      %v2847 = vmax.f32 %v2425, 0.0
      %v2848 = vmax.f32 %v2430, 0.0
      %v2849 = vmax.f32 %v2435, 0.0
      %v2850 = vmax.f32 %v2440, 0.0
      %v2851 = vmax.f32 %v2445, 0.0
      %v2852 = vmax.f32 %v2450, 0.0
      %v2853 = vmax.f32 %v2455, 0.0
      %v2854 = vmax.f32 %v2460, 0.0
      %v2855 = vmax.f32 %v2465, 0.0
      %v2856 = vmax.f32 %v2470, 0.0
      %v2857 = vmax.f32 %v2475, 0.0
      %v2858 = vmax.f32 %v2480, 0.0
      %v2859 = vmax.f32 %v2485, 0.0
      %v2860 = vmax.f32 %v2490, 0.0
      %v2861 = vmax.f32 %v2495, 0.0
      %v2862 = vmax.f32 %v2500, 0.0
      %v2863 = vmax.f32 %v2505, 0.0
      %v2864 = vmax.f32 %v2510, 0.0
      %v2865 = vmax.f32 %v2515, 0.0
      %v2866 = vmax.f32 %v2520, 0.0
      %v2867 = vmax.f32 %v2525, 0.0
      %v2868 = vmax.f32 %v2530, 0.0
      %v2869 = vmax.f32 %v2535, 0.0
      %v2870 = vmax.f32 %v2540, 0.0
      %v2871 = vmax.f32 %v2545, 0.0
      %v2872 = vmax.f32 %v2550, 0.0
      %v2873 = vmax.f32 %v2555, 0.0
      %v2874 = vmax.f32 %v2560, 0.0
      %v2875 = vmax.f32 %v2565, 0.0
      %v2876 = vmax.f32 %v2570, 0.0
      %v2877 = vmax.f32 %v2575, 0.0
      %v2878 = vmax.f32 %v2580, 0.0
      %v2879 = vmax.f32 %v2585, 0.0
      %v2880 = vmax.f32 %v2590, 0.0
      %v2881 = vmax.f32 %v2595, 0.0
      %v2882 = vmax.f32 %v2600, 0.0
      %v2883 = vmax.f32 %v2605, 0.0
      %v2884 = vmax.f32 %v2610, 0.0
      %v2885 = vmax.f32 %v2615, 0.0
      %v2886 = vmax.f32 %v2620, 0.0
      %v2887 = vmax.f32 %v2625, 0.0
      %v2888 = vmax.f32 %v2630, 0.0
      %v2889 = vmax.f32 %v2635, 0.0
      %v2890 = vmax.f32 %v2640, 0.0
      %v2891 = vmax.f32 %v2645, 0.0
      %v2892 = vmax.f32 %v2650, 0.0
      %v2893 = vmax.f32 %v2655, 0.0
      %v2894 = vmax.f32 %v2660, 0.0
      %v2895 = vmax.f32 %v2665, 0.0
      %v2896 = vmax.f32 %v2670, 0.0
      %v2897 = vmax.f32 %v2675, 0.0
      %v2898 = vmax.f32 %v2680, 0.0
      %v2899 = vmax.f32 %v2685, 0.0
      %v2900 = vmax.f32 %v2690, 0.0
      %v2901 = vmax.f32 %v2695, 0.0
      %v2902 = vmax.f32 %v2700, 0.0
      %v2903 = vmax.f32 %v2705, 0.0
      %v2904 = vmax.f32 %v2710, 0.0
      %v2905 = vmax.f32 %v2715, 0.0
      %v2906 = vmax.f32 %v2720, 0.0
      %v2907 = vmax.f32 %v2725, 0.0
      %v2908 = vmax.f32 %v2730, 0.0
      %v2909 = vmax.f32 %v2735, 0.0
      %v2910 = vmax.f32 %v2740, 0.0
      %v2911 = vmax.f32 %v2745, 0.0
      %v2912 = vmax.f32 %v2750, 0.0
      %v2913 = vmax.f32 %v2755, 0.0
      %v2914 = vmax.f32 %v2760, 0.0
      %v2915 = vmax.f32 %v2765, 0.0
      %v2916 = vmax.f32 %v2770, 0.0
      %v2917 = vmax.f32 %v2775, 0.0
      %v2918 = vmax.f32 %v2780, 0.0
      %v2919 = vmax.f32 %v2785, 0.0
      %v2920 = vmax.f32 %v2790, 0.0
      %v2921 = vld [vmem:[%s5] sm:$0xff]
      %v2922 = vld [vmem:[%s5 + $0x8] sm:$0xff]
      %v2923 = vld [vmem:[%s5 + $0x10] sm:$0xff]
      %v2924 = vld [vmem:[%s5 + $0x18] sm:$0xff]
      %v2925 = vld [vmem:[%s6] sm:$0x1]
      %v2927 = vlaneseq
      %v2928 = vshrl.u32 %v2927, 7
      %v2929 = vsub.s32 0, %v2928
      %v2930 = vrot.slane %v2925, %v2929
      %v2933 = vsel %vm475, %v2793, 0
      %v2936 = vsel %vm475, %v2794, 0
      %v2939 = vsel %vm475, %v2795, 0
      %v2942 = vsel %vm475, %v2796, 0
      %v2945 = vsel %vm475, %v2797, 0
      %v2948 = vsel %vm475, %v2798, 0
      %v2951 = vsel %vm475, %v2799, 0
      %v2954 = vsel %vm475, %v2800, 0
      %v2957 = vsel %vm475, %v2801, 0
      %v2960 = vsel %vm475, %v2802, 0
      %v2963 = vsel %vm475, %v2803, 0
      %v2966 = vsel %vm475, %v2804, 0
      %v2969 = vsel %vm475, %v2805, 0
      %v2972 = vsel %vm475, %v2806, 0
      %v2975 = vsel %vm475, %v2807, 0
      %v2978 = vsel %vm475, %v2808, 0
      %v2981 = vsel %vm475, %v2809, 0
      %v2984 = vsel %vm475, %v2810, 0
      %v2987 = vsel %vm475, %v2811, 0
      %v2990 = vsel %vm475, %v2812, 0
      %v2993 = vsel %vm475, %v2813, 0
      %v2996 = vsel %vm475, %v2814, 0
      %v2999 = vsel %vm475, %v2815, 0
      %v3002 = vsel %vm475, %v2816, 0
      %v3005 = vsel %vm475, %v2817, 0
      %v3008 = vsel %vm475, %v2818, 0
      %v3011 = vsel %vm475, %v2819, 0
      %v3014 = vsel %vm475, %v2820, 0
      %v3017 = vsel %vm475, %v2821, 0
      %v3020 = vsel %vm475, %v2822, 0
      %v3023 = vsel %vm475, %v2823, 0
      %v3026 = vsel %vm475, %v2824, 0
      %v3029 = vsel %vm475, %v2825, 0
      %v3032 = vsel %vm475, %v2826, 0
      %v3035 = vsel %vm475, %v2827, 0
      %v3038 = vsel %vm475, %v2828, 0
      %v3041 = vsel %vm475, %v2829, 0
      %v3044 = vsel %vm475, %v2830, 0
      %v3047 = vsel %vm475, %v2831, 0
      %v3050 = vsel %vm475, %v2832, 0
      %v3053 = vsel %vm475, %v2833, 0
      %v3056 = vsel %vm475, %v2834, 0
      %v3059 = vsel %vm475, %v2835, 0
      %v3062 = vsel %vm475, %v2836, 0
      %v3065 = vsel %vm475, %v2837, 0
      %v3068 = vsel %vm475, %v2838, 0
      %v3071 = vsel %vm475, %v2839, 0
      %v3074 = vsel %vm475, %v2840, 0
      %v3077 = vsel %vm475, %v2841, 0
      %v3080 = vsel %vm475, %v2842, 0
      %v3083 = vsel %vm475, %v2843, 0
      %v3086 = vsel %vm475, %v2844, 0
      %v3089 = vsel %vm475, %v2845, 0
      %v3092 = vsel %vm475, %v2846, 0
      %v3095 = vsel %vm475, %v2847, 0
      %v3098 = vsel %vm475, %v2848, 0
      %v3101 = vsel %vm475, %v2849, 0
      %v3104 = vsel %vm475, %v2850, 0
      %v3107 = vsel %vm475, %v2851, 0
      %v3110 = vsel %vm475, %v2852, 0
      %v3113 = vsel %vm475, %v2853, 0
      %v3116 = vsel %vm475, %v2854, 0
      %v3119 = vsel %vm475, %v2855, 0
      %v3122 = vsel %vm475, %v2856, 0
      %v3125 = vsel %vm475, %v2857, 0
      %v3128 = vsel %vm475, %v2858, 0
      %v3131 = vsel %vm475, %v2859, 0
      %v3134 = vsel %vm475, %v2860, 0
      %v3137 = vsel %vm475, %v2861, 0
      %v3140 = vsel %vm475, %v2862, 0
      %v3143 = vsel %vm475, %v2863, 0
      %v3146 = vsel %vm475, %v2864, 0
      %v3149 = vsel %vm475, %v2865, 0
      %v3152 = vsel %vm475, %v2866, 0
      %v3155 = vsel %vm475, %v2867, 0
      %v3158 = vsel %vm475, %v2868, 0
      %v3161 = vsel %vm475, %v2869, 0
      %v3164 = vsel %vm475, %v2870, 0
      %v3167 = vsel %vm475, %v2871, 0
      %v3170 = vsel %vm475, %v2872, 0
      %v3173 = vsel %vm475, %v2873, 0
      %v3176 = vsel %vm475, %v2874, 0
      %v3179 = vsel %vm475, %v2875, 0
      %v3182 = vsel %vm475, %v2876, 0
      %v3185 = vsel %vm475, %v2877, 0
      %v3188 = vsel %vm475, %v2878, 0
      %v3191 = vsel %vm475, %v2879, 0
      %v3194 = vsel %vm475, %v2880, 0
      %v3197 = vsel %vm475, %v2881, 0
      %v3200 = vsel %vm475, %v2882, 0
      %v3203 = vsel %vm475, %v2883, 0
      %v3206 = vsel %vm475, %v2884, 0
      %v3209 = vsel %vm475, %v2885, 0
      %v3212 = vsel %vm475, %v2886, 0
      %v3215 = vsel %vm475, %v2887, 0
      %v3218 = vsel %vm475, %v2888, 0
      %v3221 = vsel %vm475, %v2889, 0
      %v3224 = vsel %vm475, %v2890, 0
      %v3227 = vsel %vm475, %v2891, 0
      %v3230 = vsel %vm475, %v2892, 0
      %v3233 = vsel %vm475, %v2893, 0
      %v3236 = vsel %vm475, %v2894, 0
      %v3239 = vsel %vm475, %v2895, 0
      %v3242 = vsel %vm475, %v2896, 0
      %v3245 = vsel %vm475, %v2897, 0
      %v3248 = vsel %vm475, %v2898, 0
      %v3251 = vsel %vm475, %v2899, 0
      %v3254 = vsel %vm475, %v2900, 0
      %v3257 = vsel %vm475, %v2901, 0
      %v3260 = vsel %vm475, %v2902, 0
      %v3263 = vsel %vm475, %v2903, 0
      %v3266 = vsel %vm475, %v2904, 0
      %v3269 = vsel %vm475, %v2905, 0
      %v3272 = vsel %vm475, %v2906, 0
      %v3275 = vsel %vm475, %v2907, 0
      %v3278 = vsel %vm475, %v2908, 0
      %v3281 = vsel %vm475, %v2909, 0
      %v3284 = vsel %vm475, %v2910, 0
      %v3287 = vsel %vm475, %v2911, 0
      %v3290 = vsel %vm475, %v2912, 0
      %v3293 = vsel %vm475, %v2913, 0
      %v3296 = vsel %vm475, %v2914, 0
      %v3299 = vsel %vm475, %v2915, 0
      %v3302 = vsel %vm475, %v2916, 0
      %v3305 = vsel %vm475, %v2917, 0
      %v3308 = vsel %vm475, %v2918, 0
      %v3311 = vsel %vm475, %v2919, 0
      %v3314 = vsel %vm475, %v2920, 0
      %3316 = vmatprep.subr.mxu0 0.0
      %3317 = vmatpush1.msra.mxu0 %v2921
      %3318 = vmatprep.subr.mxu0 0.0
      %3319 = vmatpush1.msra.mxu0 %v2922
      %3320 = vmatprep.subr.mxu0 0.0
      %3321 = vmatpush1.msra.mxu0 %v2923
      %3322 = vmatprep.subr.mxu0 0.0
      %3323 = vmatpush1.msra.mxu0 %v2924
      %3324 = vmatprep.subr.mxu0 0.0
      %3325 = vmatpush1.msra.mxu0 0.0
      %3326 = vmatprep.subr.mxu0 0.0
      %3327 = vmatpush1.msra.mxu0 0.0
      %3328 = vmatprep.subr.mxu0 0.0
      %3329 = vmatpush1.msra.mxu0 0.0
      %3330 = vmatprep.subr.mxu0 0.0
      %3331 = vmatpush1.msra.mxu0 0.0
      %3332 = vmatprep.subr.mxu0 0.0
      %3333 = vmatpush1.msra.mxu0 0.0
      %3334 = vmatprep.subr.mxu0 0.0
      %3335 = vmatpush1.msra.mxu0 0.0
      %3336 = vmatprep.subr.mxu0 0.0
      %3337 = vmatpush1.msra.mxu0 0.0
      %3338 = vmatprep.subr.mxu0 0.0
      %3339 = vmatpush1.msra.mxu0 0.0
      %3340 = vmatprep.subr.mxu0 0.0
      %3341 = vmatpush1.msra.mxu0 0.0
      %3342 = vmatprep.subr.mxu0 0.0
      %3343 = vmatpush1.msra.mxu0 0.0
      %3344 = vmatprep.subr.mxu0 0.0
      %3345 = vmatpush1.msra.mxu0 0.0
      %3346 = vmatprep.subr.mxu0 0.0
      %3347 = vmatpush1.msra.mxu0 0.0
      %3348 = vmatprep.subr.mxu0 0.0
      %3349 = vmatpush1.msra.mxu0 0.0
      %3350 = vmatprep.subr.mxu0 0.0
      %3351 = vmatpush1.msra.mxu0 0.0
      %3352 = vmatprep.subr.mxu0 0.0
      %3353 = vmatpush1.msra.mxu0 0.0
      %3354 = vmatprep.subr.mxu0 0.0
      %3355 = vmatpush1.msra.mxu0 0.0
      %3356 = vmatprep.subr.mxu0 0.0
      %3357 = vmatpush1.msra.mxu0 0.0
      %3358 = vmatprep.subr.mxu0 0.0
      %3359 = vmatpush1.msra.mxu0 0.0
      %3360 = vmatprep.subr.mxu0 0.0
      %3361 = vmatpush1.msra.mxu0 0.0
      %3362 = vmatprep.subr.mxu0 0.0
      %3363 = vmatpush1.msra.mxu0 0.0
      %3364 = vmatprep.subr.mxu0 0.0
      %3365 = vmatpush1.msra.mxu0 0.0
      %3366 = vmatprep.subr.mxu0 0.0
      %3367 = vmatpush1.msra.mxu0 0.0
      %3368 = vmatprep.subr.mxu0 0.0
      %3369 = vmatpush1.msra.mxu0 0.0
      %3370 = vmatprep.subr.mxu0 0.0
      %3371 = vmatpush1.msra.mxu0 0.0
      %3372 = vmatprep.subr.mxu0 0.0
      %3373 = vmatpush1.msra.mxu0 0.0
      %3374 = vmatprep.subr.mxu0 0.0
      %3375 = vmatpush1.msra.mxu0 0.0
      %3376 = vmatprep.subr.mxu0 0.0
      %3377 = vmatpush1.msra.mxu0 0.0
      %3378 = vmatprep.subr.mxu0 0.0
      %3379 = vmatpush1.msra.mxu0 0.0
      %3380 = vmatprep.mubr.f32.mxu0 0.0
      %3381 = vmatmul.mubr.f32.gmra.mrb[0].mxu0 %v2933
      %v3382 = vpop.f32.mrb[0].mxu0
      %v3383 = vadd.f32 %v2930, %v3382
      %v3384 = vpop.f32.mrb[0].mxu0
      %3385 = vmatprep.mubr.f32.mxu0 0.0
      %3386 = vmatmul.mubr.f32.gmra.mrb[0].mxu0 %v2936
      %v3387 = vpop.f32.mrb[0].mxu0
      %v3388 = vadd.f32 %v2930, %v3387
      %v3389 = vpop.f32.mrb[0].mxu0
      %3390 = vmatprep.mubr.f32.mxu0 0.0
      %3391 = vmatmul.mubr.f32.gmra.mrb[0].mxu0 %v2939
      %v3392 = vpop.f32.mrb[0].mxu0
      %v3393 = vadd.f32 %v2930, %v3392
      %v3394 = vpop.f32.mrb[0].mxu0
      %3395 = vmatprep.mubr.f32.mxu0 0.0
      %3396 = vmatmul.mubr.f32.gmra.mrb[0].mxu0 %v2942
      %v3397 = vpop.f32.mrb[0].mxu0
      %v3398 = vadd.f32 %v2930, %v3397
      %v3399 = vpop.f32.mrb[0].mxu0
      %3400 = vmatprep.mubr.f32.mxu0 0.0
      %3401 = vmatmul.mubr.f32.gmra.mrb[0].mxu0 %v2945
      %v3402 = vpop.f32.mrb[0].mxu0
      %v3403 = vadd.f32 %v2930, %v3402
      %v3404 = vpop.f32.mrb[0].mxu0
      %3405 = vmatprep.mubr.f32.mxu0 0.0
      %3406 = vmatmul.mubr.f32.gmra.mrb[0].mxu0 %v2948
      %v3407 = vpop.f32.mrb[0].mxu0
      %v3408 = vadd.f32 %v2930, %v3407
      %v3409 = vpop.f32.mrb[0].mxu0
      %3410 = vmatprep.mubr.f32.mxu0 0.0
      %3411 = vmatmul.mubr.f32.gmra.mrb[0].mxu0 %v2951
      %v3412 = vpop.f32.mrb[0].mxu0
      %v3413 = vadd.f32 %v2930, %v3412
      %v3414 = vpop.f32.mrb[0].mxu0
      %3415 = vmatprep.mubr.f32.mxu0 0.0
      %3416 = vmatmul.mubr.f32.gmra.mrb[0].mxu0 %v2954
      %v3417 = vpop.f32.mrb[0].mxu0
      %v3418 = vadd.f32 %v2930, %v3417
      %v3419 = vpop.f32.mrb[0].mxu0
      %3420 = vmatprep.mubr.f32.mxu0 0.0
      %3421 = vmatmul.mubr.f32.gmra.mrb[0].mxu0 %v2957
      %v3422 = vpop.f32.mrb[0].mxu0
      %v3423 = vadd.f32 %v2930, %v3422
      %v3424 = vpop.f32.mrb[0].mxu0
      %3425 = vmatprep.mubr.f32.mxu0 0.0
      %3426 = vmatmul.mubr.f32.gmra.mrb[0].mxu0 %v2960
      %v3427 = vpop.f32.mrb[0].mxu0
      %v3428 = vadd.f32 %v2930, %v3427
      %v3429 = vpop.f32.mrb[0].mxu0
      %3430 = vmatprep.mubr.f32.mxu0 0.0
      %3431 = vmatmul.mubr.f32.gmra.mrb[0].mxu0 %v2963
      %v3432 = vpop.f32.mrb[0].mxu0
      %v3433 = vadd.f32 %v2930, %v3432
      %v3434 = vpop.f32.mrb[0].mxu0
      %3435 = vmatprep.mubr.f32.mxu0 0.0
      %3436 = vmatmul.mubr.f32.gmra.mrb[0].mxu0 %v2966
      %v3437 = vpop.f32.mrb[0].mxu0
      %v3438 = vadd.f32 %v2930, %v3437
      %v3439 = vpop.f32.mrb[0].mxu0
      %3440 = vmatprep.mubr.f32.mxu0 0.0
      %3441 = vmatmul.mubr.f32.gmra.mrb[0].mxu0 %v2969
      %v3442 = vpop.f32.mrb[0].mxu0
      %v3443 = vadd.f32 %v2930, %v3442
      %v3444 = vpop.f32.mrb[0].mxu0
      %3445 = vmatprep.mubr.f32.mxu0 0.0
      %3446 = vmatmul.mubr.f32.gmra.mrb[0].mxu0 %v2972
      %v3447 = vpop.f32.mrb[0].mxu0
      %v3448 = vadd.f32 %v2930, %v3447
      %v3449 = vpop.f32.mrb[0].mxu0
      %3450 = vmatprep.mubr.f32.mxu0 0.0
      %3451 = vmatmul.mubr.f32.gmra.mrb[0].mxu0 %v2975
      %v3452 = vpop.f32.mrb[0].mxu0
      %v3453 = vadd.f32 %v2930, %v3452
      %v3454 = vpop.f32.mrb[0].mxu0
      %3455 = vmatprep.mubr.f32.mxu0 0.0
      %3456 = vmatmul.mubr.f32.gmra.mrb[0].mxu0 %v2978
      %v3457 = vpop.f32.mrb[0].mxu0
      %v3458 = vadd.f32 %v2930, %v3457
      %v3459 = vpop.f32.mrb[0].mxu0
      %3460 = vmatprep.mubr.f32.mxu0 0.0
      %3461 = vmatmul.mubr.f32.gmra.mrb[0].mxu0 %v2981
      %v3462 = vpop.f32.mrb[0].mxu0
      %v3463 = vadd.f32 %v2930, %v3462
      %v3464 = vpop.f32.mrb[0].mxu0
      %3465 = vmatprep.mubr.f32.mxu0 0.0
      %3466 = vmatmul.mubr.f32.gmra.mrb[0].mxu0 %v2984
      %v3467 = vpop.f32.mrb[0].mxu0
      %v3468 = vadd.f32 %v2930, %v3467
      %v3469 = vpop.f32.mrb[0].mxu0
      %3470 = vmatprep.mubr.f32.mxu0 0.0
      %3471 = vmatmul.mubr.f32.gmra.mrb[0].mxu0 %v2987
      %v3472 = vpop.f32.mrb[0].mxu0
      %v3473 = vadd.f32 %v2930, %v3472
      %v3474 = vpop.f32.mrb[0].mxu0
      %3475 = vmatprep.mubr.f32.mxu0 0.0
      %3476 = vmatmul.mubr.f32.gmra.mrb[0].mxu0 %v2990
      %v3477 = vpop.f32.mrb[0].mxu0
      %v3478 = vadd.f32 %v2930, %v3477
      %v3479 = vpop.f32.mrb[0].mxu0
      %3480 = vmatprep.mubr.f32.mxu0 0.0
      %3481 = vmatmul.mubr.f32.gmra.mrb[0].mxu0 %v2993
      %v3482 = vpop.f32.mrb[0].mxu0
      %v3483 = vadd.f32 %v2930, %v3482
      %v3484 = vpop.f32.mrb[0].mxu0
      %3485 = vmatprep.mubr.f32.mxu0 0.0
      %3486 = vmatmul.mubr.f32.gmra.mrb[0].mxu0 %v2996
      %v3487 = vpop.f32.mrb[0].mxu0
      %v3488 = vadd.f32 %v2930, %v3487
      %v3489 = vpop.f32.mrb[0].mxu0
      %3490 = vmatprep.mubr.f32.mxu0 0.0
      %3491 = vmatmul.mubr.f32.gmra.mrb[0].mxu0 %v2999
      %v3492 = vpop.f32.mrb[0].mxu0
      %v3493 = vadd.f32 %v2930, %v3492
      %v3494 = vpop.f32.mrb[0].mxu0
      %3495 = vmatprep.mubr.f32.mxu0 0.0
      %3496 = vmatmul.mubr.f32.gmra.mrb[0].mxu0 %v3002
      %v3497 = vpop.f32.mrb[0].mxu0
      %v3498 = vadd.f32 %v2930, %v3497
      %v3499 = vpop.f32.mrb[0].mxu0
      %3500 = vmatprep.mubr.f32.mxu0 0.0
      %3501 = vmatmul.mubr.f32.gmra.mrb[0].mxu0 %v3005
      %v3502 = vpop.f32.mrb[0].mxu0
      %v3503 = vadd.f32 %v2930, %v3502
      %v3504 = vpop.f32.mrb[0].mxu0
      %3505 = vmatprep.mubr.f32.mxu0 0.0
      %3506 = vmatmul.mubr.f32.gmra.mrb[0].mxu0 %v3008
      %v3507 = vpop.f32.mrb[0].mxu0
      %v3508 = vadd.f32 %v2930, %v3507
      %v3509 = vpop.f32.mrb[0].mxu0
      %3510 = vmatprep.mubr.f32.mxu0 0.0
      %3511 = vmatmul.mubr.f32.gmra.mrb[0].mxu0 %v3011
      %v3512 = vpop.f32.mrb[0].mxu0
      %v3513 = vadd.f32 %v2930, %v3512
      %v3514 = vpop.f32.mrb[0].mxu0
      %3515 = vmatprep.mubr.f32.mxu0 0.0
      %3516 = vmatmul.mubr.f32.gmra.mrb[0].mxu0 %v3014
      %v3517 = vpop.f32.mrb[0].mxu0
      %v3518 = vadd.f32 %v2930, %v3517
      %v3519 = vpop.f32.mrb[0].mxu0
      %3520 = vmatprep.mubr.f32.mxu0 0.0
      %3521 = vmatmul.mubr.f32.gmra.mrb[0].mxu0 %v3017
      %v3522 = vpop.f32.mrb[0].mxu0
      %v3523 = vadd.f32 %v2930, %v3522
      %v3524 = vpop.f32.mrb[0].mxu0
      %3525 = vmatprep.mubr.f32.mxu0 0.0
      %3526 = vmatmul.mubr.f32.gmra.mrb[0].mxu0 %v3020
      %v3527 = vpop.f32.mrb[0].mxu0
      %v3528 = vadd.f32 %v2930, %v3527
      %v3529 = vpop.f32.mrb[0].mxu0
      %3530 = vmatprep.mubr.f32.mxu0 0.0
      %3531 = vmatmul.mubr.f32.gmra.mrb[0].mxu0 %v3023
      %v3532 = vpop.f32.mrb[0].mxu0
      %v3533 = vadd.f32 %v2930, %v3532
      %v3534 = vpop.f32.mrb[0].mxu0
      %3535 = vmatprep.mubr.f32.mxu0 0.0
      %3536 = vmatmul.mubr.f32.gmra.mrb[0].mxu0 %v3026
      %v3537 = vpop.f32.mrb[0].mxu0
      %v3538 = vadd.f32 %v2930, %v3537
      %v3539 = vpop.f32.mrb[0].mxu0
      %3540 = vmatprep.mubr.f32.mxu0 0.0
      %3541 = vmatmul.mubr.f32.gmra.mrb[0].mxu0 %v3029
      %v3542 = vpop.f32.mrb[0].mxu0
      %v3543 = vadd.f32 %v2930, %v3542
      %v3544 = vpop.f32.mrb[0].mxu0
      %3545 = vmatprep.mubr.f32.mxu0 0.0
      %3546 = vmatmul.mubr.f32.gmra.mrb[0].mxu0 %v3032
      %v3547 = vpop.f32.mrb[0].mxu0
      %v3548 = vadd.f32 %v2930, %v3547
      %v3549 = vpop.f32.mrb[0].mxu0
      %3550 = vmatprep.mubr.f32.mxu0 0.0
      %3551 = vmatmul.mubr.f32.gmra.mrb[0].mxu0 %v3035
      %v3552 = vpop.f32.mrb[0].mxu0
      %v3553 = vadd.f32 %v2930, %v3552
      %v3554 = vpop.f32.mrb[0].mxu0
      %3555 = vmatprep.mubr.f32.mxu0 0.0
      %3556 = vmatmul.mubr.f32.gmra.mrb[0].mxu0 %v3038
      %v3557 = vpop.f32.mrb[0].mxu0
      %v3558 = vadd.f32 %v2930, %v3557
      %v3559 = vpop.f32.mrb[0].mxu0
      %3560 = vmatprep.mubr.f32.mxu0 0.0
      %3561 = vmatmul.mubr.f32.gmra.mrb[0].mxu0 %v3041
      %v3562 = vpop.f32.mrb[0].mxu0
      %v3563 = vadd.f32 %v2930, %v3562
      %v3564 = vpop.f32.mrb[0].mxu0
      %3565 = vmatprep.mubr.f32.mxu0 0.0
      %3566 = vmatmul.mubr.f32.gmra.mrb[0].mxu0 %v3044
      %v3567 = vpop.f32.mrb[0].mxu0
      %v3568 = vadd.f32 %v2930, %v3567
      %v3569 = vpop.f32.mrb[0].mxu0
      %3570 = vmatprep.mubr.f32.mxu0 0.0
      %3571 = vmatmul.mubr.f32.gmra.mrb[0].mxu0 %v3047
      %v3572 = vpop.f32.mrb[0].mxu0
      %v3573 = vadd.f32 %v2930, %v3572
      %v3574 = vpop.f32.mrb[0].mxu0
      %3575 = vmatprep.mubr.f32.mxu0 0.0
      %3576 = vmatmul.mubr.f32.gmra.mrb[0].mxu0 %v3050
      %v3577 = vpop.f32.mrb[0].mxu0
      %v3578 = vadd.f32 %v2930, %v3577
      %v3579 = vpop.f32.mrb[0].mxu0
      %3580 = vmatprep.mubr.f32.mxu0 0.0
      %3581 = vmatmul.mubr.f32.gmra.mrb[0].mxu0 %v3053
      %v3582 = vpop.f32.mrb[0].mxu0
      %v3583 = vadd.f32 %v2930, %v3582
      %v3584 = vpop.f32.mrb[0].mxu0
      %3585 = vmatprep.mubr.f32.mxu0 0.0
      %3586 = vmatmul.mubr.f32.gmra.mrb[0].mxu0 %v3056
      %v3587 = vpop.f32.mrb[0].mxu0
      %v3588 = vadd.f32 %v2930, %v3587
      %v3589 = vpop.f32.mrb[0].mxu0
      %3590 = vmatprep.mubr.f32.mxu0 0.0
      %3591 = vmatmul.mubr.f32.gmra.mrb[0].mxu0 %v3059
      %v3592 = vpop.f32.mrb[0].mxu0
      %v3593 = vadd.f32 %v2930, %v3592
      %v3594 = vpop.f32.mrb[0].mxu0
      %3595 = vmatprep.mubr.f32.mxu0 0.0
      %3596 = vmatmul.mubr.f32.gmra.mrb[0].mxu0 %v3062
      %v3597 = vpop.f32.mrb[0].mxu0
      %v3598 = vadd.f32 %v2930, %v3597
      %v3599 = vpop.f32.mrb[0].mxu0
      %3600 = vmatprep.mubr.f32.mxu0 0.0
      %3601 = vmatmul.mubr.f32.gmra.mrb[0].mxu0 %v3065
      %v3602 = vpop.f32.mrb[0].mxu0
      %v3603 = vadd.f32 %v2930, %v3602
      %v3604 = vpop.f32.mrb[0].mxu0
      %3605 = vmatprep.mubr.f32.mxu0 0.0
      %3606 = vmatmul.mubr.f32.gmra.mrb[0].mxu0 %v3068
      %v3607 = vpop.f32.mrb[0].mxu0
      %v3608 = vadd.f32 %v2930, %v3607
      %v3609 = vpop.f32.mrb[0].mxu0
      %3610 = vmatprep.mubr.f32.mxu0 0.0
      %3611 = vmatmul.mubr.f32.gmra.mrb[0].mxu0 %v3071
      %v3612 = vpop.f32.mrb[0].mxu0
      %v3613 = vadd.f32 %v2930, %v3612
      %v3614 = vpop.f32.mrb[0].mxu0
      %3615 = vmatprep.mubr.f32.mxu0 0.0
      %3616 = vmatmul.mubr.f32.gmra.mrb[0].mxu0 %v3074
      %v3617 = vpop.f32.mrb[0].mxu0
      %v3618 = vadd.f32 %v2930, %v3617
      %v3619 = vpop.f32.mrb[0].mxu0
      %3620 = vmatprep.mubr.f32.mxu0 0.0
      %3621 = vmatmul.mubr.f32.gmra.mrb[0].mxu0 %v3077
      %v3622 = vpop.f32.mrb[0].mxu0
      %v3623 = vadd.f32 %v2930, %v3622
      %v3624 = vpop.f32.mrb[0].mxu0
      %3625 = vmatprep.mubr.f32.mxu0 0.0
      %3626 = vmatmul.mubr.f32.gmra.mrb[0].mxu0 %v3080
      %v3627 = vpop.f32.mrb[0].mxu0
      %v3628 = vadd.f32 %v2930, %v3627
      %v3629 = vpop.f32.mrb[0].mxu0
      %3630 = vmatprep.mubr.f32.mxu0 0.0
      %3631 = vmatmul.mubr.f32.gmra.mrb[0].mxu0 %v3083
      %v3632 = vpop.f32.mrb[0].mxu0
      %v3633 = vadd.f32 %v2930, %v3632
      %v3634 = vpop.f32.mrb[0].mxu0
      %3635 = vmatprep.mubr.f32.mxu0 0.0
      %3636 = vmatmul.mubr.f32.gmra.mrb[0].mxu0 %v3086
      %v3637 = vpop.f32.mrb[0].mxu0
      %v3638 = vadd.f32 %v2930, %v3637
      %v3639 = vpop.f32.mrb[0].mxu0
      %3640 = vmatprep.mubr.f32.mxu0 0.0
      %3641 = vmatmul.mubr.f32.gmra.mrb[0].mxu0 %v3089
      %v3642 = vpop.f32.mrb[0].mxu0
      %v3643 = vadd.f32 %v2930, %v3642
      %v3644 = vpop.f32.mrb[0].mxu0
      %3645 = vmatprep.mubr.f32.mxu0 0.0
      %3646 = vmatmul.mubr.f32.gmra.mrb[0].mxu0 %v3092
      %v3647 = vpop.f32.mrb[0].mxu0
      %v3648 = vadd.f32 %v2930, %v3647
      %v3649 = vpop.f32.mrb[0].mxu0
      %3650 = vmatprep.mubr.f32.mxu0 0.0
      %3651 = vmatmul.mubr.f32.gmra.mrb[0].mxu0 %v3095
      %v3652 = vpop.f32.mrb[0].mxu0
      %v3653 = vadd.f32 %v2930, %v3652
      %v3654 = vpop.f32.mrb[0].mxu0
      %3655 = vmatprep.mubr.f32.mxu0 0.0
      %3656 = vmatmul.mubr.f32.gmra.mrb[0].mxu0 %v3098
      %v3657 = vpop.f32.mrb[0].mxu0
      %v3658 = vadd.f32 %v2930, %v3657
      %v3659 = vpop.f32.mrb[0].mxu0
      %3660 = vmatprep.mubr.f32.mxu0 0.0
      %3661 = vmatmul.mubr.f32.gmra.mrb[0].mxu0 %v3101
      %v3662 = vpop.f32.mrb[0].mxu0
      %v3663 = vadd.f32 %v2930, %v3662
      %v3664 = vpop.f32.mrb[0].mxu0
      %3665 = vmatprep.mubr.f32.mxu0 0.0
      %3666 = vmatmul.mubr.f32.gmra.mrb[0].mxu0 %v3104
      %v3667 = vpop.f32.mrb[0].mxu0
      %v3668 = vadd.f32 %v2930, %v3667
      %v3669 = vpop.f32.mrb[0].mxu0
      %3670 = vmatprep.mubr.f32.mxu0 0.0
      %3671 = vmatmul.mubr.f32.gmra.mrb[0].mxu0 %v3107
      %v3672 = vpop.f32.mrb[0].mxu0
      %v3673 = vadd.f32 %v2930, %v3672
      %v3674 = vpop.f32.mrb[0].mxu0
      %3675 = vmatprep.mubr.f32.mxu0 0.0
      %3676 = vmatmul.mubr.f32.gmra.mrb[0].mxu0 %v3110
      %v3677 = vpop.f32.mrb[0].mxu0
      %v3678 = vadd.f32 %v2930, %v3677
      %v3679 = vpop.f32.mrb[0].mxu0
      %3680 = vmatprep.mubr.f32.mxu0 0.0
      %3681 = vmatmul.mubr.f32.gmra.mrb[0].mxu0 %v3113
      %v3682 = vpop.f32.mrb[0].mxu0
      %v3683 = vadd.f32 %v2930, %v3682
      %v3684 = vpop.f32.mrb[0].mxu0
      %3685 = vmatprep.mubr.f32.mxu0 0.0
      %3686 = vmatmul.mubr.f32.gmra.mrb[0].mxu0 %v3116
      %v3687 = vpop.f32.mrb[0].mxu0
      %v3688 = vadd.f32 %v2930, %v3687
      %v3689 = vpop.f32.mrb[0].mxu0
      %3690 = vmatprep.mubr.f32.mxu0 0.0
      %3691 = vmatmul.mubr.f32.gmra.mrb[0].mxu0 %v3119
      %v3692 = vpop.f32.mrb[0].mxu0
      %v3693 = vadd.f32 %v2930, %v3692
      %v3694 = vpop.f32.mrb[0].mxu0
      %3695 = vmatprep.mubr.f32.mxu0 0.0
      %3696 = vmatmul.mubr.f32.gmra.mrb[0].mxu0 %v3122
      %v3697 = vpop.f32.mrb[0].mxu0
      %v3698 = vadd.f32 %v2930, %v3697
      %v3699 = vpop.f32.mrb[0].mxu0
      %3700 = vmatprep.mubr.f32.mxu0 0.0
      %3701 = vmatmul.mubr.f32.gmra.mrb[0].mxu0 %v3125
      %v3702 = vpop.f32.mrb[0].mxu0
      %v3703 = vadd.f32 %v2930, %v3702
      %v3704 = vpop.f32.mrb[0].mxu0
      %3705 = vmatprep.mubr.f32.mxu0 0.0
      %3706 = vmatmul.mubr.f32.gmra.mrb[0].mxu0 %v3128
      %v3707 = vpop.f32.mrb[0].mxu0
      %v3708 = vadd.f32 %v2930, %v3707
      %v3709 = vpop.f32.mrb[0].mxu0
      %3710 = vmatprep.mubr.f32.mxu0 0.0
      %3711 = vmatmul.mubr.f32.gmra.mrb[0].mxu0 %v3131
      %v3712 = vpop.f32.mrb[0].mxu0
      %v3713 = vadd.f32 %v2930, %v3712
      %v3714 = vpop.f32.mrb[0].mxu0
      %3715 = vmatprep.mubr.f32.mxu0 0.0
      %3716 = vmatmul.mubr.f32.gmra.mrb[0].mxu0 %v3134
      %v3717 = vpop.f32.mrb[0].mxu0
      %v3718 = vadd.f32 %v2930, %v3717
      %v3719 = vpop.f32.mrb[0].mxu0
      %3720 = vmatprep.mubr.f32.mxu0 0.0
      %3721 = vmatmul.mubr.f32.gmra.mrb[0].mxu0 %v3137
      %v3722 = vpop.f32.mrb[0].mxu0
      %v3723 = vadd.f32 %v2930, %v3722
      %v3724 = vpop.f32.mrb[0].mxu0
      %3725 = vmatprep.mubr.f32.mxu0 0.0
      %3726 = vmatmul.mubr.f32.gmra.mrb[0].mxu0 %v3140
      %v3727 = vpop.f32.mrb[0].mxu0
      %v3728 = vadd.f32 %v2930, %v3727
      %v3729 = vpop.f32.mrb[0].mxu0
      %3730 = vmatprep.mubr.f32.mxu0 0.0
      %3731 = vmatmul.mubr.f32.gmra.mrb[0].mxu0 %v3143
      %v3732 = vpop.f32.mrb[0].mxu0
      %v3733 = vadd.f32 %v2930, %v3732
      %v3734 = vpop.f32.mrb[0].mxu0
      %3735 = vmatprep.mubr.f32.mxu0 0.0
      %3736 = vmatmul.mubr.f32.gmra.mrb[0].mxu0 %v3146
      %v3737 = vpop.f32.mrb[0].mxu0
      %v3738 = vadd.f32 %v2930, %v3737
      %v3739 = vpop.f32.mrb[0].mxu0
      %3740 = vmatprep.mubr.f32.mxu0 0.0
      %3741 = vmatmul.mubr.f32.gmra.mrb[0].mxu0 %v3149
      %v3742 = vpop.f32.mrb[0].mxu0
      %v3743 = vadd.f32 %v2930, %v3742
      %v3744 = vpop.f32.mrb[0].mxu0
      %3745 = vmatprep.mubr.f32.mxu0 0.0
      %3746 = vmatmul.mubr.f32.gmra.mrb[0].mxu0 %v3152
      %v3747 = vpop.f32.mrb[0].mxu0
      %v3748 = vadd.f32 %v2930, %v3747
      %v3749 = vpop.f32.mrb[0].mxu0
      %3750 = vmatprep.mubr.f32.mxu0 0.0
      %3751 = vmatmul.mubr.f32.gmra.mrb[0].mxu0 %v3155
      %v3752 = vpop.f32.mrb[0].mxu0
      %v3753 = vadd.f32 %v2930, %v3752
      %v3754 = vpop.f32.mrb[0].mxu0
      %3755 = vmatprep.mubr.f32.mxu0 0.0
      %3756 = vmatmul.mubr.f32.gmra.mrb[0].mxu0 %v3158
      %v3757 = vpop.f32.mrb[0].mxu0
      %v3758 = vadd.f32 %v2930, %v3757
      %v3759 = vpop.f32.mrb[0].mxu0
      %3760 = vmatprep.mubr.f32.mxu0 0.0
      %3761 = vmatmul.mubr.f32.gmra.mrb[0].mxu0 %v3161
      %v3762 = vpop.f32.mrb[0].mxu0
      %v3763 = vadd.f32 %v2930, %v3762
      %v3764 = vpop.f32.mrb[0].mxu0
      %3765 = vmatprep.mubr.f32.mxu0 0.0
      %3766 = vmatmul.mubr.f32.gmra.mrb[0].mxu0 %v3164
      %v3767 = vpop.f32.mrb[0].mxu0
      %v3768 = vadd.f32 %v2930, %v3767
      %v3769 = vpop.f32.mrb[0].mxu0
      %3770 = vmatprep.mubr.f32.mxu0 0.0
      %3771 = vmatmul.mubr.f32.gmra.mrb[0].mxu0 %v3167
      %v3772 = vpop.f32.mrb[0].mxu0
      %v3773 = vadd.f32 %v2930, %v3772
      %v3774 = vpop.f32.mrb[0].mxu0
      %3775 = vmatprep.mubr.f32.mxu0 0.0
      %3776 = vmatmul.mubr.f32.gmra.mrb[0].mxu0 %v3170
      %v3777 = vpop.f32.mrb[0].mxu0
      %v3778 = vadd.f32 %v2930, %v3777
      %v3779 = vpop.f32.mrb[0].mxu0
      %3780 = vmatprep.mubr.f32.mxu0 0.0
      %3781 = vmatmul.mubr.f32.gmra.mrb[0].mxu0 %v3173
      %v3782 = vpop.f32.mrb[0].mxu0
      %v3783 = vadd.f32 %v2930, %v3782
      %v3784 = vpop.f32.mrb[0].mxu0
      %3785 = vmatprep.mubr.f32.mxu0 0.0
      %3786 = vmatmul.mubr.f32.gmra.mrb[0].mxu0 %v3176
      %v3787 = vpop.f32.mrb[0].mxu0
      %v3788 = vadd.f32 %v2930, %v3787
      %v3789 = vpop.f32.mrb[0].mxu0
      %3790 = vmatprep.mubr.f32.mxu0 0.0
      %3791 = vmatmul.mubr.f32.gmra.mrb[0].mxu0 %v3179
      %v3792 = vpop.f32.mrb[0].mxu0
      %v3793 = vadd.f32 %v2930, %v3792
      %v3794 = vpop.f32.mrb[0].mxu0
      %3795 = vmatprep.mubr.f32.mxu0 0.0
      %3796 = vmatmul.mubr.f32.gmra.mrb[0].mxu0 %v3182
      %v3797 = vpop.f32.mrb[0].mxu0
      %v3798 = vadd.f32 %v2930, %v3797
      %v3799 = vpop.f32.mrb[0].mxu0
      %3800 = vmatprep.mubr.f32.mxu0 0.0
      %3801 = vmatmul.mubr.f32.gmra.mrb[0].mxu0 %v3185
      %v3802 = vpop.f32.mrb[0].mxu0
      %v3803 = vadd.f32 %v2930, %v3802
      %v3804 = vpop.f32.mrb[0].mxu0
      %3805 = vmatprep.mubr.f32.mxu0 0.0
      %3806 = vmatmul.mubr.f32.gmra.mrb[0].mxu0 %v3188
      %v3807 = vpop.f32.mrb[0].mxu0
      %v3808 = vadd.f32 %v2930, %v3807
      %v3809 = vpop.f32.mrb[0].mxu0
      %3810 = vmatprep.mubr.f32.mxu0 0.0
      %3811 = vmatmul.mubr.f32.gmra.mrb[0].mxu0 %v3191
      %v3812 = vpop.f32.mrb[0].mxu0
      %v3813 = vadd.f32 %v2930, %v3812
      %v3814 = vpop.f32.mrb[0].mxu0
      %3815 = vmatprep.mubr.f32.mxu0 0.0
      %3816 = vmatmul.mubr.f32.gmra.mrb[0].mxu0 %v3194
      %v3817 = vpop.f32.mrb[0].mxu0
      %v3818 = vadd.f32 %v2930, %v3817
      %v3819 = vpop.f32.mrb[0].mxu0
      %3820 = vmatprep.mubr.f32.mxu0 0.0
      %3821 = vmatmul.mubr.f32.gmra.mrb[0].mxu0 %v3197
      %v3822 = vpop.f32.mrb[0].mxu0
      %v3823 = vadd.f32 %v2930, %v3822
      %v3824 = vpop.f32.mrb[0].mxu0
      %3825 = vmatprep.mubr.f32.mxu0 0.0
      %3826 = vmatmul.mubr.f32.gmra.mrb[0].mxu0 %v3200
      %v3827 = vpop.f32.mrb[0].mxu0
      %v3828 = vadd.f32 %v2930, %v3827
      %v3829 = vpop.f32.mrb[0].mxu0
      %3830 = vmatprep.mubr.f32.mxu0 0.0
      %3831 = vmatmul.mubr.f32.gmra.mrb[0].mxu0 %v3203
      %v3832 = vpop.f32.mrb[0].mxu0
      %v3833 = vadd.f32 %v2930, %v3832
      %v3834 = vpop.f32.mrb[0].mxu0
      %3835 = vmatprep.mubr.f32.mxu0 0.0
      %3836 = vmatmul.mubr.f32.gmra.mrb[0].mxu0 %v3206
      %v3837 = vpop.f32.mrb[0].mxu0
      %v3838 = vadd.f32 %v2930, %v3837
      %v3839 = vpop.f32.mrb[0].mxu0
      %3840 = vmatprep.mubr.f32.mxu0 0.0
      %3841 = vmatmul.mubr.f32.gmra.mrb[0].mxu0 %v3209
      %v3842 = vpop.f32.mrb[0].mxu0
      %v3843 = vadd.f32 %v2930, %v3842
      %v3844 = vpop.f32.mrb[0].mxu0
      %3845 = vmatprep.mubr.f32.mxu0 0.0
      %3846 = vmatmul.mubr.f32.gmra.mrb[0].mxu0 %v3212
      %v3847 = vpop.f32.mrb[0].mxu0
      %v3848 = vadd.f32 %v2930, %v3847
      %v3849 = vpop.f32.mrb[0].mxu0
      %3850 = vmatprep.mubr.f32.mxu0 0.0
      %3851 = vmatmul.mubr.f32.gmra.mrb[0].mxu0 %v3215
      %v3852 = vpop.f32.mrb[0].mxu0
      %v3853 = vadd.f32 %v2930, %v3852
      %v3854 = vpop.f32.mrb[0].mxu0
      %3855 = vmatprep.mubr.f32.mxu0 0.0
      %3856 = vmatmul.mubr.f32.gmra.mrb[0].mxu0 %v3218
      %v3857 = vpop.f32.mrb[0].mxu0
      %v3858 = vadd.f32 %v2930, %v3857
      %v3859 = vpop.f32.mrb[0].mxu0
      %3860 = vmatprep.mubr.f32.mxu0 0.0
      %3861 = vmatmul.mubr.f32.gmra.mrb[0].mxu0 %v3221
      %v3862 = vpop.f32.mrb[0].mxu0
      %v3863 = vadd.f32 %v2930, %v3862
      %v3864 = vpop.f32.mrb[0].mxu0
      %3865 = vmatprep.mubr.f32.mxu0 0.0
      %3866 = vmatmul.mubr.f32.gmra.mrb[0].mxu0 %v3224
      %v3867 = vpop.f32.mrb[0].mxu0
      %v3868 = vadd.f32 %v2930, %v3867
      %v3869 = vpop.f32.mrb[0].mxu0
      %3870 = vmatprep.mubr.f32.mxu0 0.0
      %3871 = vmatmul.mubr.f32.gmra.mrb[0].mxu0 %v3227
      %v3872 = vpop.f32.mrb[0].mxu0
      %v3873 = vadd.f32 %v2930, %v3872
      %v3874 = vpop.f32.mrb[0].mxu0
      %3875 = vmatprep.mubr.f32.mxu0 0.0
      %3876 = vmatmul.mubr.f32.gmra.mrb[0].mxu0 %v3230
      %v3877 = vpop.f32.mrb[0].mxu0
      %v3878 = vadd.f32 %v2930, %v3877
      %v3879 = vpop.f32.mrb[0].mxu0
      %3880 = vmatprep.mubr.f32.mxu0 0.0
      %3881 = vmatmul.mubr.f32.gmra.mrb[0].mxu0 %v3233
      %v3882 = vpop.f32.mrb[0].mxu0
      %v3883 = vadd.f32 %v2930, %v3882
      %v3884 = vpop.f32.mrb[0].mxu0
      %3885 = vmatprep.mubr.f32.mxu0 0.0
      %3886 = vmatmul.mubr.f32.gmra.mrb[0].mxu0 %v3236
      %v3887 = vpop.f32.mrb[0].mxu0
      %v3888 = vadd.f32 %v2930, %v3887
      %v3889 = vpop.f32.mrb[0].mxu0
      %3890 = vmatprep.mubr.f32.mxu0 0.0
      %3891 = vmatmul.mubr.f32.gmra.mrb[0].mxu0 %v3239
      %v3892 = vpop.f32.mrb[0].mxu0
      %v3893 = vadd.f32 %v2930, %v3892
      %v3894 = vpop.f32.mrb[0].mxu0
      %3895 = vmatprep.mubr.f32.mxu0 0.0
      %3896 = vmatmul.mubr.f32.gmra.mrb[0].mxu0 %v3242
      %v3897 = vpop.f32.mrb[0].mxu0
      %v3898 = vadd.f32 %v2930, %v3897
      %v3899 = vpop.f32.mrb[0].mxu0
      %3900 = vmatprep.mubr.f32.mxu0 0.0
      %3901 = vmatmul.mubr.f32.gmra.mrb[0].mxu0 %v3245
      %v3902 = vpop.f32.mrb[0].mxu0
      %v3903 = vadd.f32 %v2930, %v3902
      %v3904 = vpop.f32.mrb[0].mxu0
      %3905 = vmatprep.mubr.f32.mxu0 0.0
      %3906 = vmatmul.mubr.f32.gmra.mrb[0].mxu0 %v3248
      %v3907 = vpop.f32.mrb[0].mxu0
      %v3908 = vadd.f32 %v2930, %v3907
      %v3909 = vpop.f32.mrb[0].mxu0
      %3910 = vmatprep.mubr.f32.mxu0 0.0
      %3911 = vmatmul.mubr.f32.gmra.mrb[0].mxu0 %v3251
      %v3912 = vpop.f32.mrb[0].mxu0
      %v3913 = vadd.f32 %v2930, %v3912
      %v3914 = vpop.f32.mrb[0].mxu0
      %3915 = vmatprep.mubr.f32.mxu0 0.0
      %3916 = vmatmul.mubr.f32.gmra.mrb[0].mxu0 %v3254
      %v3917 = vpop.f32.mrb[0].mxu0
      %v3918 = vadd.f32 %v2930, %v3917
      %v3919 = vpop.f32.mrb[0].mxu0
      %3920 = vmatprep.mubr.f32.mxu0 0.0
      %3921 = vmatmul.mubr.f32.gmra.mrb[0].mxu0 %v3257
      %v3922 = vpop.f32.mrb[0].mxu0
      %v3923 = vadd.f32 %v2930, %v3922
      %v3924 = vpop.f32.mrb[0].mxu0
      %3925 = vmatprep.mubr.f32.mxu0 0.0
      %3926 = vmatmul.mubr.f32.gmra.mrb[0].mxu0 %v3260
      %v3927 = vpop.f32.mrb[0].mxu0
      %v3928 = vadd.f32 %v2930, %v3927
      %v3929 = vpop.f32.mrb[0].mxu0
      %3930 = vmatprep.mubr.f32.mxu0 0.0
      %3931 = vmatmul.mubr.f32.gmra.mrb[0].mxu0 %v3263
      %v3932 = vpop.f32.mrb[0].mxu0
      %v3933 = vadd.f32 %v2930, %v3932
      %v3934 = vpop.f32.mrb[0].mxu0
      %3935 = vmatprep.mubr.f32.mxu0 0.0
      %3936 = vmatmul.mubr.f32.gmra.mrb[0].mxu0 %v3266
      %v3937 = vpop.f32.mrb[0].mxu0
      %v3938 = vadd.f32 %v2930, %v3937
      %v3939 = vpop.f32.mrb[0].mxu0
      %3940 = vmatprep.mubr.f32.mxu0 0.0
      %3941 = vmatmul.mubr.f32.gmra.mrb[0].mxu0 %v3269
      %v3942 = vpop.f32.mrb[0].mxu0
      %v3943 = vadd.f32 %v2930, %v3942
      %v3944 = vpop.f32.mrb[0].mxu0
      %3945 = vmatprep.mubr.f32.mxu0 0.0
      %3946 = vmatmul.mubr.f32.gmra.mrb[0].mxu0 %v3272
      %v3947 = vpop.f32.mrb[0].mxu0
      %v3948 = vadd.f32 %v2930, %v3947
      %v3949 = vpop.f32.mrb[0].mxu0
      %3950 = vmatprep.mubr.f32.mxu0 0.0
      %3951 = vmatmul.mubr.f32.gmra.mrb[0].mxu0 %v3275
      %v3952 = vpop.f32.mrb[0].mxu0
      %v3953 = vadd.f32 %v2930, %v3952
      %v3954 = vpop.f32.mrb[0].mxu0
      %3955 = vmatprep.mubr.f32.mxu0 0.0
      %3956 = vmatmul.mubr.f32.gmra.mrb[0].mxu0 %v3278
      %v3957 = vpop.f32.mrb[0].mxu0
      %v3958 = vadd.f32 %v2930, %v3957
      %v3959 = vpop.f32.mrb[0].mxu0
      %3960 = vmatprep.mubr.f32.mxu0 0.0
      %3961 = vmatmul.mubr.f32.gmra.mrb[0].mxu0 %v3281
      %v3962 = vpop.f32.mrb[0].mxu0
      %v3963 = vadd.f32 %v2930, %v3962
      %v3964 = vpop.f32.mrb[0].mxu0
      %3965 = vmatprep.mubr.f32.mxu0 0.0
      %3966 = vmatmul.mubr.f32.gmra.mrb[0].mxu0 %v3284
      %v3967 = vpop.f32.mrb[0].mxu0
      %v3968 = vadd.f32 %v2930, %v3967
      %v3969 = vpop.f32.mrb[0].mxu0
      %3970 = vmatprep.mubr.f32.mxu0 0.0
      %3971 = vmatmul.mubr.f32.gmra.mrb[0].mxu0 %v3287
      %v3972 = vpop.f32.mrb[0].mxu0
      %v3973 = vadd.f32 %v2930, %v3972
      %v3974 = vpop.f32.mrb[0].mxu0
      %3975 = vmatprep.mubr.f32.mxu0 0.0
      %3976 = vmatmul.mubr.f32.gmra.mrb[0].mxu0 %v3290
      %v3977 = vpop.f32.mrb[0].mxu0
      %v3978 = vadd.f32 %v2930, %v3977
      %v3979 = vpop.f32.mrb[0].mxu0
      %3980 = vmatprep.mubr.f32.mxu0 0.0
      %3981 = vmatmul.mubr.f32.gmra.mrb[0].mxu0 %v3293
      %v3982 = vpop.f32.mrb[0].mxu0
      %v3983 = vadd.f32 %v2930, %v3982
      %v3984 = vpop.f32.mrb[0].mxu0
      %3985 = vmatprep.mubr.f32.mxu0 0.0
      %3986 = vmatmul.mubr.f32.gmra.mrb[0].mxu0 %v3296
      %v3987 = vpop.f32.mrb[0].mxu0
      %v3988 = vadd.f32 %v2930, %v3987
      %v3989 = vpop.f32.mrb[0].mxu0
      %3990 = vmatprep.mubr.f32.mxu0 0.0
      %3991 = vmatmul.mubr.f32.gmra.mrb[0].mxu0 %v3299
      %v3992 = vpop.f32.mrb[0].mxu0
      %v3993 = vadd.f32 %v2930, %v3992
      %v3994 = vpop.f32.mrb[0].mxu0
      %3995 = vmatprep.mubr.f32.mxu0 0.0
      %3996 = vmatmul.mubr.f32.gmra.mrb[0].mxu0 %v3302
      %v3997 = vpop.f32.mrb[0].mxu0
      %v3998 = vadd.f32 %v2930, %v3997
      %v3999 = vpop.f32.mrb[0].mxu0
      %4000 = vmatprep.mubr.f32.mxu0 0.0
      %4001 = vmatmul.mubr.f32.gmra.mrb[0].mxu0 %v3305
      %v4002 = vpop.f32.mrb[0].mxu0
      %v4003 = vadd.f32 %v2930, %v4002
      %v4004 = vpop.f32.mrb[0].mxu0
      %4005 = vmatprep.mubr.f32.mxu0 0.0
      %4006 = vmatmul.mubr.f32.gmra.mrb[0].mxu0 %v3308
      %v4007 = vpop.f32.mrb[0].mxu0
      %v4008 = vadd.f32 %v2930, %v4007
      %v4009 = vpop.f32.mrb[0].mxu0
      %4010 = vmatprep.mubr.f32.mxu0 0.0
      %4011 = vmatmul.mubr.f32.gmra.mrb[0].mxu0 %v3311
      %v4012 = vpop.f32.mrb[0].mxu0
      %v4013 = vadd.f32 %v2930, %v4012
      %v4014 = vpop.f32.mrb[0].mxu0
      %4015 = vmatprep.mubr.f32.mxu0 0.0
      %4016 = vmatmul.mubr.f32.gmra.mrb[0].mxu0 %v3314
      %v4017 = vpop.f32.mrb[0].mxu0
      %v4018 = vadd.f32 %v2930, %v4017
      %v4019 = vpop.f32.mrb[0].mxu0
      %4020 = vdwg.mxu0
      %v4021 = vmax.f32 %v3383, 0.0
      %v4022 = vmax.f32 %v3388, 0.0
      %v4023 = vmax.f32 %v3393, 0.0
      %v4024 = vmax.f32 %v3398, 0.0
      %v4025 = vmax.f32 %v3403, 0.0
      %v4026 = vmax.f32 %v3408, 0.0
      %v4027 = vmax.f32 %v3413, 0.0
      %v4028 = vmax.f32 %v3418, 0.0
      %v4029 = vmax.f32 %v3423, 0.0
      %v4030 = vmax.f32 %v3428, 0.0
      %v4031 = vmax.f32 %v3433, 0.0
      %v4032 = vmax.f32 %v3438, 0.0
      %v4033 = vmax.f32 %v3443, 0.0
      %v4034 = vmax.f32 %v3448, 0.0
      %v4035 = vmax.f32 %v3453, 0.0
      %v4036 = vmax.f32 %v3458, 0.0
      %v4037 = vmax.f32 %v3463, 0.0
      %v4038 = vmax.f32 %v3468, 0.0
      %v4039 = vmax.f32 %v3473, 0.0
      %v4040 = vmax.f32 %v3478, 0.0
      %v4041 = vmax.f32 %v3483, 0.0
      %v4042 = vmax.f32 %v3488, 0.0
      %v4043 = vmax.f32 %v3493, 0.0
      %v4044 = vmax.f32 %v3498, 0.0
      %v4045 = vmax.f32 %v3503, 0.0
      %v4046 = vmax.f32 %v3508, 0.0
      %v4047 = vmax.f32 %v3513, 0.0
      %v4048 = vmax.f32 %v3518, 0.0
      %v4049 = vmax.f32 %v3523, 0.0
      %v4050 = vmax.f32 %v3528, 0.0
      %v4051 = vmax.f32 %v3533, 0.0
      %v4052 = vmax.f32 %v3538, 0.0
      %v4053 = vmax.f32 %v3543, 0.0
      %v4054 = vmax.f32 %v3548, 0.0
      %v4055 = vmax.f32 %v3553, 0.0
      %v4056 = vmax.f32 %v3558, 0.0
      %v4057 = vmax.f32 %v3563, 0.0
      %v4058 = vmax.f32 %v3568, 0.0
      %v4059 = vmax.f32 %v3573, 0.0
      %v4060 = vmax.f32 %v3578, 0.0
      %v4061 = vmax.f32 %v3583, 0.0
      %v4062 = vmax.f32 %v3588, 0.0
      %v4063 = vmax.f32 %v3593, 0.0
      %v4064 = vmax.f32 %v3598, 0.0
      %v4065 = vmax.f32 %v3603, 0.0
      %v4066 = vmax.f32 %v3608, 0.0
      %v4067 = vmax.f32 %v3613, 0.0
      %v4068 = vmax.f32 %v3618, 0.0
      %v4069 = vmax.f32 %v3623, 0.0
      %v4070 = vmax.f32 %v3628, 0.0
      %v4071 = vmax.f32 %v3633, 0.0
      %v4072 = vmax.f32 %v3638, 0.0
      %v4073 = vmax.f32 %v3643, 0.0
      %v4074 = vmax.f32 %v3648, 0.0
      %v4075 = vmax.f32 %v3653, 0.0
      %v4076 = vmax.f32 %v3658, 0.0
      %v4077 = vmax.f32 %v3663, 0.0
      %v4078 = vmax.f32 %v3668, 0.0
      %v4079 = vmax.f32 %v3673, 0.0
      %v4080 = vmax.f32 %v3678, 0.0
      %v4081 = vmax.f32 %v3683, 0.0
      %v4082 = vmax.f32 %v3688, 0.0
      %v4083 = vmax.f32 %v3693, 0.0
      %v4084 = vmax.f32 %v3698, 0.0
      %v4085 = vmax.f32 %v3703, 0.0
      %v4086 = vmax.f32 %v3708, 0.0
      %v4087 = vmax.f32 %v3713, 0.0
      %v4088 = vmax.f32 %v3718, 0.0
      %v4089 = vmax.f32 %v3723, 0.0
      %v4090 = vmax.f32 %v3728, 0.0
      %v4091 = vmax.f32 %v3733, 0.0
      %v4092 = vmax.f32 %v3738, 0.0
      %v4093 = vmax.f32 %v3743, 0.0
      %v4094 = vmax.f32 %v3748, 0.0
      %v4095 = vmax.f32 %v3753, 0.0
      %v4096 = vmax.f32 %v3758, 0.0
      %v4097 = vmax.f32 %v3763, 0.0
      %v4098 = vmax.f32 %v3768, 0.0
      %v4099 = vmax.f32 %v3773, 0.0
      %v4100 = vmax.f32 %v3778, 0.0
      %v4101 = vmax.f32 %v3783, 0.0
      %v4102 = vmax.f32 %v3788, 0.0
      %v4103 = vmax.f32 %v3793, 0.0
      %v4104 = vmax.f32 %v3798, 0.0
      %v4105 = vmax.f32 %v3803, 0.0
      %v4106 = vmax.f32 %v3808, 0.0
      %v4107 = vmax.f32 %v3813, 0.0
      %v4108 = vmax.f32 %v3818, 0.0
      %v4109 = vmax.f32 %v3823, 0.0
      %v4110 = vmax.f32 %v3828, 0.0
      %v4111 = vmax.f32 %v3833, 0.0
      %v4112 = vmax.f32 %v3838, 0.0
      %v4113 = vmax.f32 %v3843, 0.0
      %v4114 = vmax.f32 %v3848, 0.0
      %v4115 = vmax.f32 %v3853, 0.0
      %v4116 = vmax.f32 %v3858, 0.0
      %v4117 = vmax.f32 %v3863, 0.0
      %v4118 = vmax.f32 %v3868, 0.0
      %v4119 = vmax.f32 %v3873, 0.0
      %v4120 = vmax.f32 %v3878, 0.0
      %v4121 = vmax.f32 %v3883, 0.0
      %v4122 = vmax.f32 %v3888, 0.0
      %v4123 = vmax.f32 %v3893, 0.0
      %v4124 = vmax.f32 %v3898, 0.0
      %v4125 = vmax.f32 %v3903, 0.0
      %v4126 = vmax.f32 %v3908, 0.0
      %v4127 = vmax.f32 %v3913, 0.0
      %v4128 = vmax.f32 %v3918, 0.0
      %v4129 = vmax.f32 %v3923, 0.0
      %v4130 = vmax.f32 %v3928, 0.0
      %v4131 = vmax.f32 %v3933, 0.0
      %v4132 = vmax.f32 %v3938, 0.0
      %v4133 = vmax.f32 %v3943, 0.0
      %v4134 = vmax.f32 %v3948, 0.0
      %v4135 = vmax.f32 %v3953, 0.0
      %v4136 = vmax.f32 %v3958, 0.0
      %v4137 = vmax.f32 %v3963, 0.0
      %v4138 = vmax.f32 %v3968, 0.0
      %v4139 = vmax.f32 %v3973, 0.0
      %v4140 = vmax.f32 %v3978, 0.0
      %v4141 = vmax.f32 %v3983, 0.0
      %v4142 = vmax.f32 %v3988, 0.0
      %v4143 = vmax.f32 %v3993, 0.0
      %v4144 = vmax.f32 %v3998, 0.0
      %v4145 = vmax.f32 %v4003, 0.0
      %v4146 = vmax.f32 %v4008, 0.0
      %v4147 = vmax.f32 %v4013, 0.0
      %v4148 = vmax.f32 %v4018, 0.0
      %v4149 = vld [vmem:[%s7] sm:$0xff]
      %v4150 = vld [vmem:[%s7 + $0x8] sm:$0xff]
      %v4151 = vld [vmem:[%s7 + $0x10] sm:$0xff]
      %v4152 = vld [vmem:[%s7 + $0x18] sm:$0xff]
      %v4153 = vld [vmem:[%s8] sm:$0x1]
      %v4155 = vlaneseq
      %v4156 = vshrl.u32 %v4155, 7
      %v4157 = vsub.s32 0, %v4156
      %v4158 = vrot.slane %v4153, %v4157
      %v4161 = vsel %vm475, %v4021, 0
      %v4164 = vsel %vm475, %v4022, 0
      %v4167 = vsel %vm475, %v4023, 0
      %v4170 = vsel %vm475, %v4024, 0
      %v4173 = vsel %vm475, %v4025, 0
      %v4176 = vsel %vm475, %v4026, 0
      %v4179 = vsel %vm475, %v4027, 0
      %v4182 = vsel %vm475, %v4028, 0
      %v4185 = vsel %vm475, %v4029, 0
      %v4188 = vsel %vm475, %v4030, 0
      %v4191 = vsel %vm475, %v4031, 0
      %v4194 = vsel %vm475, %v4032, 0
      %v4197 = vsel %vm475, %v4033, 0
      %v4200 = vsel %vm475, %v4034, 0
      %v4203 = vsel %vm475, %v4035, 0
      %v4206 = vsel %vm475, %v4036, 0
      %v4209 = vsel %vm475, %v4037, 0
      %v4212 = vsel %vm475, %v4038, 0
      %v4215 = vsel %vm475, %v4039, 0
      %v4218 = vsel %vm475, %v4040, 0
      %v4221 = vsel %vm475, %v4041, 0
      %v4224 = vsel %vm475, %v4042, 0
      %v4227 = vsel %vm475, %v4043, 0
      %v4230 = vsel %vm475, %v4044, 0
      %v4233 = vsel %vm475, %v4045, 0
      %v4236 = vsel %vm475, %v4046, 0
      %v4239 = vsel %vm475, %v4047, 0
      %v4242 = vsel %vm475, %v4048, 0
      %v4245 = vsel %vm475, %v4049, 0
      %v4248 = vsel %vm475, %v4050, 0
      %v4251 = vsel %vm475, %v4051, 0
      %v4254 = vsel %vm475, %v4052, 0
      %v4257 = vsel %vm475, %v4053, 0
      %v4260 = vsel %vm475, %v4054, 0
      %v4263 = vsel %vm475, %v4055, 0
      %v4266 = vsel %vm475, %v4056, 0
      %v4269 = vsel %vm475, %v4057, 0
      %v4272 = vsel %vm475, %v4058, 0
      %v4275 = vsel %vm475, %v4059, 0
      %v4278 = vsel %vm475, %v4060, 0
      %v4281 = vsel %vm475, %v4061, 0
      %v4284 = vsel %vm475, %v4062, 0
      %v4287 = vsel %vm475, %v4063, 0
      %v4290 = vsel %vm475, %v4064, 0
      %v4293 = vsel %vm475, %v4065, 0
      %v4296 = vsel %vm475, %v4066, 0
      %v4299 = vsel %vm475, %v4067, 0
      %v4302 = vsel %vm475, %v4068, 0
      %v4305 = vsel %vm475, %v4069, 0
      %v4308 = vsel %vm475, %v4070, 0
      %v4311 = vsel %vm475, %v4071, 0
      %v4314 = vsel %vm475, %v4072, 0
      %v4317 = vsel %vm475, %v4073, 0
      %v4320 = vsel %vm475, %v4074, 0
      %v4323 = vsel %vm475, %v4075, 0
      %v4326 = vsel %vm475, %v4076, 0
      %v4329 = vsel %vm475, %v4077, 0
      %v4332 = vsel %vm475, %v4078, 0
      %v4335 = vsel %vm475, %v4079, 0
      %v4338 = vsel %vm475, %v4080, 0
      %v4341 = vsel %vm475, %v4081, 0
      %v4344 = vsel %vm475, %v4082, 0
      %v4347 = vsel %vm475, %v4083, 0
      %v4350 = vsel %vm475, %v4084, 0
      %v4353 = vsel %vm475, %v4085, 0
      %v4356 = vsel %vm475, %v4086, 0
      %v4359 = vsel %vm475, %v4087, 0
      %v4362 = vsel %vm475, %v4088, 0
      %v4365 = vsel %vm475, %v4089, 0
      %v4368 = vsel %vm475, %v4090, 0
      %v4371 = vsel %vm475, %v4091, 0
      %v4374 = vsel %vm475, %v4092, 0
      %v4377 = vsel %vm475, %v4093, 0
      %v4380 = vsel %vm475, %v4094, 0
      %v4383 = vsel %vm475, %v4095, 0
      %v4386 = vsel %vm475, %v4096, 0
      %v4389 = vsel %vm475, %v4097, 0
      %v4392 = vsel %vm475, %v4098, 0
      %v4395 = vsel %vm475, %v4099, 0
      %v4398 = vsel %vm475, %v4100, 0
      %v4401 = vsel %vm475, %v4101, 0
      %v4404 = vsel %vm475, %v4102, 0
      %v4407 = vsel %vm475, %v4103, 0
      %v4410 = vsel %vm475, %v4104, 0
      %v4413 = vsel %vm475, %v4105, 0
      %v4416 = vsel %vm475, %v4106, 0
      %v4419 = vsel %vm475, %v4107, 0
      %v4422 = vsel %vm475, %v4108, 0
      %v4425 = vsel %vm475, %v4109, 0
      %v4428 = vsel %vm475, %v4110, 0
      %v4431 = vsel %vm475, %v4111, 0
      %v4434 = vsel %vm475, %v4112, 0
      %v4437 = vsel %vm475, %v4113, 0
      %v4440 = vsel %vm475, %v4114, 0
      %v4443 = vsel %vm475, %v4115, 0
      %v4446 = vsel %vm475, %v4116, 0
      %v4449 = vsel %vm475, %v4117, 0
      %v4452 = vsel %vm475, %v4118, 0
      %v4455 = vsel %vm475, %v4119, 0
      %v4458 = vsel %vm475, %v4120, 0
      %v4461 = vsel %vm475, %v4121, 0
      %v4464 = vsel %vm475, %v4122, 0
      %v4467 = vsel %vm475, %v4123, 0
      %v4470 = vsel %vm475, %v4124, 0
      %v4473 = vsel %vm475, %v4125, 0
      %v4476 = vsel %vm475, %v4126, 0
      %v4479 = vsel %vm475, %v4127, 0
      %v4482 = vsel %vm475, %v4128, 0
      %v4485 = vsel %vm475, %v4129, 0
      %v4488 = vsel %vm475, %v4130, 0
      %v4491 = vsel %vm475, %v4131, 0
      %v4494 = vsel %vm475, %v4132, 0
      %v4497 = vsel %vm475, %v4133, 0
      %v4500 = vsel %vm475, %v4134, 0
      %v4503 = vsel %vm475, %v4135, 0
      %v4506 = vsel %vm475, %v4136, 0
      %v4509 = vsel %vm475, %v4137, 0
      %v4512 = vsel %vm475, %v4138, 0
      %v4515 = vsel %vm475, %v4139, 0
      %v4518 = vsel %vm475, %v4140, 0
      %v4521 = vsel %vm475, %v4141, 0
      %v4524 = vsel %vm475, %v4142, 0
      %v4527 = vsel %vm475, %v4143, 0
      %v4530 = vsel %vm475, %v4144, 0
      %v4533 = vsel %vm475, %v4145, 0
      %v4536 = vsel %vm475, %v4146, 0
      %v4539 = vsel %vm475, %v4147, 0
      %v4542 = vsel %vm475, %v4148, 0
      %4544 = vmatprep.subr.mxu0 0.0
      %4545 = vmatpush1.msra.mxu0 %v4149
      %4546 = vmatprep.subr.mxu0 0.0
      %4547 = vmatpush1.msra.mxu0 %v4150
      %4548 = vmatprep.subr.mxu0 0.0
      %4549 = vmatpush1.msra.mxu0 %v4151
      %4550 = vmatprep.subr.mxu0 0.0
      %4551 = vmatpush1.msra.mxu0 %v4152
      %4552 = vmatprep.subr.mxu0 0.0
      %4553 = vmatpush1.msra.mxu0 0.0
      %4554 = vmatprep.subr.mxu0 0.0
      %4555 = vmatpush1.msra.mxu0 0.0
      %4556 = vmatprep.subr.mxu0 0.0
      %4557 = vmatpush1.msra.mxu0 0.0
      %4558 = vmatprep.subr.mxu0 0.0
      %4559 = vmatpush1.msra.mxu0 0.0
      %4560 = vmatprep.subr.mxu0 0.0
      %4561 = vmatpush1.msra.mxu0 0.0
      %4562 = vmatprep.subr.mxu0 0.0
      %4563 = vmatpush1.msra.mxu0 0.0
      %4564 = vmatprep.subr.mxu0 0.0
      %4565 = vmatpush1.msra.mxu0 0.0
      %4566 = vmatprep.subr.mxu0 0.0
      %4567 = vmatpush1.msra.mxu0 0.0
      %4568 = vmatprep.subr.mxu0 0.0
      %4569 = vmatpush1.msra.mxu0 0.0
      %4570 = vmatprep.subr.mxu0 0.0
      %4571 = vmatpush1.msra.mxu0 0.0
      %4572 = vmatprep.subr.mxu0 0.0
      %4573 = vmatpush1.msra.mxu0 0.0
      %4574 = vmatprep.subr.mxu0 0.0
      %4575 = vmatpush1.msra.mxu0 0.0
      %4576 = vmatprep.subr.mxu0 0.0
      %4577 = vmatpush1.msra.mxu0 0.0
      %4578 = vmatprep.subr.mxu0 0.0
      %4579 = vmatpush1.msra.mxu0 0.0
      %4580 = vmatprep.subr.mxu0 0.0
      %4581 = vmatpush1.msra.mxu0 0.0
      %4582 = vmatprep.subr.mxu0 0.0
      %4583 = vmatpush1.msra.mxu0 0.0
      %4584 = vmatprep.subr.mxu0 0.0
      %4585 = vmatpush1.msra.mxu0 0.0
      %4586 = vmatprep.subr.mxu0 0.0
      %4587 = vmatpush1.msra.mxu0 0.0
      %4588 = vmatprep.subr.mxu0 0.0
      %4589 = vmatpush1.msra.mxu0 0.0
      %4590 = vmatprep.subr.mxu0 0.0
      %4591 = vmatpush1.msra.mxu0 0.0
      %4592 = vmatprep.subr.mxu0 0.0
      %4593 = vmatpush1.msra.mxu0 0.0
      %4594 = vmatprep.subr.mxu0 0.0
      %4595 = vmatpush1.msra.mxu0 0.0
      %4596 = vmatprep.subr.mxu0 0.0
      %4597 = vmatpush1.msra.mxu0 0.0
      %4598 = vmatprep.subr.mxu0 0.0
      %4599 = vmatpush1.msra.mxu0 0.0
      %4600 = vmatprep.subr.mxu0 0.0
      %4601 = vmatpush1.msra.mxu0 0.0
      %4602 = vmatprep.subr.mxu0 0.0
      %4603 = vmatpush1.msra.mxu0 0.0
      %4604 = vmatprep.subr.mxu0 0.0
      %4605 = vmatpush1.msra.mxu0 0.0
      %4606 = vmatprep.subr.mxu0 0.0
      %4607 = vmatpush1.msra.mxu0 0.0
      %4608 = vmatprep.mubr.f32.mxu0 0.0
      %4609 = vmatmul.mubr.f32.gmra.mrb[0].mxu0 %v4161
      %v4610 = vpop.f32.mrb[0].mxu0
      %v4611 = vadd.f32 %v4158, %v4610
      %v4612 = vpop.f32.mrb[0].mxu0
      %4613 = vmatprep.mubr.f32.mxu0 0.0
      %4614 = vmatmul.mubr.f32.gmra.mrb[0].mxu0 %v4164
      %v4615 = vpop.f32.mrb[0].mxu0
      %v4616 = vadd.f32 %v4158, %v4615
      %v4617 = vpop.f32.mrb[0].mxu0
      %4618 = vmatprep.mubr.f32.mxu0 0.0
      %4619 = vmatmul.mubr.f32.gmra.mrb[0].mxu0 %v4167
      %v4620 = vpop.f32.mrb[0].mxu0
      %v4621 = vadd.f32 %v4158, %v4620
      %v4622 = vpop.f32.mrb[0].mxu0
      %4623 = vmatprep.mubr.f32.mxu0 0.0
      %4624 = vmatmul.mubr.f32.gmra.mrb[0].mxu0 %v4170
      %v4625 = vpop.f32.mrb[0].mxu0
      %v4626 = vadd.f32 %v4158, %v4625
      %v4627 = vpop.f32.mrb[0].mxu0
      %4628 = vmatprep.mubr.f32.mxu0 0.0
      %4629 = vmatmul.mubr.f32.gmra.mrb[0].mxu0 %v4173
      %v4630 = vpop.f32.mrb[0].mxu0
      %v4631 = vadd.f32 %v4158, %v4630
      %v4632 = vpop.f32.mrb[0].mxu0
      %4633 = vmatprep.mubr.f32.mxu0 0.0
      %4634 = vmatmul.mubr.f32.gmra.mrb[0].mxu0 %v4176
      %v4635 = vpop.f32.mrb[0].mxu0
      %v4636 = vadd.f32 %v4158, %v4635
      %v4637 = vpop.f32.mrb[0].mxu0
      %4638 = vmatprep.mubr.f32.mxu0 0.0
      %4639 = vmatmul.mubr.f32.gmra.mrb[0].mxu0 %v4179
      %v4640 = vpop.f32.mrb[0].mxu0
      %v4641 = vadd.f32 %v4158, %v4640
      %v4642 = vpop.f32.mrb[0].mxu0
      %4643 = vmatprep.mubr.f32.mxu0 0.0
      %4644 = vmatmul.mubr.f32.gmra.mrb[0].mxu0 %v4182
      %v4645 = vpop.f32.mrb[0].mxu0
      %v4646 = vadd.f32 %v4158, %v4645
      %v4647 = vpop.f32.mrb[0].mxu0
      %4648 = vmatprep.mubr.f32.mxu0 0.0
      %4649 = vmatmul.mubr.f32.gmra.mrb[0].mxu0 %v4185
      %v4650 = vpop.f32.mrb[0].mxu0
      %v4651 = vadd.f32 %v4158, %v4650
      %v4652 = vpop.f32.mrb[0].mxu0
      %4653 = vmatprep.mubr.f32.mxu0 0.0
      %4654 = vmatmul.mubr.f32.gmra.mrb[0].mxu0 %v4188
      %v4655 = vpop.f32.mrb[0].mxu0
      %v4656 = vadd.f32 %v4158, %v4655
      %v4657 = vpop.f32.mrb[0].mxu0
      %4658 = vmatprep.mubr.f32.mxu0 0.0
      %4659 = vmatmul.mubr.f32.gmra.mrb[0].mxu0 %v4191
      %v4660 = vpop.f32.mrb[0].mxu0
      %v4661 = vadd.f32 %v4158, %v4660
      %v4662 = vpop.f32.mrb[0].mxu0
      %4663 = vmatprep.mubr.f32.mxu0 0.0
      %4664 = vmatmul.mubr.f32.gmra.mrb[0].mxu0 %v4194
      %v4665 = vpop.f32.mrb[0].mxu0
      %v4666 = vadd.f32 %v4158, %v4665
      %v4667 = vpop.f32.mrb[0].mxu0
      %4668 = vmatprep.mubr.f32.mxu0 0.0
      %4669 = vmatmul.mubr.f32.gmra.mrb[0].mxu0 %v4197
      %v4670 = vpop.f32.mrb[0].mxu0
      %v4671 = vadd.f32 %v4158, %v4670
      %v4672 = vpop.f32.mrb[0].mxu0
      %4673 = vmatprep.mubr.f32.mxu0 0.0
      %4674 = vmatmul.mubr.f32.gmra.mrb[0].mxu0 %v4200
      %v4675 = vpop.f32.mrb[0].mxu0
      %v4676 = vadd.f32 %v4158, %v4675
      %v4677 = vpop.f32.mrb[0].mxu0
      %4678 = vmatprep.mubr.f32.mxu0 0.0
      %4679 = vmatmul.mubr.f32.gmra.mrb[0].mxu0 %v4203
      %v4680 = vpop.f32.mrb[0].mxu0
      %v4681 = vadd.f32 %v4158, %v4680
      %v4682 = vpop.f32.mrb[0].mxu0
      %4683 = vmatprep.mubr.f32.mxu0 0.0
      %4684 = vmatmul.mubr.f32.gmra.mrb[0].mxu0 %v4206
      %v4685 = vpop.f32.mrb[0].mxu0
      %v4686 = vadd.f32 %v4158, %v4685
      %v4687 = vpop.f32.mrb[0].mxu0
      %4688 = vmatprep.mubr.f32.mxu0 0.0
      %4689 = vmatmul.mubr.f32.gmra.mrb[0].mxu0 %v4209
      %v4690 = vpop.f32.mrb[0].mxu0
      %v4691 = vadd.f32 %v4158, %v4690
      %v4692 = vpop.f32.mrb[0].mxu0
      %4693 = vmatprep.mubr.f32.mxu0 0.0
      %4694 = vmatmul.mubr.f32.gmra.mrb[0].mxu0 %v4212
      %v4695 = vpop.f32.mrb[0].mxu0
      %v4696 = vadd.f32 %v4158, %v4695
      %v4697 = vpop.f32.mrb[0].mxu0
      %4698 = vmatprep.mubr.f32.mxu0 0.0
      %4699 = vmatmul.mubr.f32.gmra.mrb[0].mxu0 %v4215
      %v4700 = vpop.f32.mrb[0].mxu0
      %v4701 = vadd.f32 %v4158, %v4700
      %v4702 = vpop.f32.mrb[0].mxu0
      %4703 = vmatprep.mubr.f32.mxu0 0.0
      %4704 = vmatmul.mubr.f32.gmra.mrb[0].mxu0 %v4218
      %v4705 = vpop.f32.mrb[0].mxu0
      %v4706 = vadd.f32 %v4158, %v4705
      %v4707 = vpop.f32.mrb[0].mxu0
      %4708 = vmatprep.mubr.f32.mxu0 0.0
      %4709 = vmatmul.mubr.f32.gmra.mrb[0].mxu0 %v4221
      %v4710 = vpop.f32.mrb[0].mxu0
      %v4711 = vadd.f32 %v4158, %v4710
      %v4712 = vpop.f32.mrb[0].mxu0
      %4713 = vmatprep.mubr.f32.mxu0 0.0
      %4714 = vmatmul.mubr.f32.gmra.mrb[0].mxu0 %v4224
      %v4715 = vpop.f32.mrb[0].mxu0
      %v4716 = vadd.f32 %v4158, %v4715
      %v4717 = vpop.f32.mrb[0].mxu0
      %4718 = vmatprep.mubr.f32.mxu0 0.0
      %4719 = vmatmul.mubr.f32.gmra.mrb[0].mxu0 %v4227
      %v4720 = vpop.f32.mrb[0].mxu0
      %v4721 = vadd.f32 %v4158, %v4720
      %v4722 = vpop.f32.mrb[0].mxu0
      %4723 = vmatprep.mubr.f32.mxu0 0.0
      %4724 = vmatmul.mubr.f32.gmra.mrb[0].mxu0 %v4230
      %v4725 = vpop.f32.mrb[0].mxu0
      %v4726 = vadd.f32 %v4158, %v4725
      %v4727 = vpop.f32.mrb[0].mxu0
      %4728 = vmatprep.mubr.f32.mxu0 0.0
      %4729 = vmatmul.mubr.f32.gmra.mrb[0].mxu0 %v4233
      %v4730 = vpop.f32.mrb[0].mxu0
      %v4731 = vadd.f32 %v4158, %v4730
      %v4732 = vpop.f32.mrb[0].mxu0
      %4733 = vmatprep.mubr.f32.mxu0 0.0
      %4734 = vmatmul.mubr.f32.gmra.mrb[0].mxu0 %v4236
      %v4735 = vpop.f32.mrb[0].mxu0
      %v4736 = vadd.f32 %v4158, %v4735
      %v4737 = vpop.f32.mrb[0].mxu0
      %4738 = vmatprep.mubr.f32.mxu0 0.0
      %4739 = vmatmul.mubr.f32.gmra.mrb[0].mxu0 %v4239
      %v4740 = vpop.f32.mrb[0].mxu0
      %v4741 = vadd.f32 %v4158, %v4740
      %v4742 = vpop.f32.mrb[0].mxu0
      %4743 = vmatprep.mubr.f32.mxu0 0.0
      %4744 = vmatmul.mubr.f32.gmra.mrb[0].mxu0 %v4242
      %v4745 = vpop.f32.mrb[0].mxu0
      %v4746 = vadd.f32 %v4158, %v4745
      %v4747 = vpop.f32.mrb[0].mxu0
      %4748 = vmatprep.mubr.f32.mxu0 0.0
      %4749 = vmatmul.mubr.f32.gmra.mrb[0].mxu0 %v4245
      %v4750 = vpop.f32.mrb[0].mxu0
      %v4751 = vadd.f32 %v4158, %v4750
      %v4752 = vpop.f32.mrb[0].mxu0
      %4753 = vmatprep.mubr.f32.mxu0 0.0
      %4754 = vmatmul.mubr.f32.gmra.mrb[0].mxu0 %v4248
      %v4755 = vpop.f32.mrb[0].mxu0
      %v4756 = vadd.f32 %v4158, %v4755
      %v4757 = vpop.f32.mrb[0].mxu0
      %4758 = vmatprep.mubr.f32.mxu0 0.0
      %4759 = vmatmul.mubr.f32.gmra.mrb[0].mxu0 %v4251
      %v4760 = vpop.f32.mrb[0].mxu0
      %v4761 = vadd.f32 %v4158, %v4760
      %v4762 = vpop.f32.mrb[0].mxu0
      %4763 = vmatprep.mubr.f32.mxu0 0.0
      %4764 = vmatmul.mubr.f32.gmra.mrb[0].mxu0 %v4254
      %v4765 = vpop.f32.mrb[0].mxu0
      %v4766 = vadd.f32 %v4158, %v4765
      %v4767 = vpop.f32.mrb[0].mxu0
      %4768 = vmatprep.mubr.f32.mxu0 0.0
      %4769 = vmatmul.mubr.f32.gmra.mrb[0].mxu0 %v4257
      %v4770 = vpop.f32.mrb[0].mxu0
      %v4771 = vadd.f32 %v4158, %v4770
      %v4772 = vpop.f32.mrb[0].mxu0
      %4773 = vmatprep.mubr.f32.mxu0 0.0
      %4774 = vmatmul.mubr.f32.gmra.mrb[0].mxu0 %v4260
      %v4775 = vpop.f32.mrb[0].mxu0
      %v4776 = vadd.f32 %v4158, %v4775
      %v4777 = vpop.f32.mrb[0].mxu0
      %4778 = vmatprep.mubr.f32.mxu0 0.0
      %4779 = vmatmul.mubr.f32.gmra.mrb[0].mxu0 %v4263
      %v4780 = vpop.f32.mrb[0].mxu0
      %v4781 = vadd.f32 %v4158, %v4780
      %v4782 = vpop.f32.mrb[0].mxu0
      %4783 = vmatprep.mubr.f32.mxu0 0.0
      %4784 = vmatmul.mubr.f32.gmra.mrb[0].mxu0 %v4266
      %v4785 = vpop.f32.mrb[0].mxu0
      %v4786 = vadd.f32 %v4158, %v4785
      %v4787 = vpop.f32.mrb[0].mxu0
      %4788 = vmatprep.mubr.f32.mxu0 0.0
      %4789 = vmatmul.mubr.f32.gmra.mrb[0].mxu0 %v4269
      %v4790 = vpop.f32.mrb[0].mxu0
      %v4791 = vadd.f32 %v4158, %v4790
      %v4792 = vpop.f32.mrb[0].mxu0
      %4793 = vmatprep.mubr.f32.mxu0 0.0
      %4794 = vmatmul.mubr.f32.gmra.mrb[0].mxu0 %v4272
      %v4795 = vpop.f32.mrb[0].mxu0
      %v4796 = vadd.f32 %v4158, %v4795
      %v4797 = vpop.f32.mrb[0].mxu0
      %4798 = vmatprep.mubr.f32.mxu0 0.0
      %4799 = vmatmul.mubr.f32.gmra.mrb[0].mxu0 %v4275
      %v4800 = vpop.f32.mrb[0].mxu0
      %v4801 = vadd.f32 %v4158, %v4800
      %v4802 = vpop.f32.mrb[0].mxu0
      %4803 = vmatprep.mubr.f32.mxu0 0.0
      %4804 = vmatmul.mubr.f32.gmra.mrb[0].mxu0 %v4278
      %v4805 = vpop.f32.mrb[0].mxu0
      %v4806 = vadd.f32 %v4158, %v4805
      %v4807 = vpop.f32.mrb[0].mxu0
      %4808 = vmatprep.mubr.f32.mxu0 0.0
      %4809 = vmatmul.mubr.f32.gmra.mrb[0].mxu0 %v4281
      %v4810 = vpop.f32.mrb[0].mxu0
      %v4811 = vadd.f32 %v4158, %v4810
      %v4812 = vpop.f32.mrb[0].mxu0
      %4813 = vmatprep.mubr.f32.mxu0 0.0
      %4814 = vmatmul.mubr.f32.gmra.mrb[0].mxu0 %v4284
      %v4815 = vpop.f32.mrb[0].mxu0
      %v4816 = vadd.f32 %v4158, %v4815
      %v4817 = vpop.f32.mrb[0].mxu0
      %4818 = vmatprep.mubr.f32.mxu0 0.0
      %4819 = vmatmul.mubr.f32.gmra.mrb[0].mxu0 %v4287
      %v4820 = vpop.f32.mrb[0].mxu0
      %v4821 = vadd.f32 %v4158, %v4820
      %v4822 = vpop.f32.mrb[0].mxu0
      %4823 = vmatprep.mubr.f32.mxu0 0.0
      %4824 = vmatmul.mubr.f32.gmra.mrb[0].mxu0 %v4290
      %v4825 = vpop.f32.mrb[0].mxu0
      %v4826 = vadd.f32 %v4158, %v4825
      %v4827 = vpop.f32.mrb[0].mxu0
      %4828 = vmatprep.mubr.f32.mxu0 0.0
      %4829 = vmatmul.mubr.f32.gmra.mrb[0].mxu0 %v4293
      %v4830 = vpop.f32.mrb[0].mxu0
      %v4831 = vadd.f32 %v4158, %v4830
      %v4832 = vpop.f32.mrb[0].mxu0
      %4833 = vmatprep.mubr.f32.mxu0 0.0
      %4834 = vmatmul.mubr.f32.gmra.mrb[0].mxu0 %v4296
      %v4835 = vpop.f32.mrb[0].mxu0
      %v4836 = vadd.f32 %v4158, %v4835
      %v4837 = vpop.f32.mrb[0].mxu0
      %4838 = vmatprep.mubr.f32.mxu0 0.0
      %4839 = vmatmul.mubr.f32.gmra.mrb[0].mxu0 %v4299
      %v4840 = vpop.f32.mrb[0].mxu0
      %v4841 = vadd.f32 %v4158, %v4840
      %v4842 = vpop.f32.mrb[0].mxu0
      %4843 = vmatprep.mubr.f32.mxu0 0.0
      %4844 = vmatmul.mubr.f32.gmra.mrb[0].mxu0 %v4302
      %v4845 = vpop.f32.mrb[0].mxu0
      %v4846 = vadd.f32 %v4158, %v4845
      %v4847 = vpop.f32.mrb[0].mxu0
      %4848 = vmatprep.mubr.f32.mxu0 0.0
      %4849 = vmatmul.mubr.f32.gmra.mrb[0].mxu0 %v4305
      %v4850 = vpop.f32.mrb[0].mxu0
      %v4851 = vadd.f32 %v4158, %v4850
      %v4852 = vpop.f32.mrb[0].mxu0
      %4853 = vmatprep.mubr.f32.mxu0 0.0
      %4854 = vmatmul.mubr.f32.gmra.mrb[0].mxu0 %v4308
      %v4855 = vpop.f32.mrb[0].mxu0
      %v4856 = vadd.f32 %v4158, %v4855
      %v4857 = vpop.f32.mrb[0].mxu0
      %4858 = vmatprep.mubr.f32.mxu0 0.0
      %4859 = vmatmul.mubr.f32.gmra.mrb[0].mxu0 %v4311
      %v4860 = vpop.f32.mrb[0].mxu0
      %v4861 = vadd.f32 %v4158, %v4860
      %v4862 = vpop.f32.mrb[0].mxu0
      %4863 = vmatprep.mubr.f32.mxu0 0.0
      %4864 = vmatmul.mubr.f32.gmra.mrb[0].mxu0 %v4314
      %v4865 = vpop.f32.mrb[0].mxu0
      %v4866 = vadd.f32 %v4158, %v4865
      %v4867 = vpop.f32.mrb[0].mxu0
      %4868 = vmatprep.mubr.f32.mxu0 0.0
      %4869 = vmatmul.mubr.f32.gmra.mrb[0].mxu0 %v4317
      %v4870 = vpop.f32.mrb[0].mxu0
      %v4871 = vadd.f32 %v4158, %v4870
      %v4872 = vpop.f32.mrb[0].mxu0
      %4873 = vmatprep.mubr.f32.mxu0 0.0
      %4874 = vmatmul.mubr.f32.gmra.mrb[0].mxu0 %v4320
      %v4875 = vpop.f32.mrb[0].mxu0
      %v4876 = vadd.f32 %v4158, %v4875
      %v4877 = vpop.f32.mrb[0].mxu0
      %4878 = vmatprep.mubr.f32.mxu0 0.0
      %4879 = vmatmul.mubr.f32.gmra.mrb[0].mxu0 %v4323
      %v4880 = vpop.f32.mrb[0].mxu0
      %v4881 = vadd.f32 %v4158, %v4880
      %v4882 = vpop.f32.mrb[0].mxu0
      %4883 = vmatprep.mubr.f32.mxu0 0.0
      %4884 = vmatmul.mubr.f32.gmra.mrb[0].mxu0 %v4326
      %v4885 = vpop.f32.mrb[0].mxu0
      %v4886 = vadd.f32 %v4158, %v4885
      %v4887 = vpop.f32.mrb[0].mxu0
      %4888 = vmatprep.mubr.f32.mxu0 0.0
      %4889 = vmatmul.mubr.f32.gmra.mrb[0].mxu0 %v4329
      %v4890 = vpop.f32.mrb[0].mxu0
      %v4891 = vadd.f32 %v4158, %v4890
      %v4892 = vpop.f32.mrb[0].mxu0
      %4893 = vmatprep.mubr.f32.mxu0 0.0
      %4894 = vmatmul.mubr.f32.gmra.mrb[0].mxu0 %v4332
      %v4895 = vpop.f32.mrb[0].mxu0
      %v4896 = vadd.f32 %v4158, %v4895
      %v4897 = vpop.f32.mrb[0].mxu0
      %4898 = vmatprep.mubr.f32.mxu0 0.0
      %4899 = vmatmul.mubr.f32.gmra.mrb[0].mxu0 %v4335
      %v4900 = vpop.f32.mrb[0].mxu0
      %v4901 = vadd.f32 %v4158, %v4900
      %v4902 = vpop.f32.mrb[0].mxu0
      %4903 = vmatprep.mubr.f32.mxu0 0.0
      %4904 = vmatmul.mubr.f32.gmra.mrb[0].mxu0 %v4338
      %v4905 = vpop.f32.mrb[0].mxu0
      %v4906 = vadd.f32 %v4158, %v4905
      %v4907 = vpop.f32.mrb[0].mxu0
      %4908 = vmatprep.mubr.f32.mxu0 0.0
      %4909 = vmatmul.mubr.f32.gmra.mrb[0].mxu0 %v4341
      %v4910 = vpop.f32.mrb[0].mxu0
      %v4911 = vadd.f32 %v4158, %v4910
      %v4912 = vpop.f32.mrb[0].mxu0
      %4913 = vmatprep.mubr.f32.mxu0 0.0
      %4914 = vmatmul.mubr.f32.gmra.mrb[0].mxu0 %v4344
      %v4915 = vpop.f32.mrb[0].mxu0
      %v4916 = vadd.f32 %v4158, %v4915
      %v4917 = vpop.f32.mrb[0].mxu0
      %4918 = vmatprep.mubr.f32.mxu0 0.0
      %4919 = vmatmul.mubr.f32.gmra.mrb[0].mxu0 %v4347
      %v4920 = vpop.f32.mrb[0].mxu0
      %v4921 = vadd.f32 %v4158, %v4920
      %v4922 = vpop.f32.mrb[0].mxu0
      %4923 = vmatprep.mubr.f32.mxu0 0.0
      %4924 = vmatmul.mubr.f32.gmra.mrb[0].mxu0 %v4350
      %v4925 = vpop.f32.mrb[0].mxu0
      %v4926 = vadd.f32 %v4158, %v4925
      %v4927 = vpop.f32.mrb[0].mxu0
      %4928 = vmatprep.mubr.f32.mxu0 0.0
      %4929 = vmatmul.mubr.f32.gmra.mrb[0].mxu0 %v4353
      %v4930 = vpop.f32.mrb[0].mxu0
      %v4931 = vadd.f32 %v4158, %v4930
      %v4932 = vpop.f32.mrb[0].mxu0
      %4933 = vmatprep.mubr.f32.mxu0 0.0
      %4934 = vmatmul.mubr.f32.gmra.mrb[0].mxu0 %v4356
      %v4935 = vpop.f32.mrb[0].mxu0
      %v4936 = vadd.f32 %v4158, %v4935
      %v4937 = vpop.f32.mrb[0].mxu0
      %4938 = vmatprep.mubr.f32.mxu0 0.0
      %4939 = vmatmul.mubr.f32.gmra.mrb[0].mxu0 %v4359
      %v4940 = vpop.f32.mrb[0].mxu0
      %v4941 = vadd.f32 %v4158, %v4940
      %v4942 = vpop.f32.mrb[0].mxu0
      %4943 = vmatprep.mubr.f32.mxu0 0.0
      %4944 = vmatmul.mubr.f32.gmra.mrb[0].mxu0 %v4362
      %v4945 = vpop.f32.mrb[0].mxu0
      %v4946 = vadd.f32 %v4158, %v4945
      %v4947 = vpop.f32.mrb[0].mxu0
      %4948 = vmatprep.mubr.f32.mxu0 0.0
      %4949 = vmatmul.mubr.f32.gmra.mrb[0].mxu0 %v4365
      %v4950 = vpop.f32.mrb[0].mxu0
      %v4951 = vadd.f32 %v4158, %v4950
      %v4952 = vpop.f32.mrb[0].mxu0
      %4953 = vmatprep.mubr.f32.mxu0 0.0
      %4954 = vmatmul.mubr.f32.gmra.mrb[0].mxu0 %v4368
      %v4955 = vpop.f32.mrb[0].mxu0
      %v4956 = vadd.f32 %v4158, %v4955
      %v4957 = vpop.f32.mrb[0].mxu0
      %4958 = vmatprep.mubr.f32.mxu0 0.0
      %4959 = vmatmul.mubr.f32.gmra.mrb[0].mxu0 %v4371
      %v4960 = vpop.f32.mrb[0].mxu0
      %v4961 = vadd.f32 %v4158, %v4960
      %v4962 = vpop.f32.mrb[0].mxu0
      %4963 = vmatprep.mubr.f32.mxu0 0.0
      %4964 = vmatmul.mubr.f32.gmra.mrb[0].mxu0 %v4374
      %v4965 = vpop.f32.mrb[0].mxu0
      %v4966 = vadd.f32 %v4158, %v4965
      %v4967 = vpop.f32.mrb[0].mxu0
      %4968 = vmatprep.mubr.f32.mxu0 0.0
      %4969 = vmatmul.mubr.f32.gmra.mrb[0].mxu0 %v4377
      %v4970 = vpop.f32.mrb[0].mxu0
      %v4971 = vadd.f32 %v4158, %v4970
      %v4972 = vpop.f32.mrb[0].mxu0
      %4973 = vmatprep.mubr.f32.mxu0 0.0
      %4974 = vmatmul.mubr.f32.gmra.mrb[0].mxu0 %v4380
      %v4975 = vpop.f32.mrb[0].mxu0
      %v4976 = vadd.f32 %v4158, %v4975
      %v4977 = vpop.f32.mrb[0].mxu0
      %4978 = vmatprep.mubr.f32.mxu0 0.0
      %4979 = vmatmul.mubr.f32.gmra.mrb[0].mxu0 %v4383
      %v4980 = vpop.f32.mrb[0].mxu0
      %v4981 = vadd.f32 %v4158, %v4980
      %v4982 = vpop.f32.mrb[0].mxu0
      %4983 = vmatprep.mubr.f32.mxu0 0.0
      %4984 = vmatmul.mubr.f32.gmra.mrb[0].mxu0 %v4386
      %v4985 = vpop.f32.mrb[0].mxu0
      %v4986 = vadd.f32 %v4158, %v4985
      %v4987 = vpop.f32.mrb[0].mxu0
      %4988 = vmatprep.mubr.f32.mxu0 0.0
      %4989 = vmatmul.mubr.f32.gmra.mrb[0].mxu0 %v4389
      %v4990 = vpop.f32.mrb[0].mxu0
      %v4991 = vadd.f32 %v4158, %v4990
      %v4992 = vpop.f32.mrb[0].mxu0
      %4993 = vmatprep.mubr.f32.mxu0 0.0
      %4994 = vmatmul.mubr.f32.gmra.mrb[0].mxu0 %v4392
      %v4995 = vpop.f32.mrb[0].mxu0
      %v4996 = vadd.f32 %v4158, %v4995
      %v4997 = vpop.f32.mrb[0].mxu0
      %4998 = vmatprep.mubr.f32.mxu0 0.0
      %4999 = vmatmul.mubr.f32.gmra.mrb[0].mxu0 %v4395
      %v5000 = vpop.f32.mrb[0].mxu0
      %v5001 = vadd.f32 %v4158, %v5000
      %v5002 = vpop.f32.mrb[0].mxu0
      %5003 = vmatprep.mubr.f32.mxu0 0.0
      %5004 = vmatmul.mubr.f32.gmra.mrb[0].mxu0 %v4398
      %v5005 = vpop.f32.mrb[0].mxu0
      %v5006 = vadd.f32 %v4158, %v5005
      %v5007 = vpop.f32.mrb[0].mxu0
      %5008 = vmatprep.mubr.f32.mxu0 0.0
      %5009 = vmatmul.mubr.f32.gmra.mrb[0].mxu0 %v4401
      %v5010 = vpop.f32.mrb[0].mxu0
      %v5011 = vadd.f32 %v4158, %v5010
      %v5012 = vpop.f32.mrb[0].mxu0
      %5013 = vmatprep.mubr.f32.mxu0 0.0
      %5014 = vmatmul.mubr.f32.gmra.mrb[0].mxu0 %v4404
      %v5015 = vpop.f32.mrb[0].mxu0
      %v5016 = vadd.f32 %v4158, %v5015
      %v5017 = vpop.f32.mrb[0].mxu0
      %5018 = vmatprep.mubr.f32.mxu0 0.0
      %5019 = vmatmul.mubr.f32.gmra.mrb[0].mxu0 %v4407
      %v5020 = vpop.f32.mrb[0].mxu0
      %v5021 = vadd.f32 %v4158, %v5020
      %v5022 = vpop.f32.mrb[0].mxu0
      %5023 = vmatprep.mubr.f32.mxu0 0.0
      %5024 = vmatmul.mubr.f32.gmra.mrb[0].mxu0 %v4410
      %v5025 = vpop.f32.mrb[0].mxu0
      %v5026 = vadd.f32 %v4158, %v5025
      %v5027 = vpop.f32.mrb[0].mxu0
      %5028 = vmatprep.mubr.f32.mxu0 0.0
      %5029 = vmatmul.mubr.f32.gmra.mrb[0].mxu0 %v4413
      %v5030 = vpop.f32.mrb[0].mxu0
      %v5031 = vadd.f32 %v4158, %v5030
      %v5032 = vpop.f32.mrb[0].mxu0
      %5033 = vmatprep.mubr.f32.mxu0 0.0
      %5034 = vmatmul.mubr.f32.gmra.mrb[0].mxu0 %v4416
      %v5035 = vpop.f32.mrb[0].mxu0
      %v5036 = vadd.f32 %v4158, %v5035
      %v5037 = vpop.f32.mrb[0].mxu0
      %5038 = vmatprep.mubr.f32.mxu0 0.0
      %5039 = vmatmul.mubr.f32.gmra.mrb[0].mxu0 %v4419
      %v5040 = vpop.f32.mrb[0].mxu0
      %v5041 = vadd.f32 %v4158, %v5040
      %v5042 = vpop.f32.mrb[0].mxu0
      %5043 = vmatprep.mubr.f32.mxu0 0.0
      %5044 = vmatmul.mubr.f32.gmra.mrb[0].mxu0 %v4422
      %v5045 = vpop.f32.mrb[0].mxu0
      %v5046 = vadd.f32 %v4158, %v5045
      %v5047 = vpop.f32.mrb[0].mxu0
      %5048 = vmatprep.mubr.f32.mxu0 0.0
      %5049 = vmatmul.mubr.f32.gmra.mrb[0].mxu0 %v4425
      %v5050 = vpop.f32.mrb[0].mxu0
      %v5051 = vadd.f32 %v4158, %v5050
      %v5052 = vpop.f32.mrb[0].mxu0
      %5053 = vmatprep.mubr.f32.mxu0 0.0
      %5054 = vmatmul.mubr.f32.gmra.mrb[0].mxu0 %v4428
      %v5055 = vpop.f32.mrb[0].mxu0
      %v5056 = vadd.f32 %v4158, %v5055
      %v5057 = vpop.f32.mrb[0].mxu0
      %5058 = vmatprep.mubr.f32.mxu0 0.0
      %5059 = vmatmul.mubr.f32.gmra.mrb[0].mxu0 %v4431
      %v5060 = vpop.f32.mrb[0].mxu0
      %v5061 = vadd.f32 %v4158, %v5060
      %v5062 = vpop.f32.mrb[0].mxu0
      %5063 = vmatprep.mubr.f32.mxu0 0.0
      %5064 = vmatmul.mubr.f32.gmra.mrb[0].mxu0 %v4434
      %v5065 = vpop.f32.mrb[0].mxu0
      %v5066 = vadd.f32 %v4158, %v5065
      %v5067 = vpop.f32.mrb[0].mxu0
      %5068 = vmatprep.mubr.f32.mxu0 0.0
      %5069 = vmatmul.mubr.f32.gmra.mrb[0].mxu0 %v4437
      %v5070 = vpop.f32.mrb[0].mxu0
      %v5071 = vadd.f32 %v4158, %v5070
      %v5072 = vpop.f32.mrb[0].mxu0
      %5073 = vmatprep.mubr.f32.mxu0 0.0
      %5074 = vmatmul.mubr.f32.gmra.mrb[0].mxu0 %v4440
      %v5075 = vpop.f32.mrb[0].mxu0
      %v5076 = vadd.f32 %v4158, %v5075
      %v5077 = vpop.f32.mrb[0].mxu0
      %5078 = vmatprep.mubr.f32.mxu0 0.0
      %5079 = vmatmul.mubr.f32.gmra.mrb[0].mxu0 %v4443
      %v5080 = vpop.f32.mrb[0].mxu0
      %v5081 = vadd.f32 %v4158, %v5080
      %v5082 = vpop.f32.mrb[0].mxu0
      %5083 = vmatprep.mubr.f32.mxu0 0.0
      %5084 = vmatmul.mubr.f32.gmra.mrb[0].mxu0 %v4446
      %v5085 = vpop.f32.mrb[0].mxu0
      %v5086 = vadd.f32 %v4158, %v5085
      %v5087 = vpop.f32.mrb[0].mxu0
      %5088 = vmatprep.mubr.f32.mxu0 0.0
      %5089 = vmatmul.mubr.f32.gmra.mrb[0].mxu0 %v4449
      %v5090 = vpop.f32.mrb[0].mxu0
      %v5091 = vadd.f32 %v4158, %v5090
      %v5092 = vpop.f32.mrb[0].mxu0
      %5093 = vmatprep.mubr.f32.mxu0 0.0
      %5094 = vmatmul.mubr.f32.gmra.mrb[0].mxu0 %v4452
      %v5095 = vpop.f32.mrb[0].mxu0
      %v5096 = vadd.f32 %v4158, %v5095
      %v5097 = vpop.f32.mrb[0].mxu0
      %5098 = vmatprep.mubr.f32.mxu0 0.0
      %5099 = vmatmul.mubr.f32.gmra.mrb[0].mxu0 %v4455
      %v5100 = vpop.f32.mrb[0].mxu0
      %v5101 = vadd.f32 %v4158, %v5100
      %v5102 = vpop.f32.mrb[0].mxu0
      %5103 = vmatprep.mubr.f32.mxu0 0.0
      %5104 = vmatmul.mubr.f32.gmra.mrb[0].mxu0 %v4458
      %v5105 = vpop.f32.mrb[0].mxu0
      %v5106 = vadd.f32 %v4158, %v5105
      %v5107 = vpop.f32.mrb[0].mxu0
      %5108 = vmatprep.mubr.f32.mxu0 0.0
      %5109 = vmatmul.mubr.f32.gmra.mrb[0].mxu0 %v4461
      %v5110 = vpop.f32.mrb[0].mxu0
      %v5111 = vadd.f32 %v4158, %v5110
      %v5112 = vpop.f32.mrb[0].mxu0
      %5113 = vmatprep.mubr.f32.mxu0 0.0
      %5114 = vmatmul.mubr.f32.gmra.mrb[0].mxu0 %v4464
      %v5115 = vpop.f32.mrb[0].mxu0
      %v5116 = vadd.f32 %v4158, %v5115
      %v5117 = vpop.f32.mrb[0].mxu0
      %5118 = vmatprep.mubr.f32.mxu0 0.0
      %5119 = vmatmul.mubr.f32.gmra.mrb[0].mxu0 %v4467
      %v5120 = vpop.f32.mrb[0].mxu0
      %v5121 = vadd.f32 %v4158, %v5120
      %v5122 = vpop.f32.mrb[0].mxu0
      %5123 = vmatprep.mubr.f32.mxu0 0.0
      %5124 = vmatmul.mubr.f32.gmra.mrb[0].mxu0 %v4470
      %v5125 = vpop.f32.mrb[0].mxu0
      %v5126 = vadd.f32 %v4158, %v5125
      %v5127 = vpop.f32.mrb[0].mxu0
      %5128 = vmatprep.mubr.f32.mxu0 0.0
      %5129 = vmatmul.mubr.f32.gmra.mrb[0].mxu0 %v4473
      %v5130 = vpop.f32.mrb[0].mxu0
      %v5131 = vadd.f32 %v4158, %v5130
      %v5132 = vpop.f32.mrb[0].mxu0
      %5133 = vmatprep.mubr.f32.mxu0 0.0
      %5134 = vmatmul.mubr.f32.gmra.mrb[0].mxu0 %v4476
      %v5135 = vpop.f32.mrb[0].mxu0
      %v5136 = vadd.f32 %v4158, %v5135
      %v5137 = vpop.f32.mrb[0].mxu0
      %5138 = vmatprep.mubr.f32.mxu0 0.0
      %5139 = vmatmul.mubr.f32.gmra.mrb[0].mxu0 %v4479
      %v5140 = vpop.f32.mrb[0].mxu0
      %v5141 = vadd.f32 %v4158, %v5140
      %v5142 = vpop.f32.mrb[0].mxu0
      %5143 = vmatprep.mubr.f32.mxu0 0.0
      %5144 = vmatmul.mubr.f32.gmra.mrb[0].mxu0 %v4482
      %v5145 = vpop.f32.mrb[0].mxu0
      %v5146 = vadd.f32 %v4158, %v5145
      %v5147 = vpop.f32.mrb[0].mxu0
      %5148 = vmatprep.mubr.f32.mxu0 0.0
      %5149 = vmatmul.mubr.f32.gmra.mrb[0].mxu0 %v4485
      %v5150 = vpop.f32.mrb[0].mxu0
      %v5151 = vadd.f32 %v4158, %v5150
      %v5152 = vpop.f32.mrb[0].mxu0
      %5153 = vmatprep.mubr.f32.mxu0 0.0
      %5154 = vmatmul.mubr.f32.gmra.mrb[0].mxu0 %v4488
      %v5155 = vpop.f32.mrb[0].mxu0
      %v5156 = vadd.f32 %v4158, %v5155
      %v5157 = vpop.f32.mrb[0].mxu0
      %5158 = vmatprep.mubr.f32.mxu0 0.0
      %5159 = vmatmul.mubr.f32.gmra.mrb[0].mxu0 %v4491
      %v5160 = vpop.f32.mrb[0].mxu0
      %v5161 = vadd.f32 %v4158, %v5160
      %v5162 = vpop.f32.mrb[0].mxu0
      %5163 = vmatprep.mubr.f32.mxu0 0.0
      %5164 = vmatmul.mubr.f32.gmra.mrb[0].mxu0 %v4494
      %v5165 = vpop.f32.mrb[0].mxu0
      %v5166 = vadd.f32 %v4158, %v5165
      %v5167 = vpop.f32.mrb[0].mxu0
      %5168 = vmatprep.mubr.f32.mxu0 0.0
      %5169 = vmatmul.mubr.f32.gmra.mrb[0].mxu0 %v4497
      %v5170 = vpop.f32.mrb[0].mxu0
      %v5171 = vadd.f32 %v4158, %v5170
      %v5172 = vpop.f32.mrb[0].mxu0
      %5173 = vmatprep.mubr.f32.mxu0 0.0
      %5174 = vmatmul.mubr.f32.gmra.mrb[0].mxu0 %v4500
      %v5175 = vpop.f32.mrb[0].mxu0
      %v5176 = vadd.f32 %v4158, %v5175
      %v5177 = vpop.f32.mrb[0].mxu0
      %5178 = vmatprep.mubr.f32.mxu0 0.0
      %5179 = vmatmul.mubr.f32.gmra.mrb[0].mxu0 %v4503
      %v5180 = vpop.f32.mrb[0].mxu0
      %v5181 = vadd.f32 %v4158, %v5180
      %v5182 = vpop.f32.mrb[0].mxu0
      %5183 = vmatprep.mubr.f32.mxu0 0.0
      %5184 = vmatmul.mubr.f32.gmra.mrb[0].mxu0 %v4506
      %v5185 = vpop.f32.mrb[0].mxu0
      %v5186 = vadd.f32 %v4158, %v5185
      %v5187 = vpop.f32.mrb[0].mxu0
      %5188 = vmatprep.mubr.f32.mxu0 0.0
      %5189 = vmatmul.mubr.f32.gmra.mrb[0].mxu0 %v4509
      %v5190 = vpop.f32.mrb[0].mxu0
      %v5191 = vadd.f32 %v4158, %v5190
      %v5192 = vpop.f32.mrb[0].mxu0
      %5193 = vmatprep.mubr.f32.mxu0 0.0
      %5194 = vmatmul.mubr.f32.gmra.mrb[0].mxu0 %v4512
      %v5195 = vpop.f32.mrb[0].mxu0
      %v5196 = vadd.f32 %v4158, %v5195
      %v5197 = vpop.f32.mrb[0].mxu0
      %5198 = vmatprep.mubr.f32.mxu0 0.0
      %5199 = vmatmul.mubr.f32.gmra.mrb[0].mxu0 %v4515
      %v5200 = vpop.f32.mrb[0].mxu0
      %v5201 = vadd.f32 %v4158, %v5200
      %v5202 = vpop.f32.mrb[0].mxu0
      %5203 = vmatprep.mubr.f32.mxu0 0.0
      %5204 = vmatmul.mubr.f32.gmra.mrb[0].mxu0 %v4518
      %v5205 = vpop.f32.mrb[0].mxu0
      %v5206 = vadd.f32 %v4158, %v5205
      %v5207 = vpop.f32.mrb[0].mxu0
      %5208 = vmatprep.mubr.f32.mxu0 0.0
      %5209 = vmatmul.mubr.f32.gmra.mrb[0].mxu0 %v4521
      %v5210 = vpop.f32.mrb[0].mxu0
      %v5211 = vadd.f32 %v4158, %v5210
      %v5212 = vpop.f32.mrb[0].mxu0
      %5213 = vmatprep.mubr.f32.mxu0 0.0
      %5214 = vmatmul.mubr.f32.gmra.mrb[0].mxu0 %v4524
      %v5215 = vpop.f32.mrb[0].mxu0
      %v5216 = vadd.f32 %v4158, %v5215
      %v5217 = vpop.f32.mrb[0].mxu0
      %5218 = vmatprep.mubr.f32.mxu0 0.0
      %5219 = vmatmul.mubr.f32.gmra.mrb[0].mxu0 %v4527
      %v5220 = vpop.f32.mrb[0].mxu0
      %v5221 = vadd.f32 %v4158, %v5220
      %v5222 = vpop.f32.mrb[0].mxu0
      %5223 = vmatprep.mubr.f32.mxu0 0.0
      %5224 = vmatmul.mubr.f32.gmra.mrb[0].mxu0 %v4530
      %v5225 = vpop.f32.mrb[0].mxu0
      %v5226 = vadd.f32 %v4158, %v5225
      %v5227 = vpop.f32.mrb[0].mxu0
      %5228 = vmatprep.mubr.f32.mxu0 0.0
      %5229 = vmatmul.mubr.f32.gmra.mrb[0].mxu0 %v4533
      %v5230 = vpop.f32.mrb[0].mxu0
      %v5231 = vadd.f32 %v4158, %v5230
      %v5232 = vpop.f32.mrb[0].mxu0
      %5233 = vmatprep.mubr.f32.mxu0 0.0
      %5234 = vmatmul.mubr.f32.gmra.mrb[0].mxu0 %v4536
      %v5235 = vpop.f32.mrb[0].mxu0
      %v5236 = vadd.f32 %v4158, %v5235
      %v5237 = vpop.f32.mrb[0].mxu0
      %5238 = vmatprep.mubr.f32.mxu0 0.0
      %5239 = vmatmul.mubr.f32.gmra.mrb[0].mxu0 %v4539
      %v5240 = vpop.f32.mrb[0].mxu0
      %v5241 = vadd.f32 %v4158, %v5240
      %v5242 = vpop.f32.mrb[0].mxu0
      %5243 = vmatprep.mubr.f32.mxu0 0.0
      %5244 = vmatmul.mubr.f32.gmra.mrb[0].mxu0 %v4542
      %v5245 = vpop.f32.mrb[0].mxu0
      %v5246 = vadd.f32 %v4158, %v5245
      %v5247 = vpop.f32.mrb[0].mxu0
      %5248 = vdwg.mxu0
      %v5249 = vlaneseq
      %v5250 = vand.u32 %v5249, 127
      %vm5251 = vcmp.eq.s32.totalorder %v5250, 16
      %v5252 = vtanh.pop %v4611
      %v5253 = vtanh.pop %v4616
      %v5254 = vtanh.pop %v4621
      %v5255 = vtanh.pop %v4626
      %v5256 = vtanh.pop %v4631
      %v5257 = vtanh.pop %v4636
      %v5258 = vtanh.pop %v4641
      %v5259 = vtanh.pop %v4646
      %v5260 = vtanh.pop %v4651
      %v5261 = vtanh.pop %v4656
      %v5262 = vtanh.pop %v4661
      %v5263 = vtanh.pop %v4666
      %v5264 = vtanh.pop %v4671
      %v5265 = vtanh.pop %v4676
      %v5266 = vtanh.pop %v4681
      %v5267 = vtanh.pop %v4686
      %v5268 = vtanh.pop %v4691
      %v5269 = vtanh.pop %v4696
      %v5270 = vtanh.pop %v4701
      %v5271 = vtanh.pop %v4706
      %v5272 = vtanh.pop %v4711
      %v5273 = vtanh.pop %v4716
      %v5274 = vtanh.pop %v4721
      %v5275 = vtanh.pop %v4726
      %v5276 = vtanh.pop %v4731
      %v5277 = vtanh.pop %v4736
      %v5278 = vtanh.pop %v4741
      %v5279 = vtanh.pop %v4746
      %v5280 = vtanh.pop %v4751
      %v5281 = vtanh.pop %v4756
      %v5282 = vtanh.pop %v4761
      %v5283 = vtanh.pop %v4766
      %v5284 = vtanh.pop %v4771
      %v5285 = vtanh.pop %v4776
      %v5286 = vtanh.pop %v4781
      %v5287 = vtanh.pop %v4786
      %v5288 = vtanh.pop %v4791
      %v5289 = vtanh.pop %v4796
      %v5290 = vtanh.pop %v4801
      %v5291 = vtanh.pop %v4806
      %v5292 = vtanh.pop %v4811
      %v5293 = vtanh.pop %v4816
      %v5294 = vtanh.pop %v4821
      %v5295 = vtanh.pop %v4826
      %v5296 = vtanh.pop %v4831
      %v5297 = vtanh.pop %v4836
      %v5298 = vtanh.pop %v4841
      %v5299 = vtanh.pop %v4846
      %v5300 = vtanh.pop %v4851
      %v5301 = vtanh.pop %v4856
      %v5302 = vtanh.pop %v4861
      %v5303 = vtanh.pop %v4866
      %v5304 = vtanh.pop %v4871
      %v5305 = vtanh.pop %v4876
      %v5306 = vtanh.pop %v4881
      %v5307 = vtanh.pop %v4886
      %v5308 = vtanh.pop %v4891
      %v5309 = vtanh.pop %v4896
      %v5310 = vtanh.pop %v4901
      %v5311 = vtanh.pop %v4906
      %v5312 = vtanh.pop %v4911
      %v5313 = vtanh.pop %v4916
      %v5314 = vtanh.pop %v4921
      %v5315 = vtanh.pop %v4926
      %v5316 = vtanh.pop %v4931
      %v5317 = vtanh.pop %v4936
      %v5318 = vtanh.pop %v4941
      %v5319 = vtanh.pop %v4946
      %v5320 = vtanh.pop %v4951
      %v5321 = vtanh.pop %v4956
      %v5322 = vtanh.pop %v4961
      %v5323 = vtanh.pop %v4966
      %v5324 = vtanh.pop %v4971
      %v5325 = vtanh.pop %v4976
      %v5326 = vtanh.pop %v4981
      %v5327 = vtanh.pop %v4986
      %v5328 = vtanh.pop %v4991
      %v5329 = vtanh.pop %v4996
      %v5330 = vtanh.pop %v5001
      %v5331 = vtanh.pop %v5006
      %v5332 = vtanh.pop %v5011
      %v5333 = vtanh.pop %v5016
      %v5334 = vtanh.pop %v5021
      %v5335 = vtanh.pop %v5026
      %v5336 = vtanh.pop %v5031
      %v5337 = vtanh.pop %v5036
      %v5338 = vtanh.pop %v5041
      %v5339 = vtanh.pop %v5046
      %v5340 = vtanh.pop %v5051
      %v5341 = vtanh.pop %v5056
      %v5342 = vtanh.pop %v5061
      %v5343 = vtanh.pop %v5066
      %v5344 = vtanh.pop %v5071
      %v5345 = vtanh.pop %v5076
      %v5346 = vtanh.pop %v5081
      %v5347 = vtanh.pop %v5086
      %v5348 = vtanh.pop %v5091
      %v5349 = vtanh.pop %v5096
      %v5350 = vtanh.pop %v5101
      %v5351 = vtanh.pop %v5106
      %v5352 = vtanh.pop %v5111
      %v5353 = vtanh.pop %v5116
      %v5354 = vtanh.pop %v5121
      %v5355 = vtanh.pop %v5126
      %v5356 = vtanh.pop %v5131
      %v5357 = vtanh.pop %v5136
      %v5358 = vtanh.pop %v5141
      %v5359 = vtanh.pop %v5146
      %v5360 = vtanh.pop %v5151
      %v5361 = vtanh.pop %v5156
      %v5362 = vtanh.pop %v5161
      %v5363 = vtanh.pop %v5166
      %v5364 = vtanh.pop %v5171
      %v5365 = vtanh.pop %v5176
      %v5366 = vtanh.pop %v5181
      %v5367 = vtanh.pop %v5186
      %v5368 = vtanh.pop %v5191
      %v5369 = vtanh.pop %v5196
      %v5370 = vtanh.pop %v5201
      %v5371 = vtanh.pop %v5206
      %v5372 = vtanh.pop %v5211
      %v5373 = vtanh.pop %v5216
      %v5374 = vtanh.pop %v5221
      %v5375 = vtanh.pop %v5226
      %v5376 = vtanh.pop %v5231
      %v5377 = vtanh.pop %v5236
      %v5378 = vtanh.pop %v5241
      %v5379 = vtanh.pop %v5246
      %v5380 = vsel %vm5251, %v5252, %v4611
      %v5381 = vsel %vm5251, %v5253, %v4616
      %v5382 = vsel %vm5251, %v5254, %v4621
      %v5383 = vsel %vm5251, %v5255, %v4626
      %v5384 = vsel %vm5251, %v5256, %v4631
      %v5385 = vsel %vm5251, %v5257, %v4636
      %v5386 = vsel %vm5251, %v5258, %v4641
      %v5387 = vsel %vm5251, %v5259, %v4646
      %v5388 = vsel %vm5251, %v5260, %v4651
      %v5389 = vsel %vm5251, %v5261, %v4656
      %v5390 = vsel %vm5251, %v5262, %v4661
      %v5391 = vsel %vm5251, %v5263, %v4666
      %v5392 = vsel %vm5251, %v5264, %v4671
      %v5393 = vsel %vm5251, %v5265, %v4676
      %v5394 = vsel %vm5251, %v5266, %v4681
      %v5395 = vsel %vm5251, %v5267, %v4686
      %v5396 = vsel %vm5251, %v5268, %v4691
      %v5397 = vsel %vm5251, %v5269, %v4696
      %v5398 = vsel %vm5251, %v5270, %v4701
      %v5399 = vsel %vm5251, %v5271, %v4706
      %v5400 = vsel %vm5251, %v5272, %v4711
      %v5401 = vsel %vm5251, %v5273, %v4716
      %v5402 = vsel %vm5251, %v5274, %v4721
      %v5403 = vsel %vm5251, %v5275, %v4726
      %v5404 = vsel %vm5251, %v5276, %v4731
      %v5405 = vsel %vm5251, %v5277, %v4736
      %v5406 = vsel %vm5251, %v5278, %v4741
      %v5407 = vsel %vm5251, %v5279, %v4746
      %v5408 = vsel %vm5251, %v5280, %v4751
      %v5409 = vsel %vm5251, %v5281, %v4756
      %v5410 = vsel %vm5251, %v5282, %v4761
      %v5411 = vsel %vm5251, %v5283, %v4766
      %v5412 = vsel %vm5251, %v5284, %v4771
      %v5413 = vsel %vm5251, %v5285, %v4776
      %v5414 = vsel %vm5251, %v5286, %v4781
      %v5415 = vsel %vm5251, %v5287, %v4786
      %v5416 = vsel %vm5251, %v5288, %v4791
      %v5417 = vsel %vm5251, %v5289, %v4796
      %v5418 = vsel %vm5251, %v5290, %v4801
      %v5419 = vsel %vm5251, %v5291, %v4806
      %v5420 = vsel %vm5251, %v5292, %v4811
      %v5421 = vsel %vm5251, %v5293, %v4816
      %v5422 = vsel %vm5251, %v5294, %v4821
      %v5423 = vsel %vm5251, %v5295, %v4826
      %v5424 = vsel %vm5251, %v5296, %v4831
      %v5425 = vsel %vm5251, %v5297, %v4836
      %v5426 = vsel %vm5251, %v5298, %v4841
      %v5427 = vsel %vm5251, %v5299, %v4846
      %v5428 = vsel %vm5251, %v5300, %v4851
      %v5429 = vsel %vm5251, %v5301, %v4856
      %v5430 = vsel %vm5251, %v5302, %v4861
      %v5431 = vsel %vm5251, %v5303, %v4866
      %v5432 = vsel %vm5251, %v5304, %v4871
      %v5433 = vsel %vm5251, %v5305, %v4876
      %v5434 = vsel %vm5251, %v5306, %v4881
      %v5435 = vsel %vm5251, %v5307, %v4886
      %v5436 = vsel %vm5251, %v5308, %v4891
      %v5437 = vsel %vm5251, %v5309, %v4896
      %v5438 = vsel %vm5251, %v5310, %v4901
      %v5439 = vsel %vm5251, %v5311, %v4906
      %v5440 = vsel %vm5251, %v5312, %v4911
      %v5441 = vsel %vm5251, %v5313, %v4916
      %v5442 = vsel %vm5251, %v5314, %v4921
      %v5443 = vsel %vm5251, %v5315, %v4926
      %v5444 = vsel %vm5251, %v5316, %v4931
      %v5445 = vsel %vm5251, %v5317, %v4936
      %v5446 = vsel %vm5251, %v5318, %v4941
      %v5447 = vsel %vm5251, %v5319, %v4946
      %v5448 = vsel %vm5251, %v5320, %v4951
      %v5449 = vsel %vm5251, %v5321, %v4956
      %v5450 = vsel %vm5251, %v5322, %v4961
      %v5451 = vsel %vm5251, %v5323, %v4966
      %v5452 = vsel %vm5251, %v5324, %v4971
      %v5453 = vsel %vm5251, %v5325, %v4976
      %v5454 = vsel %vm5251, %v5326, %v4981
      %v5455 = vsel %vm5251, %v5327, %v4986
      %v5456 = vsel %vm5251, %v5328, %v4991
      %v5457 = vsel %vm5251, %v5329, %v4996
      %v5458 = vsel %vm5251, %v5330, %v5001
      %v5459 = vsel %vm5251, %v5331, %v5006
      %v5460 = vsel %vm5251, %v5332, %v5011
      %v5461 = vsel %vm5251, %v5333, %v5016
      %v5462 = vsel %vm5251, %v5334, %v5021
      %v5463 = vsel %vm5251, %v5335, %v5026
      %v5464 = vsel %vm5251, %v5336, %v5031
      %v5465 = vsel %vm5251, %v5337, %v5036
      %v5466 = vsel %vm5251, %v5338, %v5041
      %v5467 = vsel %vm5251, %v5339, %v5046
      %v5468 = vsel %vm5251, %v5340, %v5051
      %v5469 = vsel %vm5251, %v5341, %v5056
      %v5470 = vsel %vm5251, %v5342, %v5061
      %v5471 = vsel %vm5251, %v5343, %v5066
      %v5472 = vsel %vm5251, %v5344, %v5071
      %v5473 = vsel %vm5251, %v5345, %v5076
      %v5474 = vsel %vm5251, %v5346, %v5081
      %v5475 = vsel %vm5251, %v5347, %v5086
      %v5476 = vsel %vm5251, %v5348, %v5091
      %v5477 = vsel %vm5251, %v5349, %v5096
      %v5478 = vsel %vm5251, %v5350, %v5101
      %v5479 = vsel %vm5251, %v5351, %v5106
      %v5480 = vsel %vm5251, %v5352, %v5111
      %v5481 = vsel %vm5251, %v5353, %v5116
      %v5482 = vsel %vm5251, %v5354, %v5121
      %v5483 = vsel %vm5251, %v5355, %v5126
      %v5484 = vsel %vm5251, %v5356, %v5131
      %v5485 = vsel %vm5251, %v5357, %v5136
      %v5486 = vsel %vm5251, %v5358, %v5141
      %v5487 = vsel %vm5251, %v5359, %v5146
      %v5488 = vsel %vm5251, %v5360, %v5151
      %v5489 = vsel %vm5251, %v5361, %v5156
      %v5490 = vsel %vm5251, %v5362, %v5161
      %v5491 = vsel %vm5251, %v5363, %v5166
      %v5492 = vsel %vm5251, %v5364, %v5171
      %v5493 = vsel %vm5251, %v5365, %v5176
      %v5494 = vsel %vm5251, %v5366, %v5181
      %v5495 = vsel %vm5251, %v5367, %v5186
      %v5496 = vsel %vm5251, %v5368, %v5191
      %v5497 = vsel %vm5251, %v5369, %v5196
      %v5498 = vsel %vm5251, %v5370, %v5201
      %v5499 = vsel %vm5251, %v5371, %v5206
      %v5500 = vsel %vm5251, %v5372, %v5211
      %v5501 = vsel %vm5251, %v5373, %v5216
      %v5502 = vsel %vm5251, %v5374, %v5221
      %v5503 = vsel %vm5251, %v5375, %v5226
      %v5504 = vsel %vm5251, %v5376, %v5231
      %v5505 = vsel %vm5251, %v5377, %v5236
      %v5506 = vsel %vm5251, %v5378, %v5241
      %v5507 = vsel %vm5251, %v5379, %v5246
      %5508 = vst [vmem:[%s334] sm:$0xff] %v5380
      %5509 = vst [vmem:[%s334 + $0x8] sm:$0xff] %v5381
      %5510 = vst [vmem:[%s334 + $0x10] sm:$0xff] %v5382
      %5511 = vst [vmem:[%s334 + $0x18] sm:$0xff] %v5383
      %5512 = vst [vmem:[%s334 + $0x20] sm:$0xff] %v5384
      %5513 = vst [vmem:[%s334 + $0x28] sm:$0xff] %v5385
      %5514 = vst [vmem:[%s334 + $0x30] sm:$0xff] %v5386
      %5515 = vst [vmem:[%s334 + $0x38] sm:$0xff] %v5387
      %5516 = vst [vmem:[%s334 + $0x40] sm:$0xff] %v5388
      %5517 = vst [vmem:[%s334 + $0x48] sm:$0xff] %v5389
      %5518 = vst [vmem:[%s334 + $0x50] sm:$0xff] %v5390
      %5519 = vst [vmem:[%s334 + $0x58] sm:$0xff] %v5391
      %5520 = vst [vmem:[%s334 + $0x60] sm:$0xff] %v5392
      %5521 = vst [vmem:[%s334 + $0x68] sm:$0xff] %v5393
      %5522 = vst [vmem:[%s334 + $0x70] sm:$0xff] %v5394
      %5523 = vst [vmem:[%s334 + $0x78] sm:$0xff] %v5395
      %5524 = vst [vmem:[%s334 + $0x80] sm:$0xff] %v5396
      %5525 = vst [vmem:[%s334 + $0x88] sm:$0xff] %v5397
      %5526 = vst [vmem:[%s334 + $0x90] sm:$0xff] %v5398
      %5527 = vst [vmem:[%s334 + $0x98] sm:$0xff] %v5399
      %5528 = vst [vmem:[%s334 + $0xa0] sm:$0xff] %v5400
      %5529 = vst [vmem:[%s334 + $0xa8] sm:$0xff] %v5401
      %5530 = vst [vmem:[%s334 + $0xb0] sm:$0xff] %v5402
      %5531 = vst [vmem:[%s334 + $0xb8] sm:$0xff] %v5403
      %5532 = vst [vmem:[%s334 + $0xc0] sm:$0xff] %v5404
      %5533 = vst [vmem:[%s334 + $0xc8] sm:$0xff] %v5405
      %5534 = vst [vmem:[%s334 + $0xd0] sm:$0xff] %v5406
      %5535 = vst [vmem:[%s334 + $0xd8] sm:$0xff] %v5407
      %5536 = vst [vmem:[%s334 + $0xe0] sm:$0xff] %v5408
      %5537 = vst [vmem:[%s334 + $0xe8] sm:$0xff] %v5409
      %5538 = vst [vmem:[%s334 + $0xf0] sm:$0xff] %v5410
      %5539 = vst [vmem:[%s334 + $0xf8] sm:$0xff] %v5411
      %5540 = vst [vmem:[%s334 + $0x100] sm:$0xff] %v5412
      %5541 = vst [vmem:[%s334 + $0x108] sm:$0xff] %v5413
      %5542 = vst [vmem:[%s334 + $0x110] sm:$0xff] %v5414
      %5543 = vst [vmem:[%s334 + $0x118] sm:$0xff] %v5415
      %5544 = vst [vmem:[%s334 + $0x120] sm:$0xff] %v5416
      %5545 = vst [vmem:[%s334 + $0x128] sm:$0xff] %v5417
      %5546 = vst [vmem:[%s334 + $0x130] sm:$0xff] %v5418
      %5547 = vst [vmem:[%s334 + $0x138] sm:$0xff] %v5419
      %5548 = vst [vmem:[%s334 + $0x140] sm:$0xff] %v5420
      %5549 = vst [vmem:[%s334 + $0x148] sm:$0xff] %v5421
      %5550 = vst [vmem:[%s334 + $0x150] sm:$0xff] %v5422
      %5551 = vst [vmem:[%s334 + $0x158] sm:$0xff] %v5423
      %5552 = vst [vmem:[%s334 + $0x160] sm:$0xff] %v5424
      %5553 = vst [vmem:[%s334 + $0x168] sm:$0xff] %v5425
      %5554 = vst [vmem:[%s334 + $0x170] sm:$0xff] %v5426
      %5555 = vst [vmem:[%s334 + $0x178] sm:$0xff] %v5427
      %5556 = vst [vmem:[%s334 + $0x180] sm:$0xff] %v5428
      %5557 = vst [vmem:[%s334 + $0x188] sm:$0xff] %v5429
      %5558 = vst [vmem:[%s334 + $0x190] sm:$0xff] %v5430
      %5559 = vst [vmem:[%s334 + $0x198] sm:$0xff] %v5431
      %5560 = vst [vmem:[%s334 + $0x1a0] sm:$0xff] %v5432
      %5561 = vst [vmem:[%s334 + $0x1a8] sm:$0xff] %v5433
      %5562 = vst [vmem:[%s334 + $0x1b0] sm:$0xff] %v5434
      %5563 = vst [vmem:[%s334 + $0x1b8] sm:$0xff] %v5435
      %5564 = vst [vmem:[%s334 + $0x1c0] sm:$0xff] %v5436
      %5565 = vst [vmem:[%s334 + $0x1c8] sm:$0xff] %v5437
      %5566 = vst [vmem:[%s334 + $0x1d0] sm:$0xff] %v5438
      %5567 = vst [vmem:[%s334 + $0x1d8] sm:$0xff] %v5439
      %5568 = vst [vmem:[%s334 + $0x1e0] sm:$0xff] %v5440
      %5569 = vst [vmem:[%s334 + $0x1e8] sm:$0xff] %v5441
      %5570 = vst [vmem:[%s334 + $0x1f0] sm:$0xff] %v5442
      %5571 = vst [vmem:[%s334 + $0x1f8] sm:$0xff] %v5443
      %5572 = vst [vmem:[%s334 + $0x200] sm:$0xff] %v5444
      %5573 = vst [vmem:[%s334 + $0x208] sm:$0xff] %v5445
      %5574 = vst [vmem:[%s334 + $0x210] sm:$0xff] %v5446
      %5575 = vst [vmem:[%s334 + $0x218] sm:$0xff] %v5447
      %5576 = vst [vmem:[%s334 + $0x220] sm:$0xff] %v5448
      %5577 = vst [vmem:[%s334 + $0x228] sm:$0xff] %v5449
      %5578 = vst [vmem:[%s334 + $0x230] sm:$0xff] %v5450
      %5579 = vst [vmem:[%s334 + $0x238] sm:$0xff] %v5451
      %5580 = vst [vmem:[%s334 + $0x240] sm:$0xff] %v5452
      %5581 = vst [vmem:[%s334 + $0x248] sm:$0xff] %v5453
      %5582 = vst [vmem:[%s334 + $0x250] sm:$0xff] %v5454
      %5583 = vst [vmem:[%s334 + $0x258] sm:$0xff] %v5455
      %5584 = vst [vmem:[%s334 + $0x260] sm:$0xff] %v5456
      %5585 = vst [vmem:[%s334 + $0x268] sm:$0xff] %v5457
      %5586 = vst [vmem:[%s334 + $0x270] sm:$0xff] %v5458
      %5587 = vst [vmem:[%s334 + $0x278] sm:$0xff] %v5459
      %5588 = vst [vmem:[%s334 + $0x280] sm:$0xff] %v5460
      %5589 = vst [vmem:[%s334 + $0x288] sm:$0xff] %v5461
      %5590 = vst [vmem:[%s334 + $0x290] sm:$0xff] %v5462
      %5591 = vst [vmem:[%s334 + $0x298] sm:$0xff] %v5463
      %5592 = vst [vmem:[%s334 + $0x2a0] sm:$0xff] %v5464
      %5593 = vst [vmem:[%s334 + $0x2a8] sm:$0xff] %v5465
      %5594 = vst [vmem:[%s334 + $0x2b0] sm:$0xff] %v5466
      %5595 = vst [vmem:[%s334 + $0x2b8] sm:$0xff] %v5467
      %5596 = vst [vmem:[%s334 + $0x2c0] sm:$0xff] %v5468
      %5597 = vst [vmem:[%s334 + $0x2c8] sm:$0xff] %v5469
      %5598 = vst [vmem:[%s334 + $0x2d0] sm:$0xff] %v5470
      %5599 = vst [vmem:[%s334 + $0x2d8] sm:$0xff] %v5471
      %5600 = vst [vmem:[%s334 + $0x2e0] sm:$0xff] %v5472
      %5601 = vst [vmem:[%s334 + $0x2e8] sm:$0xff] %v5473
      %5602 = vst [vmem:[%s334 + $0x2f0] sm:$0xff] %v5474
      %5603 = vst [vmem:[%s334 + $0x2f8] sm:$0xff] %v5475
      %5604 = vst [vmem:[%s334 + $0x300] sm:$0xff] %v5476
      %5605 = vst [vmem:[%s334 + $0x308] sm:$0xff] %v5477
      %5606 = vst [vmem:[%s334 + $0x310] sm:$0xff] %v5478
      %5607 = vst [vmem:[%s334 + $0x318] sm:$0xff] %v5479
      %5608 = vst [vmem:[%s334 + $0x320] sm:$0xff] %v5480
      %5609 = vst [vmem:[%s334 + $0x328] sm:$0xff] %v5481
      %5610 = vst [vmem:[%s334 + $0x330] sm:$0xff] %v5482
      %5611 = vst [vmem:[%s334 + $0x338] sm:$0xff] %v5483
      %5612 = vst [vmem:[%s334 + $0x340] sm:$0xff] %v5484
      %5613 = vst [vmem:[%s334 + $0x348] sm:$0xff] %v5485
      %5614 = vst [vmem:[%s334 + $0x350] sm:$0xff] %v5486
      %5615 = vst [vmem:[%s334 + $0x358] sm:$0xff] %v5487
      %5616 = vst [vmem:[%s334 + $0x360] sm:$0xff] %v5488
      %5617 = vst [vmem:[%s334 + $0x368] sm:$0xff] %v5489
      %5618 = vst [vmem:[%s334 + $0x370] sm:$0xff] %v5490
      %5619 = vst [vmem:[%s334 + $0x378] sm:$0xff] %v5491
      %5620 = vst [vmem:[%s334 + $0x380] sm:$0xff] %v5492
      %5621 = vst [vmem:[%s334 + $0x388] sm:$0xff] %v5493
      %5622 = vst [vmem:[%s334 + $0x390] sm:$0xff] %v5494
      %5623 = vst [vmem:[%s334 + $0x398] sm:$0xff] %v5495
      %5624 = vst [vmem:[%s334 + $0x3a0] sm:$0xff] %v5496
      %5625 = vst [vmem:[%s334 + $0x3a8] sm:$0xff] %v5497
      %5626 = vst [vmem:[%s334 + $0x3b0] sm:$0xff] %v5498
      %5627 = vst [vmem:[%s334 + $0x3b8] sm:$0xff] %v5499
      %5628 = vst [vmem:[%s334 + $0x3c0] sm:$0xff] %v5500
      %5629 = vst [vmem:[%s334 + $0x3c8] sm:$0xff] %v5501
      %5630 = vst [vmem:[%s334 + $0x3d0] sm:$0xff] %v5502
      %5631 = vst [vmem:[%s334 + $0x3d8] sm:$0xff] %v5503
      %5632 = vst [vmem:[%s334 + $0x3e0] sm:$0xff] %v5504
      %5633 = vst [vmem:[%s334 + $0x3e8] sm:$0xff] %v5505
      %5634 = vst [vmem:[%s334 + $0x3f0] sm:$0xff] %v5506
      %5635 = vst [vmem:[%s334 + $0x3f8] sm:$0xff] %v5507
      %s5636 = smul.u32 128, %s20
      %p5637 = scmp.lt.s32.totalorder %s5636, 255
      %s5638 = scalar_select %p5637, %s5636, 255
      %s5639 = smul.addr %s5638, 8
      %s5640 = scalar_lea.vmem %s9, %s5639
      // Predicated region
      $region57: #{catan_forward.1} parent=55 // pred_check
        %p5641 = pneg %p232
      $region58: #{catan_forward.1} parent=55 // pred_check_branch
        %5643 = sbr.rel (%p5641) target = $region60
      $region59: #{catan_forward.1} parent=55 // pred_region
        %s5644 = smul.u32 128, %s20
      $region60: #{catan_forward.1} parent=55 // pred_fallthru
        _
    $region56: #{catan_forward.1} parent=5 // pred_fallthru
      _
    %p5645 = scmp.le.s32.totalorder 2, %s15
    // Predicated region
    $region61: #{catan_forward.1} parent=5 // pred_check
      %p5646 = pneg %p5645
    $region62: #{catan_forward.1} parent=5 // pred_check_branch
      %5648 = sbr.rel (%p5646) target = $region64
    $region63: #{catan_forward.1} parent=5 // pred_region
      %s5649 = ssub.s32 %s15, 2
      // Predicated region
      $region65: #{catan_forward.1} parent=63 // pred_check
        %p5650 = pneg %p238
      $region66: #{catan_forward.1} parent=63 // pred_check_branch
        %5652 = sbr.rel (%p5650) target = $region68
      $region67: #{catan_forward.1} parent=63 // pred_region
        %s5653 = smul.u32 128, %s21
        %p5654 = scmp.lt.s32.totalorder %s5653, 255
        %s5655 = scalar_select %p5654, %s5653, 255
        %s5656 = smul.addr %s5655, 8
        %s5657 = scalar_lea.vmem %s9, %s5656
      $region68: #{catan_forward.1} parent=63 // pred_fallthru
        _
    $region64: #{catan_forward.1} parent=5 // pred_fallthru
      _
  $region6: #{catan_forward.1} parent=0 // loop_footer
    %s19 = sadd.s32 1, %s15
  $region7: #{catan_forward.1} parent=0 // loop_footer_branch
    %14 = sbr.rel target = $region3
  $region8: #{catan_forward.1} parent=0 // loop_exit
    _

</llo_original>
